<compile_context>
chip_gen: v5e
topology: v5e:2x2
jax: 0.10.0
libtpu: 0.0.40
codegen_flags: <defaults>
</compile_context>

<pallas_src>
import functools

import jax
import jax.numpy as jnp
import numpy as np
from jax import lax
from jax.experimental import pallas as pl
from jax.experimental.pallas import tpu as pltpu


def _posterior_encoder_kernel(
    x_len_ref,        # SMEM (B,)                  int32
    x_ref,            # (1, Cin, T)                f32
    noise_ref,        # (1, out_ch, T)             f32
    pre_w_ref,        # (H, Cin)                   bf16
    pre_b_ref,        # (H, 1)                     f32
    in_w_ref,         # (L, 2H, k*H)               bf16
    in_b_ref,         # (L, 2H, 1)                 f32
    rs_w_ref,         # (L-1, 2H, H)               bf16
    rs_b_ref,         # (L-1, 2H, 1)               f32
    rsl_w_ref,        # (H, H)                     bf16  (last layer: skip half only)
    rsl_b_ref,        # (H, 1)                     f32
    projm_w_ref,      # (out_ch, H)                bf16
    projm_b_ref,      # (out_ch, 1)                f32
    projs_w_ref,      # (out_ch, H)                bf16
    projs_b_ref,      # (out_ch, 1)                f32
    z_ref, m_ref, logs_ref, mask_ref,              # outputs (f32)
    hpad_ref,         # VMEM (H, T + 2*pad_max)    bf16  scratch
    stack_ref,        # VMEM (k*H, T)              bf16  scratch
    skip_ref,         # VMEM (H, T)                f32   scratch
    *, hidden, kernel_size, dilation_rate, n_layers, pad_max,
):
    b = pl.program_id(0)
    T = x_ref.shape[-1]
    length = x_len_ref[b]

    # x_mask = sequence_mask(x_lengths, T)[:, None, :]  (one iota, not per tap)
    t_idx = lax.broadcasted_iota(jnp.int32, (1, T), 1)
    mask = (t_idx < length).astype(jnp.float32)                       # (1, T)

    # pre: 1x1 conv on the MXU (bf16 operands, f32 accumulate), then mask.
    h = (jnp.dot(pre_w_ref[...], x_ref[0].astype(jnp.bfloat16),
                 preferred_element_type=jnp.float32)
         + pre_b_ref[...]) * mask                                      # (H, T) f32

    # Zero-padded time buffer: borders are zeroed once and stay zero; only the
    # centre is rewritten per layer, so every dilated-conv tap becomes a static
    # lane slice (no roll / iota / where per tap).
    hpad_ref[...] = jnp.zeros_like(hpad_ref)
    skip_ref[...] = jnp.zeros_like(skip_ref)

    # TODO(synk): for deep (16-layer) configs, switch to a layer grid axis or
    #             lax.fori_loop with an SMEM offset table; static unroll is
    #             fine for the small n_layers used here.
    for i in range(n_layers):
        d = dilation_rate ** i
        pad = d * (kernel_size - 1) // 2

        hpad_ref[:, pad_max:pad_max + T] = h.astype(jnp.bfloat16)

        # Stack the k shifted copies of h along the contraction axis so the
        # whole dilated conv H -> 2H is a single MXU matmul with K = k*H.
        for j in range(kernel_size):
            start = pad_max + j * d - pad          # static python int, >= 0
            stack_ref[j * hidden:(j + 1) * hidden, :] = hpad_ref[:, start:start + T]

        x_in = jnp.dot(in_w_ref[i], stack_ref[...],
                       preferred_element_type=jnp.float32) + in_b_ref[i]   # (2H, T)

        # fused_add_tanh_sigmoid_multiply (g == 0): transcendentals on halves
        # only, kept in f32.
        acts = jnp.tanh(x_in[:hidden, :]) * jax.nn.sigmoid(x_in[hidden:, :])
        acts_bf = acts.astype(jnp.bfloat16)

        if i < n_layers - 1:
            rs = (jnp.dot(rs_w_ref[i], acts_bf, preferred_element_type=jnp.float32)
                  + rs_b_ref[i])                                           # (2H, T)
            h = (h + rs[:hidden, :]) * mask
            skip_ref[...] = skip_ref[...] + rs[hidden:, :]
        else:
            # Last layer produces only the skip half (no zero-padded weights).
            rs = (jnp.dot(rsl_w_ref[...], acts_bf, preferred_element_type=jnp.float32)
                  + rsl_b_ref[...])                                        # (H, T)
            skip_ref[...] = skip_ref[...] + rs

    skip = skip_ref[...] * mask
    skip_bf = skip.astype(jnp.bfloat16)

    m = (jnp.dot(projm_w_ref[...], skip_bf, preferred_element_type=jnp.float32)
         + projm_b_ref[...]) * mask
    logs = (jnp.dot(projs_w_ref[...], skip_bf, preferred_element_type=jnp.float32)
            + projs_b_ref[...]) * mask
    z = (m + noise_ref[0] * jnp.exp(logs)) * mask

    z_ref[0] = z
    m_ref[0] = m
    logs_ref[0] = logs
    mask_ref[0] = mask


def _vmem_limit_bytes(c_in, hidden, out_ch, T, kernel_size, dilation_rate, n_layers):
    """Scoped-VMEM request sized from the actual resident footprint (+headroom).

    v5e/v6e have 128 MiB physical VMEM, so don't hard-cap at 32 MiB.
    """
    # TODO(synk): on v7x (64 MiB physical) the real 16-layer config should use
    #             per-layer weight streaming instead of raising this limit.
    f32, bf16 = 4, 2
    h2 = 2 * hidden
    pad_max = dilation_rate ** (n_layers - 1) * (kernel_size - 1) // 2
    weights = (hidden * c_in * bf16 + hidden * f32
               + n_layers * h2 * kernel_size * hidden * bf16
               + n_layers * h2 * f32
               + max(n_layers - 1, 0) * h2 * hidden * bf16
               + max(n_layers - 1, 0) * h2 * f32
               + hidden * hidden * bf16 + hidden * f32
               + 2 * (out_ch * hidden * bf16 + out_ch * f32))
    io_blocks = 2 * (c_in + 4 * out_ch + 1) * T * f32        # double-buffered tiles
    scratch = (hidden * (T + 2 * pad_max) * bf16
               + kernel_size * hidden * T * bf16
               + hidden * T * f32)
    temporaries = 8 * h2 * T * f32                           # live-value headroom
    est = weights + io_blocks + scratch + temporaries
    return int(min(100 * 2 ** 20, max(32 * 2 ** 20, 2 * est)))


def posterior_encoder_forward(x, x_lengths, noise, packed, *, hidden, out_ch,
                              kernel_size, dilation_rate, n_layers):
    """Pallas equivalent of PosteriorEncoder.forward(x, x_lengths) with g=None."""
    B, c_in, T = x.shape
    pad_max = dilation_rate ** (n_layers - 1) * (kernel_size - 1) // 2
    kern = functools.partial(
        _posterior_encoder_kernel, hidden=hidden, kernel_size=kernel_size,
        dilation_rate=dilation_rate, n_layers=n_layers, pad_max=pad_max)

    vmem = pl.BlockSpec(memory_space=pltpu.MemorySpace.VMEM)
    out_shape = (
        jax.ShapeDtypeStruct((B, out_ch, T), jnp.float32),   # z
        jax.ShapeDtypeStruct((B, out_ch, T), jnp.float32),   # m
        jax.ShapeDtypeStruct((B, out_ch, T), jnp.float32),   # logs
        jax.ShapeDtypeStruct((B, 1, T), jnp.float32),        # x_mask
    )
    return pl.pallas_call(
        kern,
        grid=(B,),
        out_shape=out_shape,
        in_specs=[
            pl.BlockSpec(memory_space=pltpu.MemorySpace.SMEM),      # x_lengths
            pl.BlockSpec((1, c_in, T), lambda b: (b, 0, 0)),        # x
            pl.BlockSpec((1, out_ch, T), lambda b: (b, 0, 0)),      # noise
            vmem, vmem,                                             # pre_w, pre_b
            vmem, vmem,                                             # in_w, in_b
            vmem, vmem,                                             # rs_w, rs_b
            vmem, vmem,                                             # rsl_w, rsl_b
            vmem, vmem, vmem, vmem,                                 # proj m/s w,b
        ],
        out_specs=(
            pl.BlockSpec((1, out_ch, T), lambda b: (b, 0, 0)),
            pl.BlockSpec((1, out_ch, T), lambda b: (b, 0, 0)),
            pl.BlockSpec((1, out_ch, T), lambda b: (b, 0, 0)),
            pl.BlockSpec((1, 1, T), lambda b: (b, 0, 0)),
        ),
        scratch_shapes=[
            pltpu.VMEM((hidden, T + 2 * pad_max), jnp.bfloat16),    # h padded in time
            pltpu.VMEM((kernel_size * hidden, T), jnp.bfloat16),    # stacked taps
            pltpu.VMEM((hidden, T), jnp.float32),                   # skip accumulator
        ],
        compiler_params=pltpu.CompilerParams(
            dimension_semantics=("parallel",),
            vmem_limit_bytes=_vmem_limit_bytes(
                c_in, hidden, out_ch, T, kernel_size, dilation_rate, n_layers),
        ),
    )(
        x_lengths.astype(jnp.int32), x.astype(jnp.float32), noise.astype(jnp.float32),
        packed["pre_w"], packed["pre_b"],
        packed["in_w"], packed["in_b"],
        packed["rs_w"], packed["rs_b"],
        packed["rsl_w"], packed["rsl_b"],
        packed["projm_w"], packed["projm_b"],
        packed["projs_w"], packed["projs_b"],
    )


# ----------------------------- parameter helpers -----------------------------

def _make_params(key, in_ch, hidden, out_ch, kernel_size, n_layers):
    """Random effective weights (post weight-norm) matching the PyTorch layout."""
    ks = list(jax.random.split(key, 4 + 4 * n_layers))
    it = iter(ks)
    s = 0.1
    p = {
        "pre_w": jax.random.normal(next(it), (hidden, in_ch), jnp.float32) * s,
        "pre_b": jax.random.normal(next(it), (hidden,), jnp.float32) * s,
        "in_w": [], "in_b": [], "rs_w": [], "rs_b": [],
    }
    for i in range(n_layers):
        p["in_w"].append(jax.random.normal(next(it), (2 * hidden, hidden, kernel_size),
                                           jnp.float32) * s)
        p["in_b"].append(jax.random.normal(next(it), (2 * hidden,), jnp.float32) * s)
        rs_out = 2 * hidden if i < n_layers - 1 else hidden
        p["rs_w"].append(jax.random.normal(next(it), (rs_out, hidden), jnp.float32) * s)
        p["rs_b"].append(jax.random.normal(next(it), (rs_out,), jnp.float32) * s)
    p["proj_w"] = jax.random.normal(next(it), (2 * out_ch, hidden), jnp.float32) * s
    p["proj_b"] = jax.random.normal(next(it), (2 * out_ch,), jnp.float32) * s
    return p


def _pack_params(p, hidden, out_ch, n_layers):
    """Repack PyTorch-layout weights into kernel-friendly stacked bf16 arrays."""
    assert n_layers >= 2, "packing assumes at least two WN layers"
    bf = jnp.bfloat16
    # (2H, H, k) -> (2H, k, H) -> (2H, k*H): tap j occupies columns [j*H, (j+1)*H)
    in_w = jnp.stack(
        [jnp.transpose(w, (0, 2, 1)).reshape(2 * hidden, -1) for w in p["in_w"]],
        axis=0).astype(bf)                                        # (L, 2H, k*H)
    in_b = jnp.stack(p["in_b"], axis=0)[..., None]                # (L, 2H, 1) f32
    rs_w = jnp.stack(p["rs_w"][:-1], axis=0).astype(bf)           # (L-1, 2H, H)
    rs_b = jnp.stack(p["rs_b"][:-1], axis=0)[..., None]           # (L-1, 2H, 1) f32
    return {
        "pre_w": p["pre_w"].astype(bf), "pre_b": p["pre_b"][:, None],
        "in_w": in_w, "in_b": in_b,
        "rs_w": rs_w, "rs_b": rs_b,
        "rsl_w": p["rs_w"][-1].astype(bf), "rsl_b": p["rs_b"][-1][:, None],
        "projm_w": p["proj_w"][:out_ch].astype(bf), "projm_b": p["proj_b"][:out_ch, None],
        "projs_w": p["proj_w"][out_ch:].astype(bf), "projs_b": p["proj_b"][out_ch:, None],
    }


# ----------------------------- pure-JAX reference ----------------------------

def _reference(x, x_lengths, noise, p, *, hidden, out_ch, kernel_size,
               dilation_rate, n_layers):
    """Mirrors the PyTorch PosteriorEncoder.forward (g=None) op for op, in f32."""
    B, c_in, T = x.shape
    hp = lax.Precision.HIGHEST
    mask = (jnp.arange(T)[None, :] < x_lengths[:, None]).astype(jnp.float32)[:, None, :]
    h = jnp.einsum("oc,bct->bot", p["pre_w"], x, precision=hp) + p["pre_b"][None, :, None]
    h = h * mask
    out = jnp.zeros_like(h)
    for i in range(n_layers):
        d = dilation_rate ** i
        pad = d * (kernel_size - 1) // 2
        xin = lax.conv_general_dilated(
            h, p["in_w"][i], window_strides=(1,), padding=[(pad, pad)],
            rhs_dilation=(d,), dimension_numbers=("NCH", "OIH", "NCH"),
            precision=hp) + p["in_b"][i][None, :, None]
        acts = jnp.tanh(xin[:, :hidden]) * jax.nn.sigmoid(xin[:, hidden:])
        rs = (jnp.einsum("oc,bct->bot", p["rs_w"][i], acts, precision=hp)
              + p["rs_b"][i][None, :, None])
        if i < n_layers - 1:
            h = (h + rs[:, :hidden]) * mask
            out = out + rs[:, hidden:]
        else:
            out = out + rs
    out = out * mask
    stats = (jnp.einsum("oc,bct->bot", p["proj_w"], out, precision=hp)
             + p["proj_b"][None, :, None]) * mask
    m, logs = stats[:, :out_ch], stats[:, out_ch:]
    z = (m + noise * jnp.exp(logs)) * mask
    return z, m, logs, mask


if __name__ == "__main__":
    B, in_ch, T = 2, 8, 128
    hidden, out_ch = 32, 4
    kernel_size, dilation_rate, n_layers = 5, 2, 3

    key = jax.random.PRNGKey(0)
    k_x, k_n, k_p = jax.random.split(key, 3)
    x = jax.random.normal(k_x, (B, in_ch, T), jnp.float32)
    x_lengths = jnp.array([T, 96], jnp.int32)
    # torch.randn_like(m) -> explicit Gaussian noise input (deterministic)
    noise = jax.random.normal(k_n, (B, out_ch, T), jnp.float32)

    params = _make_params(k_p, in_ch, hidden, out_ch, kernel_size, n_layers)
    packed = _pack_params(params, hidden, out_ch, n_layers)

    z, m, logs, x_mask = posterior_encoder_forward(
        x, x_lengths, noise, packed, hidden=hidden, out_ch=out_ch,
        kernel_size=kernel_size, dilation_rate=dilation_rate, n_layers=n_layers)
    jax.block_until_ready((z, m, logs, x_mask))

    zr, mr, lr, maskr = _reference(
        x, x_lengths, noise, params, hidden=hidden, out_ch=out_ch,
        kernel_size=kernel_size, dilation_rate=dilation_rate, n_layers=n_layers)

    # Matmuls run with bf16 operands (f32 accumulation) on the MXU, so compare
    # against the f32 reference at bf16-appropriate tolerances.
    np.testing.assert_allclose(np.asarray(x_mask), np.asarray(maskr), atol=1e-6)
    np.testing.assert_allclose(np.asarray(m), np.asarray(mr), rtol=2e-2, atol=2e-2)
    np.testing.assert_allclose(np.asarray(logs), np.asarray(lr), rtol=2e-2, atol=2e-2)
    np.testing.assert_allclose(np.asarray(z), np.asarray(zr), rtol=2e-2, atol=2e-2)

    print("KERNEL_OK")
</pallas_src>

<mosaic_0001>
module attributes {stable_mosaic.version = 11 : i64} {
  func.func @_posterior_encoder_kernel(%arg0: i32, %arg1: memref<2xi32, #tpu.memory_space<smem>>, %arg2: memref<1x8x128xf32, #tpu.memory_space<vmem>>, %arg3: memref<1x4x128xf32, #tpu.memory_space<vmem>>, %arg4: memref<32x8xbf16, #tpu.memory_space<vmem>>, %arg5: memref<32x1xf32, #tpu.memory_space<vmem>>, %arg6: memref<3x64x160xbf16, #tpu.memory_space<vmem>>, %arg7: memref<3x64x1xf32, #tpu.memory_space<vmem>>, %arg8: memref<2x64x32xbf16, #tpu.memory_space<vmem>>, %arg9: memref<2x64x1xf32, #tpu.memory_space<vmem>>, %arg10: memref<32x32xbf16, #tpu.memory_space<vmem>>, %arg11: memref<32x1xf32, #tpu.memory_space<vmem>>, %arg12: memref<4x32xbf16, #tpu.memory_space<vmem>>, %arg13: memref<4x1xf32, #tpu.memory_space<vmem>>, %arg14: memref<4x32xbf16, #tpu.memory_space<vmem>>, %arg15: memref<4x1xf32, #tpu.memory_space<vmem>>, %arg16: memref<1x4x128xf32, #tpu.memory_space<vmem>>, %arg17: memref<1x4x128xf32, #tpu.memory_space<vmem>>, %arg18: memref<1x4x128xf32, #tpu.memory_space<vmem>>, %arg19: memref<1x1x128xf32, #tpu.memory_space<vmem>>, %arg20: memref<32x144xbf16, #tpu.memory_space<vmem>>, %arg21: memref<160x128xbf16, #tpu.memory_space<vmem>>, %arg22: memref<32x128xf32, #tpu.memory_space<vmem>>) attributes {dimension_semantics = [#tpu.dimension_semantics<parallel>], iteration_bounds = array<i64: 2>, scalar_prefetch = 0 : i64, scratch_operands = 3 : i64, tpu.core_type = #tpu.core_type<tc>, window_params = [{transform_indices = @transform_0, window_bounds = array<i64: 2>}, {transform_indices = @transform_1, window_bounds = array<i64: 1, 8, 128>}, {transform_indices = @transform_2, window_bounds = array<i64: 1, 4, 128>}, {pipeline_mode = #tpu.pipeline_mode<synchronous>, transform_indices = @transform_3, window_bounds = array<i64: 32, 8>}, {pipeline_mode = #tpu.pipeline_mode<synchronous>, transform_indices = @transform_4, window_bounds = array<i64: 32, 1>}, {pipeline_mode = #tpu.pipeline_mode<synchronous>, transform_indices = @transform_5, window_bounds = array<i64: 3, 64, 160>}, {pipeline_mode = #tpu.pipeline_mode<synchronous>, transform_indices = @transform_6, window_bounds = array<i64: 3, 64, 1>}, {pipeline_mode = #tpu.pipeline_mode<synchronous>, transform_indices = @transform_7, window_bounds = array<i64: 2, 64, 32>}, {pipeline_mode = #tpu.pipeline_mode<synchronous>, transform_indices = @transform_8, window_bounds = array<i64: 2, 64, 1>}, {pipeline_mode = #tpu.pipeline_mode<synchronous>, transform_indices = @transform_9, window_bounds = array<i64: 32, 32>}, {pipeline_mode = #tpu.pipeline_mode<synchronous>, transform_indices = @transform_10, window_bounds = array<i64: 32, 1>}, {pipeline_mode = #tpu.pipeline_mode<synchronous>, transform_indices = @transform_11, window_bounds = array<i64: 4, 32>}, {pipeline_mode = #tpu.pipeline_mode<synchronous>, transform_indices = @transform_12, window_bounds = array<i64: 4, 1>}, {pipeline_mode = #tpu.pipeline_mode<synchronous>, transform_indices = @transform_13, window_bounds = array<i64: 4, 32>}, {pipeline_mode = #tpu.pipeline_mode<synchronous>, transform_indices = @transform_14, window_bounds = array<i64: 4, 1>}, {transform_indices = @transform_15, window_bounds = array<i64: 1, 4, 128>}, {transform_indices = @transform_16, window_bounds = array<i64: 1, 4, 128>}, {transform_indices = @transform_17, window_bounds = array<i64: 1, 4, 128>}, {transform_indices = @transform_18, window_bounds = array<i64: 1, 1, 128>}]} {
    %0 = arith.index_cast %arg0 : i32 to index
    %1 = memref.load %arg1[%0] : memref<2xi32, #tpu.memory_space<smem>>
    %2 = tpu.iota {dimensions = array<i32: 1>} : vector<1x128xi32>
    %3 = vector.broadcast %1 : i32 to vector<1x128xi32>
    %4 = arith.cmpi slt, %2, %3 : vector<1x128xi32>
    %5 = arith.extui %4 : vector<1x128xi1> to vector<1x128xi32>
    %6 = arith.sitofp %5 : vector<1x128xi32> to vector<1x128xf32>
    %c0 = arith.constant 0 : index
    %c0_0 = arith.constant 0 : index
    %7 = vector.load %arg4[%c0, %c0_0] : memref<32x8xbf16, #tpu.memory_space<vmem>>, vector<32x8xbf16>
    %c0_1 = arith.constant 0 : index
    %c0_2 = arith.constant 0 : index
    %c0_3 = arith.constant 0 : index
    %8 = vector.load %arg2[%c0_1, %c0_2, %c0_3] : memref<1x8x128xf32, #tpu.memory_space<vmem>>, vector<1x8x128xf32>
    %9 = vector.shape_cast %8 : vector<1x8x128xf32> to vector<8x128xf32>
    %10 = arith.truncf %9 : vector<8x128xf32> to vector<8x128xbf16>
    %cst = arith.constant dense<0.000000e+00> : vector<32x128xf32>
    %11 = tpu.matmul %7, %10, %cst {dimension_numbers = #tpu.dot_dimension_numbers<[1], [0], [0], [1], [0, 0, 1, 1], [], []>} : vector<32x8xbf16>, vector<8x128xbf16>, vector<32x128xf32> -> vector<32x128xf32>
    %c0_4 = arith.constant 0 : index
    %c0_5 = arith.constant 0 : index
    %12 = vector.load %arg5[%c0_4, %c0_5] : memref<32x1xf32, #tpu.memory_space<vmem>>, vector<32x1xf32>
    %13 = vector.broadcast %12 : vector<32x1xf32> to vector<32x128xf32>
    %14 = arith.addf %11, %13 : vector<32x128xf32>
    %15 = vector.broadcast %6 : vector<1x128xf32> to vector<32x128xf32>
    %16 = arith.mulf %14, %15 : vector<32x128xf32>
    %cst_6 = arith.constant 0.000000e+00 : bf16
    %17 = vector.broadcast %cst_6 : bf16 to vector<32x144xbf16>
    %c0_7 = arith.constant 0 : index
    %c0_8 = arith.constant 0 : index
    %18 = vector.load %arg20[%c0_7, %c0_8] : memref<32x144xbf16, #tpu.memory_space<vmem>>, vector<32x144xbf16>
    tpu.vector_store %arg20[%c0_7, %c0_8], %17 {strides = array<i32>} : memref<32x144xbf16, #tpu.memory_space<vmem>>, vector<32x144xbf16>,
    %cst_9 = arith.constant 0.000000e+00 : f32
    %19 = vector.broadcast %cst_9 : f32 to vector<32x128xf32>
    %c0_10 = arith.constant 0 : index
    %c0_11 = arith.constant 0 : index
    %20 = vector.load %arg22[%c0_10, %c0_11] : memref<32x128xf32, #tpu.memory_space<vmem>>, vector<32x128xf32>
    tpu.vector_store %arg22[%c0_10, %c0_11], %19 {strides = array<i32>} : memref<32x128xf32, #tpu.memory_space<vmem>>, vector<32x128xf32>,
    %21 = arith.truncf %16 : vector<32x128xf32> to vector<32x128xbf16>
    %c0_12 = arith.constant 0 : index
    %c8 = arith.constant 8 : index
    %22 = vector.load %arg20[%c0_12, %c8] : memref<32x144xbf16, #tpu.memory_space<vmem>>, vector<32x128xbf16>
    tpu.vector_store %arg20[%c0_12, %c8], %21 {strides = array<i32>} : memref<32x144xbf16, #tpu.memory_space<vmem>>, vector<32x128xbf16>,
    %c0_13 = arith.constant 0 : index
    %c6 = arith.constant 6 : index
    %23 = vector.load %arg20[%c0_13, %c6] : memref<32x144xbf16, #tpu.memory_space<vmem>>, vector<32x128xbf16>
    %c0_14 = arith.constant 0 : index
    %c0_15 = arith.constant 0 : index
    %24 = vector.load %arg21[%c0_14, %c0_15] : memref<160x128xbf16, #tpu.memory_space<vmem>>, vector<32x128xbf16>
    tpu.vector_store %arg21[%c0_14, %c0_15], %23 {strides = array<i32>} : memref<160x128xbf16, #tpu.memory_space<vmem>>, vector<32x128xbf16>,
    %c0_16 = arith.constant 0 : index
    %c7 = arith.constant 7 : index
    %25 = vector.load %arg20[%c0_16, %c7] : memref<32x144xbf16, #tpu.memory_space<vmem>>, vector<32x128xbf16>
    %c32 = arith.constant 32 : index
    %c0_17 = arith.constant 0 : index
    %26 = vector.load %arg21[%c32, %c0_17] : memref<160x128xbf16, #tpu.memory_space<vmem>>, vector<32x128xbf16>
    tpu.vector_store %arg21[%c32, %c0_17], %25 {strides = array<i32>} : memref<160x128xbf16, #tpu.memory_space<vmem>>, vector<32x128xbf16>,
    %c0_18 = arith.constant 0 : index
    %c8_19 = arith.constant 8 : index
    %27 = vector.load %arg20[%c0_18, %c8_19] : memref<32x144xbf16, #tpu.memory_space<vmem>>, vector<32x128xbf16>
    %c64 = arith.constant 64 : index
    %c0_20 = arith.constant 0 : index
    %28 = vector.load %arg21[%c64, %c0_20] : memref<160x128xbf16, #tpu.memory_space<vmem>>, vector<32x128xbf16>
    tpu.vector_store %arg21[%c64, %c0_20], %27 {strides = array<i32>} : memref<160x128xbf16, #tpu.memory_space<vmem>>, vector<32x128xbf16>,
    %c0_21 = arith.constant 0 : index
    %c9 = arith.constant 9 : index
    %29 = vector.load %arg20[%c0_21, %c9] : memref<32x144xbf16, #tpu.memory_space<vmem>>, vector<32x128xbf16>
    %c96 = arith.constant 96 : index
    %c0_22 = arith.constant 0 : index
    %30 = vector.load %arg21[%c96, %c0_22] : memref<160x128xbf16, #tpu.memory_space<vmem>>, vector<32x128xbf16>
    tpu.vector_store %arg21[%c96, %c0_22], %29 {strides = array<i32>} : memref<160x128xbf16, #tpu.memory_space<vmem>>, vector<32x128xbf16>,
    %c0_23 = arith.constant 0 : index
    %c10 = arith.constant 10 : index
    %31 = vector.load %arg20[%c0_23, %c10] : memref<32x144xbf16, #tpu.memory_space<vmem>>, vector<32x128xbf16>
    %c128 = arith.constant 128 : index
    %c0_24 = arith.constant 0 : index
    %32 = vector.load %arg21[%c128, %c0_24] : memref<160x128xbf16, #tpu.memory_space<vmem>>, vector<32x128xbf16>
    tpu.vector_store %arg21[%c128, %c0_24], %31 {strides = array<i32>} : memref<160x128xbf16, #tpu.memory_space<vmem>>, vector<32x128xbf16>,
    %c0_25 = arith.constant 0 : index
    %c0_26 = arith.constant 0 : index
    %c0_27 = arith.constant 0 : index
    %33 = vector.load %arg6[%c0_25, %c0_26, %c0_27] : memref<3x64x160xbf16, #tpu.memory_space<vmem>>, vector<1x64x160xbf16>
    %34 = vector.shape_cast %33 : vector<1x64x160xbf16> to vector<64x160xbf16>
    %c0_28 = arith.constant 0 : index
    %c0_29 = arith.constant 0 : index
    %35 = vector.load %arg21[%c0_28, %c0_29] : memref<160x128xbf16, #tpu.memory_space<vmem>>, vector<160x128xbf16>
    %cst_30 = arith.constant dense<0.000000e+00> : vector<64x128xf32>
    %36 = tpu.matmul %34, %35, %cst_30 {dimension_numbers = #tpu.dot_dimension_numbers<[1], [0], [0], [1], [0, 0, 1, 1], [], []>} : vector<64x160xbf16>, vector<160x128xbf16>, vector<64x128xf32> -> vector<64x128xf32>
    %c0_31 = arith.constant 0 : index
    %c0_32 = arith.constant 0 : index
    %c0_33 = arith.constant 0 : index
    %37 = vector.load %arg7[%c0_31, %c0_32, %c0_33] : memref<3x64x1xf32, #tpu.memory_space<vmem>>, vector<1x64x1xf32>
    %38 = vector.shape_cast %37 : vector<1x64x1xf32> to vector<64x1xf32>
    %39 = vector.broadcast %38 : vector<64x1xf32> to vector<64x128xf32>
    %40 = arith.addf %36, %39 : vector<64x128xf32>
    %41 = vector.extract_strided_slice %40 {offsets = [0, 0], sizes = [32, 128], strides = [1, 1]} : vector<64x128xf32> to vector<32x128xf32>
    %42 = math.tanh %41 : vector<32x128xf32>
    %43 = vector.extract_strided_slice %40 {offsets = [32, 0], sizes = [32, 128], strides = [1, 1]} : vector<64x128xf32> to vector<32x128xf32>
    %44 = arith.negf %43 : vector<32x128xf32>
    %45 = math.exp %44 : vector<32x128xf32>
    %cst_34 = arith.constant 1.000000e+00 : f32
    %46 = vector.broadcast %cst_34 : f32 to vector<32x128xf32>
    %47 = arith.addf %46, %45 : vector<32x128xf32>
    %48 = arith.divf %46, %47 : vector<32x128xf32>
    %49 = arith.mulf %42, %48 : vector<32x128xf32>
    %50 = arith.truncf %49 : vector<32x128xf32> to vector<32x128xbf16>
    %c0_35 = arith.constant 0 : index
    %c0_36 = arith.constant 0 : index
    %c0_37 = arith.constant 0 : index
    %51 = vector.load %arg8[%c0_35, %c0_36, %c0_37] : memref<2x64x32xbf16, #tpu.memory_space<vmem>>, vector<1x64x32xbf16>
    %52 = vector.shape_cast %51 : vector<1x64x32xbf16> to vector<64x32xbf16>
    %cst_38 = arith.constant dense<0.000000e+00> : vector<64x128xf32>
    %53 = tpu.matmul %52, %50, %cst_38 {dimension_numbers = #tpu.dot_dimension_numbers<[1], [0], [0], [1], [0, 0, 1, 1], [], []>} : vector<64x32xbf16>, vector<32x128xbf16>, vector<64x128xf32> -> vector<64x128xf32>
    %c0_39 = arith.constant 0 : index
    %c0_40 = arith.constant 0 : index
    %c0_41 = arith.constant 0 : index
    %54 = vector.load %arg9[%c0_39, %c0_40, %c0_41] : memref<2x64x1xf32, #tpu.memory_space<vmem>>, vector<1x64x1xf32>
    %55 = vector.shape_cast %54 : vector<1x64x1xf32> to vector<64x1xf32>
    %56 = vector.broadcast %55 : vector<64x1xf32> to vector<64x128xf32>
    %57 = arith.addf %53, %56 : vector<64x128xf32>
    %58 = vector.extract_strided_slice %57 {offsets = [0, 0], sizes = [32, 128], strides = [1, 1]} : vector<64x128xf32> to vector<32x128xf32>
    %59 = arith.addf %16, %58 : vector<32x128xf32>
    %60 = vector.broadcast %6 : vector<1x128xf32> to vector<32x128xf32>
    %61 = arith.mulf %59, %60 : vector<32x128xf32>
    %c0_42 = arith.constant 0 : index
    %c0_43 = arith.constant 0 : index
    %62 = vector.load %arg22[%c0_42, %c0_43] : memref<32x128xf32, #tpu.memory_space<vmem>>, vector<32x128xf32>
    %63 = vector.extract_strided_slice %57 {offsets = [32, 0], sizes = [32, 128], strides = [1, 1]} : vector<64x128xf32> to vector<32x128xf32>
    %64 = arith.addf %62, %63 : vector<32x128xf32>
    %c0_44 = arith.constant 0 : index
    %c0_45 = arith.constant 0 : index
    %65 = vector.load %arg22[%c0_44, %c0_45] : memref<32x128xf32, #tpu.memory_space<vmem>>, vector<32x128xf32>
    tpu.vector_store %arg22[%c0_44, %c0_45], %64 {strides = array<i32>} : memref<32x128xf32, #tpu.memory_space<vmem>>, vector<32x128xf32>,
    %66 = arith.truncf %61 : vector<32x128xf32> to vector<32x128xbf16>
    %c0_46 = arith.constant 0 : index
    %c8_47 = arith.constant 8 : index
    %67 = vector.load %arg20[%c0_46, %c8_47] : memref<32x144xbf16, #tpu.memory_space<vmem>>, vector<32x128xbf16>
    tpu.vector_store %arg20[%c0_46, %c8_47], %66 {strides = array<i32>} : memref<32x144xbf16, #tpu.memory_space<vmem>>, vector<32x128xbf16>,
    %c0_48 = arith.constant 0 : index
    %c4 = arith.constant 4 : index
    %68 = vector.load %arg20[%c0_48, %c4] : memref<32x144xbf16, #tpu.memory_space<vmem>>, vector<32x128xbf16>
    %c0_49 = arith.constant 0 : index
    %c0_50 = arith.constant 0 : index
    %69 = vector.load %arg21[%c0_49, %c0_50] : memref<160x128xbf16, #tpu.memory_space<vmem>>, vector<32x128xbf16>
    tpu.vector_store %arg21[%c0_49, %c0_50], %68 {strides = array<i32>} : memref<160x128xbf16, #tpu.memory_space<vmem>>, vector<32x128xbf16>,
    %c0_51 = arith.constant 0 : index
    %c6_52 = arith.constant 6 : index
    %70 = vector.load %arg20[%c0_51, %c6_52] : memref<32x144xbf16, #tpu.memory_space<vmem>>, vector<32x128xbf16>
    %c32_53 = arith.constant 32 : index
    %c0_54 = arith.constant 0 : index
    %71 = vector.load %arg21[%c32_53, %c0_54] : memref<160x128xbf16, #tpu.memory_space<vmem>>, vector<32x128xbf16>
    tpu.vector_store %arg21[%c32_53, %c0_54], %70 {strides = array<i32>} : memref<160x128xbf16, #tpu.memory_space<vmem>>, vector<32x128xbf16>,
    %c0_55 = arith.constant 0 : index
    %c8_56 = arith.constant 8 : index
    %72 = vector.load %arg20[%c0_55, %c8_56] : memref<32x144xbf16, #tpu.memory_space<vmem>>, vector<32x128xbf16>
    %c64_57 = arith.constant 64 : index
    %c0_58 = arith.constant 0 : index
    %73 = vector.load %arg21[%c64_57, %c0_58] : memref<160x128xbf16, #tpu.memory_space<vmem>>, vector<32x128xbf16>
    tpu.vector_store %arg21[%c64_57, %c0_58], %72 {strides = array<i32>} : memref<160x128xbf16, #tpu.memory_space<vmem>>, vector<32x128xbf16>,
    %c0_59 = arith.constant 0 : index
    %c10_60 = arith.constant 10 : index
    %74 = vector.load %arg20[%c0_59, %c10_60] : memref<32x144xbf16, #tpu.memory_space<vmem>>, vector<32x128xbf16>
    %c96_61 = arith.constant 96 : index
    %c0_62 = arith.constant 0 : index
    %75 = vector.load %arg21[%c96_61, %c0_62] : memref<160x128xbf16, #tpu.memory_space<vmem>>, vector<32x128xbf16>
    tpu.vector_store %arg21[%c96_61, %c0_62], %74 {strides = array<i32>} : memref<160x128xbf16, #tpu.memory_space<vmem>>, vector<32x128xbf16>,
    %c0_63 = arith.constant 0 : index
    %c12 = arith.constant 12 : index
    %76 = vector.load %arg20[%c0_63, %c12] : memref<32x144xbf16, #tpu.memory_space<vmem>>, vector<32x128xbf16>
    %c128_64 = arith.constant 128 : index
    %c0_65 = arith.constant 0 : index
    %77 = vector.load %arg21[%c128_64, %c0_65] : memref<160x128xbf16, #tpu.memory_space<vmem>>, vector<32x128xbf16>
    tpu.vector_store %arg21[%c128_64, %c0_65], %76 {strides = array<i32>} : memref<160x128xbf16, #tpu.memory_space<vmem>>, vector<32x128xbf16>,
    %c1 = arith.constant 1 : index
    %c0_66 = arith.constant 0 : index
    %c0_67 = arith.constant 0 : index
    %78 = vector.load %arg6[%c1, %c0_66, %c0_67] : memref<3x64x160xbf16, #tpu.memory_space<vmem>>, vector<1x64x160xbf16>
    %79 = vector.shape_cast %78 : vector<1x64x160xbf16> to vector<64x160xbf16>
    %c0_68 = arith.constant 0 : index
    %c0_69 = arith.constant 0 : index
    %80 = vector.load %arg21[%c0_68, %c0_69] : memref<160x128xbf16, #tpu.memory_space<vmem>>, vector<160x128xbf16>
    %cst_70 = arith.constant dense<0.000000e+00> : vector<64x128xf32>
    %81 = tpu.matmul %79, %80, %cst_70 {dimension_numbers = #tpu.dot_dimension_numbers<[1], [0], [0], [1], [0, 0, 1, 1], [], []>} : vector<64x160xbf16>, vector<160x128xbf16>, vector<64x128xf32> -> vector<64x128xf32>
    %c1_71 = arith.constant 1 : index
    %c0_72 = arith.constant 0 : index
    %c0_73 = arith.constant 0 : index
    %82 = vector.load %arg7[%c1_71, %c0_72, %c0_73] : memref<3x64x1xf32, #tpu.memory_space<vmem>>, vector<1x64x1xf32>
    %83 = vector.shape_cast %82 : vector<1x64x1xf32> to vector<64x1xf32>
    %84 = vector.broadcast %83 : vector<64x1xf32> to vector<64x128xf32>
    %85 = arith.addf %81, %84 : vector<64x128xf32>
    %86 = vector.extract_strided_slice %85 {offsets = [0, 0], sizes = [32, 128], strides = [1, 1]} : vector<64x128xf32> to vector<32x128xf32>
    %87 = math.tanh %86 : vector<32x128xf32>
    %88 = vector.extract_strided_slice %85 {offsets = [32, 0], sizes = [32, 128], strides = [1, 1]} : vector<64x128xf32> to vector<32x128xf32>
    %89 = arith.negf %88 : vector<32x128xf32>
    %90 = math.exp %89 : vector<32x128xf32>
    %cst_74 = arith.constant 1.000000e+00 : f32
    %91 = vector.broadcast %cst_74 : f32 to vector<32x128xf32>
    %92 = arith.addf %91, %90 : vector<32x128xf32>
    %93 = arith.divf %91, %92 : vector<32x128xf32>
    %94 = arith.mulf %87, %93 : vector<32x128xf32>
    %95 = arith.truncf %94 : vector<32x128xf32> to vector<32x128xbf16>
    %c1_75 = arith.constant 1 : index
    %c0_76 = arith.constant 0 : index
    %c0_77 = arith.constant 0 : index
    %96 = vector.load %arg8[%c1_75, %c0_76, %c0_77] : memref<2x64x32xbf16, #tpu.memory_space<vmem>>, vector<1x64x32xbf16>
    %97 = vector.shape_cast %96 : vector<1x64x32xbf16> to vector<64x32xbf16>
    %cst_78 = arith.constant dense<0.000000e+00> : vector<64x128xf32>
    %98 = tpu.matmul %97, %95, %cst_78 {dimension_numbers = #tpu.dot_dimension_numbers<[1], [0], [0], [1], [0, 0, 1, 1], [], []>} : vector<64x32xbf16>, vector<32x128xbf16>, vector<64x128xf32> -> vector<64x128xf32>
    %c1_79 = arith.constant 1 : index
    %c0_80 = arith.constant 0 : index
    %c0_81 = arith.constant 0 : index
    %99 = vector.load %arg9[%c1_79, %c0_80, %c0_81] : memref<2x64x1xf32, #tpu.memory_space<vmem>>, vector<1x64x1xf32>
    %100 = vector.shape_cast %99 : vector<1x64x1xf32> to vector<64x1xf32>
    %101 = vector.broadcast %100 : vector<64x1xf32> to vector<64x128xf32>
    %102 = arith.addf %98, %101 : vector<64x128xf32>
    %103 = vector.extract_strided_slice %102 {offsets = [0, 0], sizes = [32, 128], strides = [1, 1]} : vector<64x128xf32> to vector<32x128xf32>
    %104 = arith.addf %61, %103 : vector<32x128xf32>
    %105 = vector.broadcast %6 : vector<1x128xf32> to vector<32x128xf32>
    %106 = arith.mulf %104, %105 : vector<32x128xf32>
    %c0_82 = arith.constant 0 : index
    %c0_83 = arith.constant 0 : index
    %107 = vector.load %arg22[%c0_82, %c0_83] : memref<32x128xf32, #tpu.memory_space<vmem>>, vector<32x128xf32>
    %108 = vector.extract_strided_slice %102 {offsets = [32, 0], sizes = [32, 128], strides = [1, 1]} : vector<64x128xf32> to vector<32x128xf32>
    %109 = arith.addf %107, %108 : vector<32x128xf32>
    %c0_84 = arith.constant 0 : index
    %c0_85 = arith.constant 0 : index
    %110 = vector.load %arg22[%c0_84, %c0_85] : memref<32x128xf32, #tpu.memory_space<vmem>>, vector<32x128xf32>
    tpu.vector_store %arg22[%c0_84, %c0_85], %109 {strides = array<i32>} : memref<32x128xf32, #tpu.memory_space<vmem>>, vector<32x128xf32>,
    %111 = arith.truncf %106 : vector<32x128xf32> to vector<32x128xbf16>
    %c0_86 = arith.constant 0 : index
    %c8_87 = arith.constant 8 : index
    %112 = vector.load %arg20[%c0_86, %c8_87] : memref<32x144xbf16, #tpu.memory_space<vmem>>, vector<32x128xbf16>
    tpu.vector_store %arg20[%c0_86, %c8_87], %111 {strides = array<i32>} : memref<32x144xbf16, #tpu.memory_space<vmem>>, vector<32x128xbf16>,
    %c0_88 = arith.constant 0 : index
    %c0_89 = arith.constant 0 : index
    %113 = vector.load %arg20[%c0_88, %c0_89] : memref<32x144xbf16, #tpu.memory_space<vmem>>, vector<32x128xbf16>
    %c0_90 = arith.constant 0 : index
    %c0_91 = arith.constant 0 : index
    %114 = vector.load %arg21[%c0_90, %c0_91] : memref<160x128xbf16, #tpu.memory_space<vmem>>, vector<32x128xbf16>
    tpu.vector_store %arg21[%c0_90, %c0_91], %113 {strides = array<i32>} : memref<160x128xbf16, #tpu.memory_space<vmem>>, vector<32x128xbf16>,
    %c0_92 = arith.constant 0 : index
    %c4_93 = arith.constant 4 : index
    %115 = vector.load %arg20[%c0_92, %c4_93] : memref<32x144xbf16, #tpu.memory_space<vmem>>, vector<32x128xbf16>
    %c32_94 = arith.constant 32 : index
    %c0_95 = arith.constant 0 : index
    %116 = vector.load %arg21[%c32_94, %c0_95] : memref<160x128xbf16, #tpu.memory_space<vmem>>, vector<32x128xbf16>
    tpu.vector_store %arg21[%c32_94, %c0_95], %115 {strides = array<i32>} : memref<160x128xbf16, #tpu.memory_space<vmem>>, vector<32x128xbf16>,
    %c0_96 = arith.constant 0 : index
    %c8_97 = arith.constant 8 : index
    %117 = vector.load %arg20[%c0_96, %c8_97] : memref<32x144xbf16, #tpu.memory_space<vmem>>, vector<32x128xbf16>
    %c64_98 = arith.constant 64 : index
    %c0_99 = arith.constant 0 : index
    %118 = vector.load %arg21[%c64_98, %c0_99] : memref<160x128xbf16, #tpu.memory_space<vmem>>, vector<32x128xbf16>
    tpu.vector_store %arg21[%c64_98, %c0_99], %117 {strides = array<i32>} : memref<160x128xbf16, #tpu.memory_space<vmem>>, vector<32x128xbf16>,
    %c0_100 = arith.constant 0 : index
    %c12_101 = arith.constant 12 : index
    %119 = vector.load %arg20[%c0_100, %c12_101] : memref<32x144xbf16, #tpu.memory_space<vmem>>, vector<32x128xbf16>
    %c96_102 = arith.constant 96 : index
    %c0_103 = arith.constant 0 : index
    %120 = vector.load %arg21[%c96_102, %c0_103] : memref<160x128xbf16, #tpu.memory_space<vmem>>, vector<32x128xbf16>
    tpu.vector_store %arg21[%c96_102, %c0_103], %119 {strides = array<i32>} : memref<160x128xbf16, #tpu.memory_space<vmem>>, vector<32x128xbf16>,
    %c0_104 = arith.constant 0 : index
    %c16 = arith.constant 16 : index
    %121 = vector.load %arg20[%c0_104, %c16] : memref<32x144xbf16, #tpu.memory_space<vmem>>, vector<32x128xbf16>
    %c128_105 = arith.constant 128 : index
    %c0_106 = arith.constant 0 : index
    %122 = vector.load %arg21[%c128_105, %c0_106] : memref<160x128xbf16, #tpu.memory_space<vmem>>, vector<32x128xbf16>
    tpu.vector_store %arg21[%c128_105, %c0_106], %121 {strides = array<i32>} : memref<160x128xbf16, #tpu.memory_space<vmem>>, vector<32x128xbf16>,
    %c2 = arith.constant 2 : index
    %c0_107 = arith.constant 0 : index
    %c0_108 = arith.constant 0 : index
    %123 = vector.load %arg6[%c2, %c0_107, %c0_108] : memref<3x64x160xbf16, #tpu.memory_space<vmem>>, vector<1x64x160xbf16>
    %124 = vector.shape_cast %123 : vector<1x64x160xbf16> to vector<64x160xbf16>
    %c0_109 = arith.constant 0 : index
    %c0_110 = arith.constant 0 : index
    %125 = vector.load %arg21[%c0_109, %c0_110] : memref<160x128xbf16, #tpu.memory_space<vmem>>, vector<160x128xbf16>
    %cst_111 = arith.constant dense<0.000000e+00> : vector<64x128xf32>
    %126 = tpu.matmul %124, %125, %cst_111 {dimension_numbers = #tpu.dot_dimension_numbers<[1], [0], [0], [1], [0, 0, 1, 1], [], []>} : vector<64x160xbf16>, vector<160x128xbf16>, vector<64x128xf32> -> vector<64x128xf32>
    %c2_112 = arith.constant 2 : index
    %c0_113 = arith.constant 0 : index
    %c0_114 = arith.constant 0 : index
    %127 = vector.load %arg7[%c2_112, %c0_113, %c0_114] : memref<3x64x1xf32, #tpu.memory_space<vmem>>, vector<1x64x1xf32>
    %128 = vector.shape_cast %127 : vector<1x64x1xf32> to vector<64x1xf32>
    %129 = vector.broadcast %128 : vector<64x1xf32> to vector<64x128xf32>
    %130 = arith.addf %126, %129 : vector<64x128xf32>
    %131 = vector.extract_strided_slice %130 {offsets = [0, 0], sizes = [32, 128], strides = [1, 1]} : vector<64x128xf32> to vector<32x128xf32>
    %132 = math.tanh %131 : vector<32x128xf32>
    %133 = vector.extract_strided_slice %130 {offsets = [32, 0], sizes = [32, 128], strides = [1, 1]} : vector<64x128xf32> to vector<32x128xf32>
    %134 = arith.negf %133 : vector<32x128xf32>
    %135 = math.exp %134 : vector<32x128xf32>
    %cst_115 = arith.constant 1.000000e+00 : f32
    %136 = vector.broadcast %cst_115 : f32 to vector<32x128xf32>
    %137 = arith.addf %136, %135 : vector<32x128xf32>
    %138 = arith.divf %136, %137 : vector<32x128xf32>
    %139 = arith.mulf %132, %138 : vector<32x128xf32>
    %140 = arith.truncf %139 : vector<32x128xf32> to vector<32x128xbf16>
    %c0_116 = arith.constant 0 : index
    %c0_117 = arith.constant 0 : index
    %141 = vector.load %arg10[%c0_116, %c0_117] : memref<32x32xbf16, #tpu.memory_space<vmem>>, vector<32x32xbf16>
    %cst_118 = arith.constant dense<0.000000e+00> : vector<32x128xf32>
    %142 = tpu.matmul %141, %140, %cst_118 {dimension_numbers = #tpu.dot_dimension_numbers<[1], [0], [0], [1], [0, 0, 1, 1], [], []>} : vector<32x32xbf16>, vector<32x128xbf16>, vector<32x128xf32> -> vector<32x128xf32>
    %c0_119 = arith.constant 0 : index
    %c0_120 = arith.constant 0 : index
    %143 = vector.load %arg11[%c0_119, %c0_120] : memref<32x1xf32, #tpu.memory_space<vmem>>, vector<32x1xf32>
    %144 = vector.broadcast %143 : vector<32x1xf32> to vector<32x128xf32>
    %145 = arith.addf %142, %144 : vector<32x128xf32>
    %c0_121 = arith.constant 0 : index
    %c0_122 = arith.constant 0 : index
    %146 = vector.load %arg22[%c0_121, %c0_122] : memref<32x128xf32, #tpu.memory_space<vmem>>, vector<32x128xf32>
    %147 = arith.addf %146, %145 : vector<32x128xf32>
    %c0_123 = arith.constant 0 : index
    %c0_124 = arith.constant 0 : index
    %148 = vector.load %arg22[%c0_123, %c0_124] : memref<32x128xf32, #tpu.memory_space<vmem>>, vector<32x128xf32>
    tpu.vector_store %arg22[%c0_123, %c0_124], %147 {strides = array<i32>} : memref<32x128xf32, #tpu.memory_space<vmem>>, vector<32x128xf32>,
    %c0_125 = arith.constant 0 : index
    %c0_126 = arith.constant 0 : index
    %149 = vector.load %arg22[%c0_125, %c0_126] : memref<32x128xf32, #tpu.memory_space<vmem>>, vector<32x128xf32>
    %150 = vector.broadcast %6 : vector<1x128xf32> to vector<32x128xf32>
    %151 = arith.mulf %149, %150 : vector<32x128xf32>
    %152 = arith.truncf %151 : vector<32x128xf32> to vector<32x128xbf16>
    %c0_127 = arith.constant 0 : index
    %c0_128 = arith.constant 0 : index
    %153 = vector.load %arg12[%c0_127, %c0_128] : memref<4x32xbf16, #tpu.memory_space<vmem>>, vector<4x32xbf16>
    %cst_129 = arith.constant dense<0.000000e+00> : vector<4x128xf32>
    %154 = tpu.matmul %153, %152, %cst_129 {dimension_numbers = #tpu.dot_dimension_numbers<[1], [0], [0], [1], [0, 0, 1, 1], [], []>} : vector<4x32xbf16>, vector<32x128xbf16>, vector<4x128xf32> -> vector<4x128xf32>
    %c0_130 = arith.constant 0 : index
    %c0_131 = arith.constant 0 : index
    %155 = vector.load %arg13[%c0_130, %c0_131] : memref<4x1xf32, #tpu.memory_space<vmem>>, vector<4x1xf32>
    %156 = vector.broadcast %155 : vector<4x1xf32> to vector<4x128xf32>
    %157 = arith.addf %154, %156 : vector<4x128xf32>
    %158 = vector.broadcast %6 : vector<1x128xf32> to vector<4x128xf32>
    %159 = arith.mulf %157, %158 : vector<4x128xf32>
    %c0_132 = arith.constant 0 : index
    %c0_133 = arith.constant 0 : index
    %160 = vector.load %arg14[%c0_132, %c0_133] : memref<4x32xbf16, #tpu.memory_space<vmem>>, vector<4x32xbf16>
    %cst_134 = arith.constant dense<0.000000e+00> : vector<4x128xf32>
    %161 = tpu.matmul %160, %152, %cst_134 {dimension_numbers = #tpu.dot_dimension_numbers<[1], [0], [0], [1], [0, 0, 1, 1], [], []>} : vector<4x32xbf16>, vector<32x128xbf16>, vector<4x128xf32> -> vector<4x128xf32>
    %c0_135 = arith.constant 0 : index
    %c0_136 = arith.constant 0 : index
    %162 = vector.load %arg15[%c0_135, %c0_136] : memref<4x1xf32, #tpu.memory_space<vmem>>, vector<4x1xf32>
    %163 = vector.broadcast %162 : vector<4x1xf32> to vector<4x128xf32>
    %164 = arith.addf %161, %163 : vector<4x128xf32>
    %165 = vector.broadcast %6 : vector<1x128xf32> to vector<4x128xf32>
    %166 = arith.mulf %164, %165 : vector<4x128xf32>
    %c0_137 = arith.constant 0 : index
    %c0_138 = arith.constant 0 : index
    %c0_139 = arith.constant 0 : index
    %167 = vector.load %arg3[%c0_137, %c0_138, %c0_139] : memref<1x4x128xf32, #tpu.memory_space<vmem>>, vector<1x4x128xf32>
    %168 = vector.shape_cast %167 : vector<1x4x128xf32> to vector<4x128xf32>
    %169 = math.exp %166 : vector<4x128xf32>
    %170 = arith.mulf %168, %169 : vector<4x128xf32>
    %171 = arith.addf %159, %170 : vector<4x128xf32>
    %172 = vector.broadcast %6 : vector<1x128xf32> to vector<4x128xf32>
    %173 = arith.mulf %171, %172 : vector<4x128xf32>
    %c0_140 = arith.constant 0 : index
    %c0_141 = arith.constant 0 : index
    %c0_142 = arith.constant 0 : index
    %174 = vector.load %arg16[%c0_140, %c0_141, %c0_142] : memref<1x4x128xf32, #tpu.memory_space<vmem>>, vector<1x4x128xf32>
    %175 = vector.shape_cast %174 : vector<1x4x128xf32> to vector<4x128xf32>
    %176 = vector.shape_cast %173 : vector<4x128xf32> to vector<1x4x128xf32>
    tpu.vector_store %arg16[%c0_140, %c0_141, %c0_142], %176 {strides = array<i32>} : memref<1x4x128xf32, #tpu.memory_space<vmem>>, vector<1x4x128xf32>,
    %c0_143 = arith.constant 0 : index
    %c0_144 = arith.constant 0 : index
    %c0_145 = arith.constant 0 : index
    %177 = vector.load %arg17[%c0_143, %c0_144, %c0_145] : memref<1x4x128xf32, #tpu.memory_space<vmem>>, vector<1x4x128xf32>
    %178 = vector.shape_cast %177 : vector<1x4x128xf32> to vector<4x128xf32>
    %179 = vector.shape_cast %159 : vector<4x128xf32> to vector<1x4x128xf32>
    tpu.vector_store %arg17[%c0_143, %c0_144, %c0_145], %179 {strides = array<i32>} : memref<1x4x128xf32, #tpu.memory_space<vmem>>, vector<1x4x128xf32>,
    %c0_146 = arith.constant 0 : index
    %c0_147 = arith.constant 0 : index
    %c0_148 = arith.constant 0 : index
    %180 = vector.load %arg18[%c0_146, %c0_147, %c0_148] : memref<1x4x128xf32, #tpu.memory_space<vmem>>, vector<1x4x128xf32>
    %181 = vector.shape_cast %180 : vector<1x4x128xf32> to vector<4x128xf32>
    %182 = vector.shape_cast %166 : vector<4x128xf32> to vector<1x4x128xf32>
    tpu.vector_store %arg18[%c0_146, %c0_147, %c0_148], %182 {strides = array<i32>} : memref<1x4x128xf32, #tpu.memory_space<vmem>>, vector<1x4x128xf32>,
    %c0_149 = arith.constant 0 : index
    %c0_150 = arith.constant 0 : index
    %c0_151 = arith.constant 0 : index
    %183 = vector.load %arg19[%c0_149, %c0_150, %c0_151] : memref<1x1x128xf32, #tpu.memory_space<vmem>>, vector<1x1x128xf32>
    %184 = vector.shape_cast %183 : vector<1x1x128xf32> to vector<1x128xf32>
    %185 = vector.shape_cast %6 : vector<1x128xf32> to vector<1x1x128xf32>
    tpu.vector_store %arg19[%c0_149, %c0_150, %c0_151], %185 {strides = array<i32>} : memref<1x1x128xf32, #tpu.memory_space<vmem>>, vector<1x1x128xf32>,
    return
  }
  func.func @transform_0(%arg0: i32) -> i32 {
    %c0_i32 = arith.constant 0 : i32
    %c0_i32_0 = arith.constant 0 : i32
    return %c0_i32 : i32
  }
  func.func @transform_1(%arg0: i32) -> (i32, i32, i32) {
    %c0_i32 = arith.constant 0 : i32
    %c0_i32_0 = arith.constant 0 : i32
    %c0_i32_1 = arith.constant 0 : i32
    return %arg0, %c0_i32, %c0_i32_0 : i32, i32, i32
  }
  func.func @transform_2(%arg0: i32) -> (i32, i32, i32) {
    %c0_i32 = arith.constant 0 : i32
    %c0_i32_0 = arith.constant 0 : i32
    %c0_i32_1 = arith.constant 0 : i32
    return %arg0, %c0_i32, %c0_i32_0 : i32, i32, i32
  }
  func.func @transform_3(%arg0: i32) -> (i32, i32) {
    %c0_i32 = arith.constant 0 : i32
    %c0_i32_0 = arith.constant 0 : i32
    %c0_i32_1 = arith.constant 0 : i32
    return %c0_i32, %c0_i32_0 : i32, i32
  }
  func.func @transform_4(%arg0: i32) -> (i32, i32) {
    %c0_i32 = arith.constant 0 : i32
    %c0_i32_0 = arith.constant 0 : i32
    %c0_i32_1 = arith.constant 0 : i32
    return %c0_i32, %c0_i32_0 : i32, i32
  }
  func.func @transform_5(%arg0: i32) -> (i32, i32, i32) {
    %c0_i32 = arith.constant 0 : i32
    %c0_i32_0 = arith.constant 0 : i32
    %c0_i32_1 = arith.constant 0 : i32
    %c0_i32_2 = arith.constant 0 : i32
    return %c0_i32, %c0_i32_0, %c0_i32_1 : i32, i32, i32
  }
  func.func @transform_6(%arg0: i32) -> (i32, i32, i32) {
    %c0_i32 = arith.constant 0 : i32
    %c0_i32_0 = arith.constant 0 : i32
    %c0_i32_1 = arith.constant 0 : i32
    %c0_i32_2 = arith.constant 0 : i32
    return %c0_i32, %c0_i32_0, %c0_i32_1 : i32, i32, i32
  }
  func.func @transform_7(%arg0: i32) -> (i32, i32, i32) {
    %c0_i32 = arith.constant 0 : i32
    %c0_i32_0 = arith.constant 0 : i32
    %c0_i32_1 = arith.constant 0 : i32
    %c0_i32_2 = arith.constant 0 : i32
    return %c0_i32, %c0_i32_0, %c0_i32_1 : i32, i32, i32
  }
  func.func @transform_8(%arg0: i32) -> (i32, i32, i32) {
    %c0_i32 = arith.constant 0 : i32
    %c0_i32_0 = arith.constant 0 : i32
    %c0_i32_1 = arith.constant 0 : i32
    %c0_i32_2 = arith.constant 0 : i32
    return %c0_i32, %c0_i32_0, %c0_i32_1 : i32, i32, i32
  }
  func.func @transform_9(%arg0: i32) -> (i32, i32) {
    %c0_i32 = arith.constant 0 : i32
    %c0_i32_0 = arith.constant 0 : i32
    %c0_i32_1 = arith.constant 0 : i32
    return %c0_i32, %c0_i32_0 : i32, i32
  }
  func.func @transform_10(%arg0: i32) -> (i32, i32) {
    %c0_i32 = arith.constant 0 : i32
    %c0_i32_0 = arith.constant 0 : i32
    %c0_i32_1 = arith.constant 0 : i32
    return %c0_i32, %c0_i32_0 : i32, i32
  }
  func.func @transform_11(%arg0: i32) -> (i32, i32) {
    %c0_i32 = arith.constant 0 : i32
    %c0_i32_0 = arith.constant 0 : i32
    %c0_i32_1 = arith.constant 0 : i32
    return %c0_i32, %c0_i32_0 : i32, i32
  }
  func.func @transform_12(%arg0: i32) -> (i32, i32) {
    %c0_i32 = arith.constant 0 : i32
    %c0_i32_0 = arith.constant 0 : i32
    %c0_i32_1 = arith.constant 0 : i32
    return %c0_i32, %c0_i32_0 : i32, i32
  }
  func.func @transform_13(%arg0: i32) -> (i32, i32) {
    %c0_i32 = arith.constant 0 : i32
    %c0_i32_0 = arith.constant 0 : i32
    %c0_i32_1 = arith.constant 0 : i32
    return %c0_i32, %c0_i32_0 : i32, i32
  }
  func.func @transform_14(%arg0: i32) -> (i32, i32) {
    %c0_i32 = arith.constant 0 : i32
    %c0_i32_0 = arith.constant 0 : i32
    %c0_i32_1 = arith.constant 0 : i32
    return %c0_i32, %c0_i32_0 : i32, i32
  }
  func.func @transform_15(%arg0: i32) -> (i32, i32, i32) {
    %c0_i32 = arith.constant 0 : i32
    %c0_i32_0 = arith.constant 0 : i32
    %c0_i32_1 = arith.constant 0 : i32
    return %arg0, %c0_i32, %c0_i32_0 : i32, i32, i32
  }
  func.func @transform_16(%arg0: i32) -> (i32, i32, i32) {
    %c0_i32 = arith.constant 0 : i32
    %c0_i32_0 = arith.constant 0 : i32
    %c0_i32_1 = arith.constant 0 : i32
    return %arg0, %c0_i32, %c0_i32_0 : i32, i32, i32
  }
  func.func @transform_17(%arg0: i32) -> (i32, i32, i32) {
    %c0_i32 = arith.constant 0 : i32
    %c0_i32_0 = arith.constant 0 : i32
    %c0_i32_1 = arith.constant 0 : i32
    return %arg0, %c0_i32, %c0_i32_0 : i32, i32, i32
  }
  func.func @transform_18(%arg0: i32) -> (i32, i32, i32) {
    %c0_i32 = arith.constant 0 : i32
    %c0_i32_0 = arith.constant 0 : i32
    %c0_i32_1 = arith.constant 0 : i32
    return %arg0, %c0_i32, %c0_i32_0 : i32, i32, i32
  }
}

</mosaic_0001>

<llo_original>
// kernel: tpu_custom_call.1
$region0: #{tpu_custom_call.1}
  #allocation0 [shape = 'u32[]', space=smem, size = 0x4, offset = 0x4, fixed_abs, tag = 'smem constant byte address 0x4 - core index']
  #allocation1 [shape = 'u32[72,128]{1,0:T(1,128)}', space=vmem, size = 0x9000, scoped, tag = 'internal scratch']
  #allocation2 [shape = 'bf16[32,144]{1,0:T(8,128)(2,1)}', space=vmem, size = 0x4000, scoped, tag = 'scratch operand']
  #allocation3 [shape = 'bf16[160,128]{1,0:T(8,128)(2,1)}', space=vmem, size = 0xa000, scoped, tag = 'scratch operand']
  #allocation4 [shape = 'f32[32,128]{1,0:T(8,128)}', space=vmem, size = 0x4000, scoped, tag = 'scratch operand']
  %s0 = inlined_call_operand.vmem [shape: s32[2], index: 0, kind: input, shape index: {}]
  %s1 = inlined_call_operand.vmem [shape: f32[2,8,128], index: 1, kind: input, shape index: {}]
  %s2 = inlined_call_operand.vmem [shape: f32[2,4,128], index: 2, kind: input, shape index: {}]
  %s3 = inlined_call_operand.vmem [shape: bf16[32,8], index: 3, kind: input, shape index: {}]
  %s4 = inlined_call_operand.vmem [shape: f32[32,1], index: 4, kind: input, shape index: {}]
  %s5 = inlined_call_operand.vmem [shape: bf16[3,64,160], index: 5, kind: input, shape index: {}]
  %s6 = inlined_call_operand.vmem [shape: f32[3,64,1], index: 6, kind: input, shape index: {}]
  %s7 = inlined_call_operand.vmem [shape: bf16[2,64,32], index: 7, kind: input, shape index: {}]
  %s8 = inlined_call_operand.vmem [shape: f32[2,64,1], index: 8, kind: input, shape index: {}]
  %s9 = inlined_call_operand.vmem [shape: bf16[32,32], index: 9, kind: input, shape index: {}]
  %s10 = inlined_call_operand.vmem [shape: f32[32,1], index: 10, kind: input, shape index: {}]
  %s11 = inlined_call_operand.vmem [shape: bf16[4,32], index: 11, kind: input, shape index: {}]
  %s12 = inlined_call_operand.vmem [shape: f32[4,1], index: 12, kind: input, shape index: {}]
  %s13 = inlined_call_operand.vmem [shape: bf16[4,32], index: 13, kind: input, shape index: {}]
  %s14 = inlined_call_operand.vmem [shape: f32[4,1], index: 14, kind: input, shape index: {}]
  %s15 = inlined_call_operand.hbm [shape: f32[2,4,128], index: 15, kind: output, shape index: {0}]
  %s16 = inlined_call_operand.hbm [shape: f32[2,4,128], index: 16, kind: output, shape index: {1}]
  %s17 = inlined_call_operand.hbm [shape: f32[2,4,128], index: 17, kind: output, shape index: {2}]
  %s18 = inlined_call_operand.hbm [shape: f32[2,1,128], index: 18, kind: output, shape index: {3}]
  %19 = xla_tuple %s15, %s16, %s17, %s18
  %s20 = sld [smem:[#allocation0]]
  $region121: #{tpu_custom_call.1} parent=0
    _
  %s22 = ssub.s32 1, %s20
  %s23 = scalar_select 0, %s22, %s20
  $region1: #{tpu_custom_call.1} parent=0
    #allocation5 [shape = 'u8[512]{0}', space=smem, size = 0x200, scoped, tag = 'input window, operand 0, single buffered']
    #allocation6 [shape = 's32[2]{0}', space=sflag, size = 0x8, scoped, tag = 'scoped memory for tpu_custom_call.1']
    #allocation7 [shape = 's32[2]{0}', space=sflag, size = 0x8, scoped, tag = 'scoped memory for tpu_custom_call.1']
    #allocation8 [shape = 'u8[4096]{0}', space=vmem, size = 0x1000, scoped, tag = 'output window, operand 0']
    #allocation9 [shape = 'u8[4096]{0}', space=vmem, size = 0x1000, scoped, tag = 'output window, operand 1']
    #allocation10 [shape = 's32[2]{0}', space=sflag, size = 0x8, scoped, tag = 'scoped memory for tpu_custom_call.1']
    #allocation11 [shape = 'u8[4096]{0}', space=vmem, size = 0x1000, scoped, tag = 'output window, operand 2']
    #allocation12 [shape = 'u8[1024]{0}', space=vmem, size = 0x400, scoped, tag = 'output window, operand 3']
    #allocation13 [shape = 's32[2]{0}', space=sflag, size = 0x8, scoped, tag = 'scoped memory for tpu_custom_call.1']
    %24 = vsyncpa [#allocation7], 0
    %25 = vsyncpa [#allocation6], 0
    %s26 = scalar_lea.sflag [#allocation6], 1
    %27 = vsyncpa %s26, 0
    %28 = vsyncpa [#allocation10], 0
    %s29 = scalar_lea.sflag [#allocation10], 1
    %30 = vsyncpa %s29, 0
    %31 = vsyncpa [#allocation13], 0
    %s32 = scalar_lea.sflag [#allocation13], 1
    %33 = vsyncpa %s32, 0
    loop: start=0, step=1, limit=4
    $region2: #{tpu_custom_call.1} parent=1 // loop_pre_header
      _
    $region3: #{tpu_custom_call.1} parent=1 // loop_header
      %s35 = sphi 0, %s39
      %p36 = scmp.ge.s32.totalorder %s35, 4
      %s43 = sphi 0, %s43
      %s45 = sphi 0, %s43
      %s46 = sphi 0, %s45
      %s60 = sphi 0, %s46
      %s66 = sphi 0, %s68
      %s69 = sphi 0, %s66
      %s70 = sphi 0, %s69
      %s86 = sphi 0, %s70
      %s92 = sphi 0, %s94
      %s95 = sphi 0, %s92
      %s96 = sphi 0, %s95
      %s112 = sphi 0, %s96
      %s116 = sphi 0, %s116
      %s118 = sphi 0, %s116
      %s119 = sphi 0, %s118
      %s133 = sphi 0, %s119
      %s137 = sphi 0, %s137
      %s139 = sphi 0, %s137
      %s140 = sphi 0, %s139
      %s154 = sphi 0, %s140
      %s158 = sphi 0, %s158
      %s160 = sphi 0, %s158
      %s161 = sphi 0, %s160
      %s175 = sphi 0, %s161
      %s179 = sphi 0, %s179
      %s181 = sphi 0, %s179
      %s182 = sphi 0, %s181
      %s196 = sphi 0, %s182
      %s200 = sphi 0, %s200
      %s202 = sphi 0, %s200
      %s203 = sphi 0, %s202
      %s217 = sphi 0, %s203
      %s221 = sphi 0, %s221
      %s223 = sphi 0, %s221
      %s224 = sphi 0, %s223
      %s238 = sphi 0, %s224
      %s242 = sphi 0, %s242
      %s244 = sphi 0, %s242
      %s245 = sphi 0, %s244
      %s259 = sphi 0, %s245
      %s263 = sphi 0, %s263
      %s265 = sphi 0, %s263
      %s266 = sphi 0, %s265
      %s280 = sphi 0, %s266
      %s284 = sphi 0, %s284
      %s286 = sphi 0, %s284
      %s287 = sphi 0, %s286
      %s301 = sphi 0, %s287
      %s305 = sphi 0, %s305
      %s307 = sphi 0, %s305
      %s308 = sphi 0, %s307
      %s322 = sphi 0, %s308
      %s326 = sphi 0, %s326
      %s328 = sphi 0, %s326
      %s329 = sphi 0, %s328
      %s343 = sphi 0, %s329
      %s347 = sphi 0, %s347
      %s349 = sphi 0, %s347
      %s350 = sphi 0, %s349
      %s364 = sphi 0, %s350
      %s370 = sphi 0, %s372
      %s373 = sphi 0, %s370
      %s374 = sphi 0, %s373
      %s390 = sphi 0, %s374
      %s396 = sphi 0, %s398
      %s399 = sphi 0, %s396
      %s400 = sphi 0, %s399
      %s416 = sphi 0, %s400
      %s422 = sphi 0, %s424
      %s425 = sphi 0, %s422
      %s426 = sphi 0, %s425
      %s442 = sphi 0, %s426
      %s448 = sphi 0, %s450
      %s451 = sphi 0, %s448
      %s452 = sphi 0, %s451
      %s468 = sphi 0, %s452
    $region4: #{tpu_custom_call.1} parent=1 // loop_header_branch
      %38 = sbr.rel (%p36) target = $region8
    $region5: #{tpu_custom_call.1} parent=1 // loop_body
      %s40 = ssub.s32 %s35, 1
      %s41 = ssub.s32 %s35, 2
      %s42 = sadd.s32 %s35, 1
      %s44 = sadd.s32 %s43, 1
      %p47 = scmp.eq.s32.totalorder %s35, 1
      %p48 = scmp.ne.s32.totalorder %s43, %s45
      %p49 = scmp.eq.s32.totalorder %s35, 0
      %p50 = por %p48, %p49
      %p51 = scmp.ne.s32.totalorder %s43, %s45
      %p52 = scmp.eq.s32.totalorder %s40, 1
      %p53 = por %p51, %p52
      %p54 = scmp.ne.s32.totalorder %s45, %s46
      %p55 = scmp.eq.s32.totalorder %s40, 0
      %p56 = por %p54, %p55
      %p57 = scmp.ne.s32.totalorder %s45, %s46
      %p58 = scmp.eq.s32.totalorder %s41, 1
      %p59 = por %p57, %p58
      %p61 = scmp.ne.s32.totalorder %s46, %s60
      %p62 = scmp.eq.s32.totalorder %s41, 0
      %p63 = por %p61, %p62
      %s64 = ssub.s32 %s35, %s42
      %p65 = scmp.eq.s32.totalorder %s64, 0
      %s67 = sadd.s32 %s66, 1
      %s68 = scalar_select %p65, %s66, %s67
      %p71 = pneg %p65
      %p72 = scmp.eq.s32.totalorder %s35, 1
      %p73 = por %p71, %p72
      %p74 = scmp.ne.s32.totalorder %s66, %s69
      %p75 = scmp.eq.s32.totalorder %s35, 0
      %p76 = por %p74, %p75
      %p77 = scmp.ne.s32.totalorder %s66, %s69
      %p78 = scmp.eq.s32.totalorder %s40, 1
      %p79 = por %p77, %p78
      %p80 = scmp.ne.s32.totalorder %s69, %s70
      %p81 = scmp.eq.s32.totalorder %s40, 0
      %p82 = por %p80, %p81
      %p83 = scmp.ne.s32.totalorder %s69, %s70
      %p84 = scmp.eq.s32.totalorder %s41, 1
      %p85 = por %p83, %p84
      %p87 = scmp.ne.s32.totalorder %s70, %s86
      %p88 = scmp.eq.s32.totalorder %s41, 0
      %p89 = por %p87, %p88
      %s90 = ssub.s32 %s35, %s42
      %p91 = scmp.eq.s32.totalorder %s90, 0
      %s93 = sadd.s32 %s92, 1
      %s94 = scalar_select %p91, %s92, %s93
      %p97 = pneg %p91
      %p98 = scmp.eq.s32.totalorder %s35, 1
      %p99 = por %p97, %p98
      %p100 = scmp.ne.s32.totalorder %s92, %s95
      %p101 = scmp.eq.s32.totalorder %s35, 0
      %p102 = por %p100, %p101
      %p103 = scmp.ne.s32.totalorder %s92, %s95
      %p104 = scmp.eq.s32.totalorder %s40, 1
      %p105 = por %p103, %p104
      %p106 = scmp.ne.s32.totalorder %s95, %s96
      %p107 = scmp.eq.s32.totalorder %s40, 0
      %p108 = por %p106, %p107
      %p109 = scmp.ne.s32.totalorder %s95, %s96
      %p110 = scmp.eq.s32.totalorder %s41, 1
      %p111 = por %p109, %p110
      %p113 = scmp.ne.s32.totalorder %s96, %s112
      %p114 = scmp.eq.s32.totalorder %s41, 0
      %p115 = por %p113, %p114
      %s117 = sadd.s32 %s116, 1
      %p120 = scmp.eq.s32.totalorder %s35, 1
      %p121 = scmp.ne.s32.totalorder %s116, %s118
      %p122 = scmp.eq.s32.totalorder %s35, 0
      %p123 = por %p121, %p122
      %p124 = scmp.ne.s32.totalorder %s116, %s118
      %p125 = scmp.eq.s32.totalorder %s40, 1
      %p126 = por %p124, %p125
      %p127 = scmp.ne.s32.totalorder %s118, %s119
      %p128 = scmp.eq.s32.totalorder %s40, 0
      %p129 = por %p127, %p128
      %p130 = scmp.ne.s32.totalorder %s118, %s119
      %p131 = scmp.eq.s32.totalorder %s41, 1
      %p132 = por %p130, %p131
      %p134 = scmp.ne.s32.totalorder %s119, %s133
      %p135 = scmp.eq.s32.totalorder %s41, 0
      %p136 = por %p134, %p135
      %s138 = sadd.s32 %s137, 1
      %p141 = scmp.eq.s32.totalorder %s35, 1
      %p142 = scmp.ne.s32.totalorder %s137, %s139
      %p143 = scmp.eq.s32.totalorder %s35, 0
      %p144 = por %p142, %p143
      %p145 = scmp.ne.s32.totalorder %s137, %s139
      %p146 = scmp.eq.s32.totalorder %s40, 1
      %p147 = por %p145, %p146
      %p148 = scmp.ne.s32.totalorder %s139, %s140
      %p149 = scmp.eq.s32.totalorder %s40, 0
      %p150 = por %p148, %p149
      %p151 = scmp.ne.s32.totalorder %s139, %s140
      %p152 = scmp.eq.s32.totalorder %s41, 1
      %p153 = por %p151, %p152
      %p155 = scmp.ne.s32.totalorder %s140, %s154
      %p156 = scmp.eq.s32.totalorder %s41, 0
      %p157 = por %p155, %p156
      %s159 = sadd.s32 %s158, 1
      %p162 = scmp.eq.s32.totalorder %s35, 1
      %p163 = scmp.ne.s32.totalorder %s158, %s160
      %p164 = scmp.eq.s32.totalorder %s35, 0
      %p165 = por %p163, %p164
      %p166 = scmp.ne.s32.totalorder %s158, %s160
      %p167 = scmp.eq.s32.totalorder %s40, 1
      %p168 = por %p166, %p167
      %p169 = scmp.ne.s32.totalorder %s160, %s161
      %p170 = scmp.eq.s32.totalorder %s40, 0
      %p171 = por %p169, %p170
      %p172 = scmp.ne.s32.totalorder %s160, %s161
      %p173 = scmp.eq.s32.totalorder %s41, 1
      %p174 = por %p172, %p173
      %p176 = scmp.ne.s32.totalorder %s161, %s175
      %p177 = scmp.eq.s32.totalorder %s41, 0
      %p178 = por %p176, %p177
      %s180 = sadd.s32 %s179, 1
      %p183 = scmp.eq.s32.totalorder %s35, 1
      %p184 = scmp.ne.s32.totalorder %s179, %s181
      %p185 = scmp.eq.s32.totalorder %s35, 0
      %p186 = por %p184, %p185
      %p187 = scmp.ne.s32.totalorder %s179, %s181
      %p188 = scmp.eq.s32.totalorder %s40, 1
      %p189 = por %p187, %p188
      %p190 = scmp.ne.s32.totalorder %s181, %s182
      %p191 = scmp.eq.s32.totalorder %s40, 0
      %p192 = por %p190, %p191
      %p193 = scmp.ne.s32.totalorder %s181, %s182
      %p194 = scmp.eq.s32.totalorder %s41, 1
      %p195 = por %p193, %p194
      %p197 = scmp.ne.s32.totalorder %s182, %s196
      %p198 = scmp.eq.s32.totalorder %s41, 0
      %p199 = por %p197, %p198
      %s201 = sadd.s32 %s200, 1
      %p204 = scmp.eq.s32.totalorder %s35, 1
      %p205 = scmp.ne.s32.totalorder %s200, %s202
      %p206 = scmp.eq.s32.totalorder %s35, 0
      %p207 = por %p205, %p206
      %p208 = scmp.ne.s32.totalorder %s200, %s202
      %p209 = scmp.eq.s32.totalorder %s40, 1
      %p210 = por %p208, %p209
      %p211 = scmp.ne.s32.totalorder %s202, %s203
      %p212 = scmp.eq.s32.totalorder %s40, 0
      %p213 = por %p211, %p212
      %p214 = scmp.ne.s32.totalorder %s202, %s203
      %p215 = scmp.eq.s32.totalorder %s41, 1
      %p216 = por %p214, %p215
      %p218 = scmp.ne.s32.totalorder %s203, %s217
      %p219 = scmp.eq.s32.totalorder %s41, 0
      %p220 = por %p218, %p219
      %s222 = sadd.s32 %s221, 1
      %p225 = scmp.eq.s32.totalorder %s35, 1
      %p226 = scmp.ne.s32.totalorder %s221, %s223
      %p227 = scmp.eq.s32.totalorder %s35, 0
      %p228 = por %p226, %p227
      %p229 = scmp.ne.s32.totalorder %s221, %s223
      %p230 = scmp.eq.s32.totalorder %s40, 1
      %p231 = por %p229, %p230
      %p232 = scmp.ne.s32.totalorder %s223, %s224
      %p233 = scmp.eq.s32.totalorder %s40, 0
      %p234 = por %p232, %p233
      %p235 = scmp.ne.s32.totalorder %s223, %s224
      %p236 = scmp.eq.s32.totalorder %s41, 1
      %p237 = por %p235, %p236
      %p239 = scmp.ne.s32.totalorder %s224, %s238
      %p240 = scmp.eq.s32.totalorder %s41, 0
      %p241 = por %p239, %p240
      %s243 = sadd.s32 %s242, 1
      %p246 = scmp.eq.s32.totalorder %s35, 1
      %p247 = scmp.ne.s32.totalorder %s242, %s244
      %p248 = scmp.eq.s32.totalorder %s35, 0
      %p249 = por %p247, %p248
      %p250 = scmp.ne.s32.totalorder %s242, %s244
      %p251 = scmp.eq.s32.totalorder %s40, 1
      %p252 = por %p250, %p251
      %p253 = scmp.ne.s32.totalorder %s244, %s245
      %p254 = scmp.eq.s32.totalorder %s40, 0
      %p255 = por %p253, %p254
      %p256 = scmp.ne.s32.totalorder %s244, %s245
      %p257 = scmp.eq.s32.totalorder %s41, 1
      %p258 = por %p256, %p257
      %p260 = scmp.ne.s32.totalorder %s245, %s259
      %p261 = scmp.eq.s32.totalorder %s41, 0
      %p262 = por %p260, %p261
      %s264 = sadd.s32 %s263, 1
      %p267 = scmp.eq.s32.totalorder %s35, 1
      %p268 = scmp.ne.s32.totalorder %s263, %s265
      %p269 = scmp.eq.s32.totalorder %s35, 0
      %p270 = por %p268, %p269
      %p271 = scmp.ne.s32.totalorder %s263, %s265
      %p272 = scmp.eq.s32.totalorder %s40, 1
      %p273 = por %p271, %p272
      %p274 = scmp.ne.s32.totalorder %s265, %s266
      %p275 = scmp.eq.s32.totalorder %s40, 0
      %p276 = por %p274, %p275
      %p277 = scmp.ne.s32.totalorder %s265, %s266
      %p278 = scmp.eq.s32.totalorder %s41, 1
      %p279 = por %p277, %p278
      %p281 = scmp.ne.s32.totalorder %s266, %s280
      %p282 = scmp.eq.s32.totalorder %s41, 0
      %p283 = por %p281, %p282
      %s285 = sadd.s32 %s284, 1
      %p288 = scmp.eq.s32.totalorder %s35, 1
      %p289 = scmp.ne.s32.totalorder %s284, %s286
      %p290 = scmp.eq.s32.totalorder %s35, 0
      %p291 = por %p289, %p290
      %p292 = scmp.ne.s32.totalorder %s284, %s286
      %p293 = scmp.eq.s32.totalorder %s40, 1
      %p294 = por %p292, %p293
      %p295 = scmp.ne.s32.totalorder %s286, %s287
      %p296 = scmp.eq.s32.totalorder %s40, 0
      %p297 = por %p295, %p296
      %p298 = scmp.ne.s32.totalorder %s286, %s287
      %p299 = scmp.eq.s32.totalorder %s41, 1
      %p300 = por %p298, %p299
      %p302 = scmp.ne.s32.totalorder %s287, %s301
      %p303 = scmp.eq.s32.totalorder %s41, 0
      %p304 = por %p302, %p303
      %s306 = sadd.s32 %s305, 1
      %p309 = scmp.eq.s32.totalorder %s35, 1
      %p310 = scmp.ne.s32.totalorder %s305, %s307
      %p311 = scmp.eq.s32.totalorder %s35, 0
      %p312 = por %p310, %p311
      %p313 = scmp.ne.s32.totalorder %s305, %s307
      %p314 = scmp.eq.s32.totalorder %s40, 1
      %p315 = por %p313, %p314
      %p316 = scmp.ne.s32.totalorder %s307, %s308
      %p317 = scmp.eq.s32.totalorder %s40, 0
      %p318 = por %p316, %p317
      %p319 = scmp.ne.s32.totalorder %s307, %s308
      %p320 = scmp.eq.s32.totalorder %s41, 1
      %p321 = por %p319, %p320
      %p323 = scmp.ne.s32.totalorder %s308, %s322
      %p324 = scmp.eq.s32.totalorder %s41, 0
      %p325 = por %p323, %p324
      %s327 = sadd.s32 %s326, 1
      %p330 = scmp.eq.s32.totalorder %s35, 1
      %p331 = scmp.ne.s32.totalorder %s326, %s328
      %p332 = scmp.eq.s32.totalorder %s35, 0
      %p333 = por %p331, %p332
      %p334 = scmp.ne.s32.totalorder %s326, %s328
      %p335 = scmp.eq.s32.totalorder %s40, 1
      %p336 = por %p334, %p335
      %p337 = scmp.ne.s32.totalorder %s328, %s329
      %p338 = scmp.eq.s32.totalorder %s40, 0
      %p339 = por %p337, %p338
      %p340 = scmp.ne.s32.totalorder %s328, %s329
      %p341 = scmp.eq.s32.totalorder %s41, 1
      %p342 = por %p340, %p341
      %p344 = scmp.ne.s32.totalorder %s329, %s343
      %p345 = scmp.eq.s32.totalorder %s41, 0
      %p346 = por %p344, %p345
      %s348 = sadd.s32 %s347, 1
      %p351 = scmp.eq.s32.totalorder %s35, 1
      %p352 = scmp.ne.s32.totalorder %s347, %s349
      %p353 = scmp.eq.s32.totalorder %s35, 0
      %p354 = por %p352, %p353
      %p355 = scmp.ne.s32.totalorder %s347, %s349
      %p356 = scmp.eq.s32.totalorder %s40, 1
      %p357 = por %p355, %p356
      %p358 = scmp.ne.s32.totalorder %s349, %s350
      %p359 = scmp.eq.s32.totalorder %s40, 0
      %p360 = por %p358, %p359
      %p361 = scmp.ne.s32.totalorder %s349, %s350
      %p362 = scmp.eq.s32.totalorder %s41, 1
      %p363 = por %p361, %p362
      %p365 = scmp.ne.s32.totalorder %s350, %s364
      %p366 = scmp.eq.s32.totalorder %s41, 0
      %p367 = por %p365, %p366
      %s368 = ssub.s32 %s35, %s42
      %p369 = scmp.eq.s32.totalorder %s368, 0
      %s371 = sadd.s32 %s370, 1
      %s372 = scalar_select %p369, %s370, %s371
      %p375 = pneg %p369
      %p376 = scmp.eq.s32.totalorder %s35, 1
      %p377 = por %p375, %p376
      %p378 = scmp.ne.s32.totalorder %s370, %s373
      %p379 = scmp.eq.s32.totalorder %s35, 0
      %p380 = por %p378, %p379
      %p381 = scmp.ne.s32.totalorder %s370, %s373
      %p382 = scmp.eq.s32.totalorder %s40, 1
      %p383 = por %p381, %p382
      %p384 = scmp.ne.s32.totalorder %s373, %s374
      %p385 = scmp.eq.s32.totalorder %s40, 0
      %p386 = por %p384, %p385
      %p387 = scmp.ne.s32.totalorder %s373, %s374
      %p388 = scmp.eq.s32.totalorder %s41, 1
      %p389 = por %p387, %p388
      %p391 = scmp.ne.s32.totalorder %s374, %s390
      %p392 = scmp.eq.s32.totalorder %s41, 0
      %p393 = por %p391, %p392
      %s394 = ssub.s32 %s35, %s42
      %p395 = scmp.eq.s32.totalorder %s394, 0
      %s397 = sadd.s32 %s396, 1
      %s398 = scalar_select %p395, %s396, %s397
      %p401 = pneg %p395
      %p402 = scmp.eq.s32.totalorder %s35, 1
      %p403 = por %p401, %p402
      %p404 = scmp.ne.s32.totalorder %s396, %s399
      %p405 = scmp.eq.s32.totalorder %s35, 0
      %p406 = por %p404, %p405
      %p407 = scmp.ne.s32.totalorder %s396, %s399
      %p408 = scmp.eq.s32.totalorder %s40, 1
      %p409 = por %p407, %p408
      %p410 = scmp.ne.s32.totalorder %s399, %s400
      %p411 = scmp.eq.s32.totalorder %s40, 0
      %p412 = por %p410, %p411
      %p413 = scmp.ne.s32.totalorder %s399, %s400
      %p414 = scmp.eq.s32.totalorder %s41, 1
      %p415 = por %p413, %p414
      %p417 = scmp.ne.s32.totalorder %s400, %s416
      %p418 = scmp.eq.s32.totalorder %s41, 0
      %p419 = por %p417, %p418
      %s420 = ssub.s32 %s35, %s42
      %p421 = scmp.eq.s32.totalorder %s420, 0
      %s423 = sadd.s32 %s422, 1
      %s424 = scalar_select %p421, %s422, %s423
      %p427 = pneg %p421
      %p428 = scmp.eq.s32.totalorder %s35, 1
      %p429 = por %p427, %p428
      %p430 = scmp.ne.s32.totalorder %s422, %s425
      %p431 = scmp.eq.s32.totalorder %s35, 0
      %p432 = por %p430, %p431
      %p433 = scmp.ne.s32.totalorder %s422, %s425
      %p434 = scmp.eq.s32.totalorder %s40, 1
      %p435 = por %p433, %p434
      %p436 = scmp.ne.s32.totalorder %s425, %s426
      %p437 = scmp.eq.s32.totalorder %s40, 0
      %p438 = por %p436, %p437
      %p439 = scmp.ne.s32.totalorder %s425, %s426
      %p440 = scmp.eq.s32.totalorder %s41, 1
      %p441 = por %p439, %p440
      %p443 = scmp.ne.s32.totalorder %s426, %s442
      %p444 = scmp.eq.s32.totalorder %s41, 0
      %p445 = por %p443, %p444
      %s446 = ssub.s32 %s35, %s42
      %p447 = scmp.eq.s32.totalorder %s446, 0
      %s449 = sadd.s32 %s448, 1
      %s450 = scalar_select %p447, %s448, %s449
      %p453 = pneg %p447
      %p454 = scmp.eq.s32.totalorder %s35, 1
      %p455 = por %p453, %p454
      %p456 = scmp.ne.s32.totalorder %s448, %s451
      %p457 = scmp.eq.s32.totalorder %s35, 0
      %p458 = por %p456, %p457
      %p459 = scmp.ne.s32.totalorder %s448, %s451
      %p460 = scmp.eq.s32.totalorder %s40, 1
      %p461 = por %p459, %p460
      %p462 = scmp.ne.s32.totalorder %s451, %s452
      %p463 = scmp.eq.s32.totalorder %s40, 0
      %p464 = por %p462, %p463
      %p465 = scmp.ne.s32.totalorder %s451, %s452
      %p466 = scmp.eq.s32.totalorder %s41, 1
      %p467 = por %p465, %p466
      %p469 = scmp.ne.s32.totalorder %s452, %s468
      %p470 = scmp.eq.s32.totalorder %s41, 0
      %p471 = por %p469, %p470
      %p472 = scmp.le.s32.totalorder 1, %s35
      %p473 = scmp.lt.s32.totalorder %s35, 3
      %p474 = pnand %p472, %p473
      %p475 = pneg %p474
      // Predicated region
      $region9: #{tpu_custom_call.1} parent=5 // pred_check
        _
      $region10: #{tpu_custom_call.1} parent=5 // pred_check_branch
        %477 = sbr.rel (%p474) target = $region12
      $region11: #{tpu_custom_call.1} parent=5 // pred_region
        %s478 = ssub.s32 %s35, 1
        // Predicated region
        $region13: #{tpu_custom_call.1} parent=11 // pred_check
          %p479 = pneg %p56
        $region14: #{tpu_custom_call.1} parent=11 // pred_check_branch
          %481 = sbr.rel (%p479) target = $region16
        $region15: #{tpu_custom_call.1} parent=11 // pred_region
          %483 = vsyncadd [#allocation7], 0
          %s485 = sshll.u32 %s0, 4
          %s486 = int_to_ptr.vmem [resolvable:$true] %s485
          %488 = dma.vmem_to_smem %s486, 16, [#allocation5], [#allocation7]
        $region16: #{tpu_custom_call.1} parent=11 // pred_fallthru
          _
        // Predicated region
        $region17: #{tpu_custom_call.1} parent=11 // pred_check
          %p489 = pneg %p129
        $region18: #{tpu_custom_call.1} parent=11 // pred_check_branch
          %491 = sbr.rel (%p489) target = $region20
        $region19: #{tpu_custom_call.1} parent=11 // pred_region
          _
        $region20: #{tpu_custom_call.1} parent=11 // pred_fallthru
          _
        // Predicated region
        $region21: #{tpu_custom_call.1} parent=11 // pred_check
          %p492 = pneg %p150
        $region22: #{tpu_custom_call.1} parent=11 // pred_check_branch
          %494 = sbr.rel (%p492) target = $region24
        $region23: #{tpu_custom_call.1} parent=11 // pred_region
          _
        $region24: #{tpu_custom_call.1} parent=11 // pred_fallthru
          _
        // Predicated region
        $region25: #{tpu_custom_call.1} parent=11 // pred_check
          %p495 = pneg %p171
        $region26: #{tpu_custom_call.1} parent=11 // pred_check_branch
          %497 = sbr.rel (%p495) target = $region28
        $region27: #{tpu_custom_call.1} parent=11 // pred_region
          _
        $region28: #{tpu_custom_call.1} parent=11 // pred_fallthru
          _
        // Predicated region
        $region29: #{tpu_custom_call.1} parent=11 // pred_check
          %p498 = pneg %p192
        $region30: #{tpu_custom_call.1} parent=11 // pred_check_branch
          %500 = sbr.rel (%p498) target = $region32
        $region31: #{tpu_custom_call.1} parent=11 // pred_region
          _
        $region32: #{tpu_custom_call.1} parent=11 // pred_fallthru
          _
        // Predicated region
        $region33: #{tpu_custom_call.1} parent=11 // pred_check
          %p501 = pneg %p213
        $region34: #{tpu_custom_call.1} parent=11 // pred_check_branch
          %503 = sbr.rel (%p501) target = $region36
        $region35: #{tpu_custom_call.1} parent=11 // pred_region
          _
        $region36: #{tpu_custom_call.1} parent=11 // pred_fallthru
          _
        // Predicated region
        $region37: #{tpu_custom_call.1} parent=11 // pred_check
          %p504 = pneg %p234
        $region38: #{tpu_custom_call.1} parent=11 // pred_check_branch
          %506 = sbr.rel (%p504) target = $region40
        $region39: #{tpu_custom_call.1} parent=11 // pred_region
          _
        $region40: #{tpu_custom_call.1} parent=11 // pred_fallthru
          _
        // Predicated region
        $region41: #{tpu_custom_call.1} parent=11 // pred_check
          %p507 = pneg %p255
        $region42: #{tpu_custom_call.1} parent=11 // pred_check_branch
          %509 = sbr.rel (%p507) target = $region44
        $region43: #{tpu_custom_call.1} parent=11 // pred_region
          _
        $region44: #{tpu_custom_call.1} parent=11 // pred_fallthru
          _
        // Predicated region
        $region45: #{tpu_custom_call.1} parent=11 // pred_check
          %p510 = pneg %p276
        $region46: #{tpu_custom_call.1} parent=11 // pred_check_branch
          %512 = sbr.rel (%p510) target = $region48
        $region47: #{tpu_custom_call.1} parent=11 // pred_region
          _
        $region48: #{tpu_custom_call.1} parent=11 // pred_fallthru
          _
        // Predicated region
        $region49: #{tpu_custom_call.1} parent=11 // pred_check
          %p513 = pneg %p297
        $region50: #{tpu_custom_call.1} parent=11 // pred_check_branch
          %515 = sbr.rel (%p513) target = $region52
        $region51: #{tpu_custom_call.1} parent=11 // pred_region
          _
        $region52: #{tpu_custom_call.1} parent=11 // pred_fallthru
          _
        // Predicated region
        $region53: #{tpu_custom_call.1} parent=11 // pred_check
          %p516 = pneg %p318
        $region54: #{tpu_custom_call.1} parent=11 // pred_check_branch
          %518 = sbr.rel (%p516) target = $region56
        $region55: #{tpu_custom_call.1} parent=11 // pred_region
          _
        $region56: #{tpu_custom_call.1} parent=11 // pred_fallthru
          _
        // Predicated region
        $region57: #{tpu_custom_call.1} parent=11 // pred_check
          %p519 = pneg %p339
        $region58: #{tpu_custom_call.1} parent=11 // pred_check_branch
          %521 = sbr.rel (%p519) target = $region60
        $region59: #{tpu_custom_call.1} parent=11 // pred_region
          _
        $region60: #{tpu_custom_call.1} parent=11 // pred_fallthru
          _
        // Predicated region
        $region61: #{tpu_custom_call.1} parent=11 // pred_check
          %p522 = pneg %p360
        $region62: #{tpu_custom_call.1} parent=11 // pred_check_branch
          %524 = sbr.rel (%p522) target = $region64
        $region63: #{tpu_custom_call.1} parent=11 // pred_region
          _
        $region64: #{tpu_custom_call.1} parent=11 // pred_fallthru
          _
      $region12: #{tpu_custom_call.1} parent=5 // pred_fallthru
        _
      %p525 = scmp.lt.s32.totalorder %s35, 2
      // Predicated region
      $region65: #{tpu_custom_call.1} parent=5 // pred_check
        %p526 = pneg %p525
      $region66: #{tpu_custom_call.1} parent=5 // pred_check_branch
        %528 = sbr.rel (%p526) target = $region68
      $region67: #{tpu_custom_call.1} parent=5 // pred_region
        // Predicated region
        $region69: #{tpu_custom_call.1} parent=67 // pred_check
          %p529 = pneg %p76
        $region70: #{tpu_custom_call.1} parent=67 // pred_check_branch
          %531 = sbr.rel (%p529) target = $region72
        $region71: #{tpu_custom_call.1} parent=67 // pred_region
          %p532 = scmp.lt.s32.totalorder %s35, 1
          %s533 = scalar_select %p532, %s35, 1
          %s534 = smul.addr %s533, 8
          %s535 = scalar_lea.vmem %s1, %s534
        $region72: #{tpu_custom_call.1} parent=67 // pred_fallthru
          _
        // Predicated region
        $region73: #{tpu_custom_call.1} parent=67 // pred_check
          %p536 = pneg %p102
        $region74: #{tpu_custom_call.1} parent=67 // pred_check_branch
          %538 = sbr.rel (%p536) target = $region76
        $region75: #{tpu_custom_call.1} parent=67 // pred_region
          %p539 = scmp.lt.s32.totalorder %s35, 1
          %s540 = scalar_select %p539, %s35, 1
          %s541 = smul.addr %s540, 4
          %s542 = scalar_lea.vmem %s2, %s541
        $region76: #{tpu_custom_call.1} parent=67 // pred_fallthru
          _
      $region68: #{tpu_custom_call.1} parent=5 // pred_fallthru
        _
      %p543 = scmp.le.s32.totalorder 1, %s35
      %p544 = scmp.lt.s32.totalorder %s35, 3
      %p545 = pnand %p543, %p544
      %p546 = pneg %p545
      // Predicated region
      $region77: #{tpu_custom_call.1} parent=5 // pred_check
        _
      $region78: #{tpu_custom_call.1} parent=5 // pred_check_branch
        %548 = sbr.rel (%p545) target = $region80
      $region79: #{tpu_custom_call.1} parent=5 // pred_region
        %s549 = ssub.s32 %s35, 1
        // Predicated region
        $region81: #{tpu_custom_call.1} parent=79 // pred_check
          %p550 = pneg %p56
        $region82: #{tpu_custom_call.1} parent=79 // pred_check_branch
          %552 = sbr.rel (%p550) target = $region84
        $region83: #{tpu_custom_call.1} parent=79 // pred_region
          %554 = dma.done [#allocation7], 16
        $region84: #{tpu_custom_call.1} parent=79 // pred_fallthru
          _
        %555 = sfence
        %p556 = pneg %p56
        %p557 = pneg %p53
        %p558 = scmp.lt.s32.totalorder %s40, 1
        %s559 = scalar_select %p558, %s40, 1
        %s560 = smul.addr %s559, 8
        %s561 = scalar_lea.vmem %s1, %s560
        %p562 = pneg %p82
        %p563 = pneg %p79
        %p564 = scmp.lt.s32.totalorder %s40, 1
        %s565 = scalar_select %p564, %s40, 1
        %s566 = smul.addr %s565, 4
        %s567 = scalar_lea.vmem %s2, %s566
        %p568 = pneg %p108
        %p569 = pneg %p105
        %p570 = pneg %p129
        %p571 = pneg %p126
        %p572 = pneg %p150
        %p573 = pneg %p147
        %p574 = pneg %p171
        %p575 = pneg %p168
        %p576 = pneg %p192
        %p577 = pneg %p189
        %p578 = pneg %p213
        %p579 = pneg %p210
        %p580 = pneg %p234
        %p581 = pneg %p231
        %p582 = pneg %p255
        %p583 = pneg %p252
        %p584 = pneg %p276
        %p585 = pneg %p273
        %p586 = pneg %p297
        %p587 = pneg %p294
        %p588 = pneg %p318
        %p589 = pneg %p315
        %p590 = pneg %p339
        %p591 = pneg %p336
        %p592 = pneg %p360
        %p593 = pneg %p357
        %p594 = pneg %p386
        %p595 = pneg %p383
        %s596 = sand.u32 %s373, 1
        %s597 = scalar_lea.sflag [#allocation6], %s596
        %s598 = sand.u32 %s373, 1
        %s599 = smul.addr %s598, 4
        %s600 = scalar_lea.vmem [#allocation8], %s599
        %p601 = pneg %p412
        %p602 = pneg %p409
        %s603 = sand.u32 %s40, 1
        %s604 = scalar_lea.sflag [#allocation10], %s603
        %s605 = sand.u32 %s399, 1
        %s606 = smul.addr %s605, 4
        %s607 = scalar_lea.vmem [#allocation9], %s606
        %p608 = pneg %p438
        %p609 = pneg %p435
        %s610 = sand.u32 %s40, 1
        %s611 = scalar_lea.sflag [#allocation10], %s610
        %s612 = sand.u32 %s425, 1
        %s613 = smul.addr %s612, 4
        %s614 = scalar_lea.vmem [#allocation11], %s613
        %p615 = pneg %p464
        %p616 = pneg %p461
        %s617 = sand.u32 %s451, 1
        %s618 = scalar_lea.sflag [#allocation13], %s617
        %s619 = sand.u32 %s451, 1
        %s620 = scalar_lea.vmem [#allocation12], %s619
        %p621 = scmp.lt.s32.totalorder %s40, 1
        %s622 = scalar_select %p621, %s40, 1
        %s623 = smul.addr %s622, 8
        %s624 = scalar_lea.vmem %s1, %s623
        %p625 = scmp.lt.s32.totalorder %s40, 1
        %s626 = scalar_select %p625, %s40, 1
        %s627 = smul.addr %s626, 4
        %s628 = scalar_lea.vmem %s2, %s627
        %s630 = sld [smem:[#allocation5 + %s40]]
        %v631 = vlaneseq
        %v632 = vand.u32 %v631, 127
        %v633 = vstv %s630
        %vm634 = vcmp.lt.s32.totalorder %v632, %v633
        %v635 = vsel %vm634, 1, 0
        %v636 = vcvt.s32.f32 %v635
        %v637 = vld [vmem:[%s3] sm:$0xf]
        %v638 = vld [vmem:[%s3 + $0x4] sm:$0xf]
        %v639 = vld [vmem:[%s3 + $0x8] sm:$0xf]
        %v640 = vld [vmem:[%s3 + $0xc] sm:$0xf]
        %v641 = vld [vmem:[%s624] sm:$0xff]
        %v642 = vpack.c.bf16 %v641, %v641
        %v643 = vld [vmem:[%s4] sm:$0xff]
        %v644 = vld [vmem:[%s4 + $0x8] sm:$0xff]
        %v645 = vld [vmem:[%s4 + $0x10] sm:$0xff]
        %v646 = vld [vmem:[%s4 + $0x18] sm:$0xff]
        %648 = vset.pattern.permute.xlu0 0
        %649 = vperm.xlu0 %648, %v643
        %v650 = vpop.permute.xlu0 %649
        %653 = vset.pattern.permute.xlu0 0
        %654 = vperm.xlu0 %653, %v644
        %v655 = vpop.permute.xlu0 %654
        %658 = vset.pattern.permute.xlu0 0
        %659 = vperm.xlu0 %658, %v645
        %v660 = vpop.permute.xlu0 %659
        %663 = vset.pattern.permute.xlu0 0
        %664 = vperm.xlu0 %663, %v646
        %v665 = vpop.permute.xlu0 %664
        %v671 = vunpack.c.l.b16 %v637
        %v672 = vunpack.c.l.b16 %v638
        %v673 = vunpack.c.l.b16 %v639
        %v674 = vunpack.c.l.b16 %v640
        %v675 = vpack.c.b16 %v672, %v671
        %v676 = vpack.c.b16 %v674, %v673
        %vm677 = vcmask 64512
        %v679 = vsel %vm677, %v675, 0
        %v682 = vsel %vm677, %v676, 0
        %vm684 = vcmask 1043456
        %v686 = vsel %vm684, %v642, 0
        %688 = vmatpush.bf16.msra.mxu0 0
        %689 = vmatpush.bf16.msra.mxu0 0
        %690 = vmatpush.bf16.msra.mxu0 0
        %691 = vmatpush.bf16.msra.mxu0 0
        %692 = vmatpush.bf16.msra.mxu0 0
        %693 = vmatpush.bf16.msra.mxu0 0
        %694 = vmatpush.bf16.msra.mxu0 0
        %695 = vmatpush.bf16.msra.mxu0 %v686
        %696 = vmatmul.bf16.gmra.mxu0 %v679
        %v697 = vpop.f32.mrf.mxu0
        %v698 = vadd.f32 %v650, %v697
        %v699 = vpop.f32.mrf.mxu0
        %v700 = vadd.f32 %v655, %v699
        %701 = vmatmul.bf16.gmra.mxu0 %v682
        %v702 = vpop.f32.mrf.mxu0
        %v703 = vadd.f32 %v660, %v702
        %v704 = vpop.f32.mrf.mxu0
        %v705 = vadd.f32 %v665, %v704
        %706 = vdwg.mxu0
        %v707 = vmul.f32 %v698, %v636
        %v708 = vmul.f32 %v700, %v636
        %v709 = vmul.f32 %v703, %v636
        %v710 = vmul.f32 %v705, %v636
        %vm711 = vcmask 130052
        %vm712 = vmor %vm711, %vm684
        %713 = vst.msk [vmem:[#allocation2] sm:$0xff] %vm712, 0
        %714 = vst.msk [vmem:[#allocation2 + $0x8] sm:$0xff] %vm712, 0
        %715 = vst.msk [vmem:[#allocation2 + $0x10] sm:$0xff] %vm712, 0
        %716 = vst.msk [vmem:[#allocation2 + $0x18] sm:$0xff] %vm712, 0
        %717 = vst [vmem:[#allocation4] sm:$0xff] 0.0
        %718 = vst [vmem:[#allocation4 + $0x8] sm:$0xff] 0.0
        %719 = vst [vmem:[#allocation4 + $0x10] sm:$0xff] 0.0
        %720 = vst [vmem:[#allocation4 + $0x18] sm:$0xff] 0.0
        %v721 = vpack.c.bf16 %v707, %v707
        %v722 = vpack.c.bf16 %v708, %v708
        %v723 = vpack.c.bf16 %v709, %v709
        %v724 = vpack.c.bf16 %v710, %v710
        %729 = vrot.lane.b32.xlu0 %v721, 8
        %v730 = vpop.permute.xlu0 %729
        %731 = vrot.lane.b32.xlu0 %v722, 8
        %v732 = vpop.permute.xlu0 %731
        %733 = vrot.lane.b32.xlu0 %v723, 8
        %v734 = vpop.permute.xlu0 %733
        %735 = vrot.lane.b32.xlu0 %v724, 8
        %v736 = vpop.permute.xlu0 %735
        %v737 = vrot.slane %v730, 4
        %v738 = vrot.slane %v732, 4
        %v739 = vrot.slane %v734, 4
        %v740 = vrot.slane %v736, 4
        %vm741 = vcmask 64512
        %v742 = vsel %vm741, %v737, %v730
        %v743 = vsel %vm741, %v738, %v732
        %v744 = vsel %vm741, %v739, %v734
        %v745 = vsel %vm741, %v740, %v736
        %vm750 = vcmask 1043520
        %vm751 = vcmask 64516
        %vm752 = vmor %vm751, %vm750
        %753 = vst.msk [vmem:[#allocation2] sm:$0xff] %vm752, %v742
        %754 = vst.msk [vmem:[#allocation2 + $0x8] sm:$0xff] %vm752, %v743
        %755 = vst.msk [vmem:[#allocation2 + $0x10] sm:$0xff] %vm752, %v744
        %756 = vst.msk [vmem:[#allocation2 + $0x18] sm:$0xff] %vm752, %v745
        %v757 = vld [vmem:[#allocation2] sm:$0xff]
        %v758 = vld [vmem:[#allocation2 + $0x8] sm:$0xff]
        %v759 = vld [vmem:[#allocation2 + $0x10] sm:$0xff]
        %v760 = vld [vmem:[#allocation2 + $0x18] sm:$0xff]
        %765 = vrot.lane.b32.xlu0 %v757, 122
        %v766 = vpop.permute.xlu0 %765
        %767 = vrot.lane.b32.xlu0 %v758, 122
        %v768 = vpop.permute.xlu0 %767
        %769 = vrot.lane.b32.xlu0 %v759, 122
        %v770 = vpop.permute.xlu0 %769
        %771 = vrot.lane.b32.xlu0 %v760, 122
        %v772 = vpop.permute.xlu0 %771
        %v773 = vrot.slane %v766, 4
        %v774 = vrot.slane %v768, 4
        %v775 = vrot.slane %v770, 4
        %v776 = vrot.slane %v772, 4
        %vm777 = vcmask 998400
        %v778 = vsel %vm777, %v766, %v773
        %v779 = vsel %vm777, %v768, %v774
        %v780 = vsel %vm777, %v770, %v775
        %v781 = vsel %vm777, %v772, %v776
        %786 = vst [vmem:[#allocation3] sm:$0xf] %v778
        %787 = vst [vmem:[#allocation3 + $0x4] sm:$0xf] %v779
        %788 = vst [vmem:[#allocation3 + $0x8] sm:$0xf] %v780
        %789 = vst [vmem:[#allocation3 + $0xc] sm:$0xf] %v781
        %v790 = vld [vmem:[#allocation2] sm:$0xff]
        %v791 = vld [vmem:[#allocation2 + $0x8] sm:$0xff]
        %v792 = vld [vmem:[#allocation2 + $0x10] sm:$0xff]
        %v793 = vld [vmem:[#allocation2 + $0x18] sm:$0xff]
        %798 = vrot.lane.b32.xlu0 %v790, 121
        %v799 = vpop.permute.xlu0 %798
        %800 = vrot.lane.b32.xlu0 %v791, 121
        %v801 = vpop.permute.xlu0 %800
        %802 = vrot.lane.b32.xlu0 %v792, 121
        %v803 = vpop.permute.xlu0 %802
        %804 = vrot.lane.b32.xlu0 %v793, 121
        %v805 = vpop.permute.xlu0 %804
        %v806 = vrot.slane %v799, 4
        %v807 = vrot.slane %v801, 4
        %v808 = vrot.slane %v803, 4
        %v809 = vrot.slane %v805, 4
        %vm810 = vcmask 990208
        %v811 = vsel %vm810, %v799, %v806
        %v812 = vsel %vm810, %v801, %v807
        %v813 = vsel %vm810, %v803, %v808
        %v814 = vsel %vm810, %v805, %v809
        %819 = vst [vmem:[#allocation3 + $0x10] sm:$0xf] %v811
        %820 = vst [vmem:[#allocation3 + $0x14] sm:$0xf] %v812
        %821 = vst [vmem:[#allocation3 + $0x18] sm:$0xf] %v813
        %822 = vst [vmem:[#allocation3 + $0x1c] sm:$0xf] %v814
        %v823 = vld [vmem:[#allocation2] sm:$0xff]
        %v824 = vld [vmem:[#allocation2 + $0x8] sm:$0xff]
        %v825 = vld [vmem:[#allocation2 + $0x10] sm:$0xff]
        %v826 = vld [vmem:[#allocation2 + $0x18] sm:$0xff]
        %831 = vrot.lane.b32.xlu0 %v823, 120
        %v832 = vpop.permute.xlu0 %831
        %833 = vrot.lane.b32.xlu0 %v824, 120
        %v834 = vpop.permute.xlu0 %833
        %835 = vrot.lane.b32.xlu0 %v825, 120
        %v836 = vpop.permute.xlu0 %835
        %837 = vrot.lane.b32.xlu0 %v826, 120
        %v838 = vpop.permute.xlu0 %837
        %v839 = vrot.slane %v832, 4
        %v840 = vrot.slane %v834, 4
        %v841 = vrot.slane %v836, 4
        %v842 = vrot.slane %v838, 4
        %vm843 = vcmask 982016
        %v844 = vsel %vm843, %v832, %v839
        %v845 = vsel %vm843, %v834, %v840
        %v846 = vsel %vm843, %v836, %v841
        %v847 = vsel %vm843, %v838, %v842
        %852 = vst [vmem:[#allocation3 + $0x20] sm:$0xf] %v844
        %853 = vst [vmem:[#allocation3 + $0x24] sm:$0xf] %v845
        %854 = vst [vmem:[#allocation3 + $0x28] sm:$0xf] %v846
        %855 = vst [vmem:[#allocation3 + $0x2c] sm:$0xf] %v847
        %v856 = vld [vmem:[#allocation2] sm:$0xff]
        %v857 = vld [vmem:[#allocation2 + $0x8] sm:$0xff]
        %v858 = vld [vmem:[#allocation2 + $0x10] sm:$0xff]
        %v859 = vld [vmem:[#allocation2 + $0x18] sm:$0xff]
        %864 = vrot.lane.b32.xlu0 %v856, 119
        %v865 = vpop.permute.xlu0 %864
        %866 = vrot.lane.b32.xlu0 %v857, 119
        %v867 = vpop.permute.xlu0 %866
        %868 = vrot.lane.b32.xlu0 %v858, 119
        %v869 = vpop.permute.xlu0 %868
        %870 = vrot.lane.b32.xlu0 %v859, 119
        %v871 = vpop.permute.xlu0 %870
        %v872 = vrot.slane %v865, 4
        %v873 = vrot.slane %v867, 4
        %v874 = vrot.slane %v869, 4
        %v875 = vrot.slane %v871, 4
        %vm876 = vcmask 973824
        %v877 = vsel %vm876, %v865, %v872
        %v878 = vsel %vm876, %v867, %v873
        %v879 = vsel %vm876, %v869, %v874
        %v880 = vsel %vm876, %v871, %v875
        %885 = vst [vmem:[#allocation3 + $0x30] sm:$0xf] %v877
        %886 = vst [vmem:[#allocation3 + $0x34] sm:$0xf] %v878
        %887 = vst [vmem:[#allocation3 + $0x38] sm:$0xf] %v879
        %888 = vst [vmem:[#allocation3 + $0x3c] sm:$0xf] %v880
        %v889 = vld [vmem:[#allocation2] sm:$0xff]
        %v890 = vld [vmem:[#allocation2 + $0x8] sm:$0xff]
        %v891 = vld [vmem:[#allocation2 + $0x10] sm:$0xff]
        %v892 = vld [vmem:[#allocation2 + $0x18] sm:$0xff]
        %897 = vrot.lane.b32.xlu0 %v889, 118
        %v898 = vpop.permute.xlu0 %897
        %899 = vrot.lane.b32.xlu0 %v890, 118
        %v900 = vpop.permute.xlu0 %899
        %901 = vrot.lane.b32.xlu0 %v891, 118
        %v902 = vpop.permute.xlu0 %901
        %903 = vrot.lane.b32.xlu0 %v892, 118
        %v904 = vpop.permute.xlu0 %903
        %v905 = vrot.slane %v898, 4
        %v906 = vrot.slane %v900, 4
        %v907 = vrot.slane %v902, 4
        %v908 = vrot.slane %v904, 4
        %vm909 = vcmask 965632
        %v910 = vsel %vm909, %v898, %v905
        %v911 = vsel %vm909, %v900, %v906
        %v912 = vsel %vm909, %v902, %v907
        %v913 = vsel %vm909, %v904, %v908
        %918 = vst [vmem:[#allocation3 + $0x40] sm:$0xf] %v910
        %919 = vst [vmem:[#allocation3 + $0x44] sm:$0xf] %v911
        %920 = vst [vmem:[#allocation3 + $0x48] sm:$0xf] %v912
        %921 = vst [vmem:[#allocation3 + $0x4c] sm:$0xf] %v913
        %v922 = vld [vmem:[%s5] sm:$0xff]
        %v923 = vld [vmem:[%s5 + $0x8] sm:$0xff]
        %v924 = vld [vmem:[%s5 + $0x10] sm:$0xff]
        %v925 = vld [vmem:[%s5 + $0x18] sm:$0xff]
        %v926 = vld [vmem:[%s5 + $0x20] sm:$0xff]
        %v927 = vld [vmem:[%s5 + $0x28] sm:$0xff]
        %v928 = vld [vmem:[%s5 + $0x30] sm:$0xff]
        %v929 = vld [vmem:[%s5 + $0x38] sm:$0xff]
        %v930 = vld [vmem:[#allocation3] sm:$0xf]
        %v931 = vld [vmem:[#allocation3 + $0x4] sm:$0xf]
        %v932 = vld [vmem:[#allocation3 + $0x8] sm:$0xf]
        %v933 = vld [vmem:[#allocation3 + $0xc] sm:$0xf]
        %v934 = vld [vmem:[#allocation3 + $0x10] sm:$0xf]
        %v935 = vld [vmem:[#allocation3 + $0x14] sm:$0xf]
        %v936 = vld [vmem:[#allocation3 + $0x18] sm:$0xf]
        %v937 = vld [vmem:[#allocation3 + $0x1c] sm:$0xf]
        %v938 = vld [vmem:[#allocation3 + $0x20] sm:$0xf]
        %v939 = vld [vmem:[#allocation3 + $0x24] sm:$0xf]
        %v940 = vld [vmem:[#allocation3 + $0x28] sm:$0xf]
        %v941 = vld [vmem:[#allocation3 + $0x2c] sm:$0xf]
        %v942 = vld [vmem:[#allocation3 + $0x30] sm:$0xf]
        %v943 = vld [vmem:[#allocation3 + $0x34] sm:$0xf]
        %v944 = vld [vmem:[#allocation3 + $0x38] sm:$0xf]
        %v945 = vld [vmem:[#allocation3 + $0x3c] sm:$0xf]
        %v946 = vld [vmem:[#allocation3 + $0x40] sm:$0xf]
        %v947 = vld [vmem:[#allocation3 + $0x44] sm:$0xf]
        %v948 = vld [vmem:[#allocation3 + $0x48] sm:$0xf]
        %v949 = vld [vmem:[#allocation3 + $0x4c] sm:$0xf]
        %v950 = vld [vmem:[%s6] sm:$0xff]
        %v951 = vld [vmem:[%s6 + $0x8] sm:$0xff]
        %v952 = vld [vmem:[%s6 + $0x10] sm:$0xff]
        %v953 = vld [vmem:[%s6 + $0x18] sm:$0xff]
        %v954 = vld [vmem:[%s6 + $0x20] sm:$0xff]
        %v955 = vld [vmem:[%s6 + $0x28] sm:$0xff]
        %v956 = vld [vmem:[%s6 + $0x30] sm:$0xff]
        %v957 = vld [vmem:[%s6 + $0x38] sm:$0xff]
        %959 = vset.pattern.permute.xlu0 0
        %960 = vperm.xlu0 %959, %v950
        %v961 = vpop.permute.xlu0 %960
        %964 = vset.pattern.permute.xlu0 0
        %965 = vperm.xlu0 %964, %v951
        %v966 = vpop.permute.xlu0 %965
        %969 = vset.pattern.permute.xlu0 0
        %970 = vperm.xlu0 %969, %v952
        %v971 = vpop.permute.xlu0 %970
        %974 = vset.pattern.permute.xlu0 0
        %975 = vperm.xlu0 %974, %v953
        %v976 = vpop.permute.xlu0 %975
        %979 = vset.pattern.permute.xlu0 0
        %980 = vperm.xlu0 %979, %v954
        %v981 = vpop.permute.xlu0 %980
        %984 = vset.pattern.permute.xlu0 0
        %985 = vperm.xlu0 %984, %v955
        %v986 = vpop.permute.xlu0 %985
        %989 = vset.pattern.permute.xlu0 0
        %990 = vperm.xlu0 %989, %v956
        %v991 = vpop.permute.xlu0 %990
        %994 = vset.pattern.permute.xlu0 0
        %995 = vperm.xlu0 %994, %v957
        %v996 = vpop.permute.xlu0 %995
        %v1006 = vunpack.c.l.b16 %v922
        %v1007 = vunpack.c.h.b16 %v922
        %v1008 = vunpack.c.l.b16 %v923
        %v1009 = vunpack.c.h.b16 %v923
        %v1010 = vunpack.c.l.b16 %v924
        %v1011 = vunpack.c.h.b16 %v924
        %v1012 = vunpack.c.l.b16 %v925
        %v1013 = vunpack.c.h.b16 %v925
        %v1014 = vunpack.c.l.b16 %v926
        %v1015 = vunpack.c.h.b16 %v926
        %v1016 = vunpack.c.l.b16 %v927
        %v1017 = vunpack.c.h.b16 %v927
        %v1018 = vunpack.c.l.b16 %v928
        %v1019 = vunpack.c.h.b16 %v928
        %v1020 = vunpack.c.l.b16 %v929
        %v1021 = vunpack.c.h.b16 %v929
        %v1022 = vpack.c.b16 %v1008, %v1006
        %v1023 = vpack.c.b16 %v1009, %v1007
        %v1024 = vpack.c.b16 %v1012, %v1010
        %v1025 = vpack.c.b16 %v1013, %v1011
        %v1026 = vpack.c.b16 %v1016, %v1014
        %v1027 = vpack.c.b16 %v1017, %v1015
        %v1028 = vpack.c.b16 %v1020, %v1018
        %v1029 = vpack.c.b16 %v1021, %v1019
        %v1054 = vunpack.c.l.b16 %v930
        %v1055 = vunpack.c.l.b16 %v931
        %v1056 = vunpack.c.l.b16 %v932
        %v1057 = vunpack.c.l.b16 %v933
        %v1058 = vunpack.c.l.b16 %v934
        %v1059 = vunpack.c.l.b16 %v935
        %v1060 = vunpack.c.l.b16 %v936
        %v1061 = vunpack.c.l.b16 %v937
        %v1062 = vunpack.c.l.b16 %v938
        %v1063 = vunpack.c.l.b16 %v939
        %v1064 = vunpack.c.l.b16 %v940
        %v1065 = vunpack.c.l.b16 %v941
        %v1066 = vunpack.c.l.b16 %v942
        %v1067 = vunpack.c.l.b16 %v943
        %v1068 = vunpack.c.l.b16 %v944
        %v1069 = vunpack.c.l.b16 %v945
        %v1070 = vunpack.c.l.b16 %v946
        %v1071 = vunpack.c.l.b16 %v947
        %v1072 = vunpack.c.l.b16 %v948
        %v1073 = vunpack.c.l.b16 %v949
        %v1074 = vpack.c.b16 %v1055, %v1054
        %v1075 = vpack.c.b16 %v1057, %v1056
        %v1076 = vpack.c.b16 %v1059, %v1058
        %v1077 = vpack.c.b16 %v1061, %v1060
        %v1078 = vpack.c.b16 %v1063, %v1062
        %v1079 = vpack.c.b16 %v1065, %v1064
        %v1080 = vpack.c.b16 %v1067, %v1066
        %v1081 = vpack.c.b16 %v1069, %v1068
        %v1082 = vpack.c.b16 %v1071, %v1070
        %v1083 = vpack.c.b16 %v1073, %v1072
        %vm1094 = vcmask 261120
        %v1096 = vsel %vm1094, %v1023, 0
        %v1099 = vsel %vm1094, %v1025, 0
        %v1102 = vsel %vm1094, %v1027, 0
        %v1105 = vsel %vm1094, %v1029, 0
        %1107 = vmatpush.bf16.msra.mxu0 %v1081
        %1108 = vmatpush.bf16.msra.mxu0 %v1080
        %1109 = vmatpush.bf16.msra.mxu0 %v1079
        %1110 = vmatpush.bf16.msra.mxu0 %v1078
        %1111 = vmatpush.bf16.msra.mxu0 %v1077
        %1112 = vmatpush.bf16.msra.mxu0 %v1076
        %1113 = vmatpush.bf16.msra.mxu0 %v1075
        %1114 = vmatpush.bf16.msra.mxu0 %v1074
        %1115 = vmatmul.bf16.gmra.mxu0 %v1022
        %v1116 = vpop.f32.mrf.mxu0
        %v1117 = vadd.f32 %v961, %v1116
        %v1118 = vpop.f32.mrf.mxu0
        %v1119 = vadd.f32 %v966, %v1118
        %1120 = vmatmul.bf16.gmra.mxu0 %v1024
        %v1121 = vpop.f32.mrf.mxu0
        %v1122 = vadd.f32 %v971, %v1121
        %v1123 = vpop.f32.mrf.mxu0
        %v1124 = vadd.f32 %v976, %v1123
        %1125 = vmatmul.bf16.gmra.mxu0 %v1026
        %v1126 = vpop.f32.mrf.mxu0
        %v1127 = vadd.f32 %v981, %v1126
        %v1128 = vpop.f32.mrf.mxu0
        %v1129 = vadd.f32 %v986, %v1128
        %1130 = vmatmul.bf16.gmra.mxu0 %v1028
        %v1131 = vpop.f32.mrf.mxu0
        %v1132 = vadd.f32 %v991, %v1131
        %v1133 = vpop.f32.mrf.mxu0
        %v1134 = vadd.f32 %v996, %v1133
        %1135 = vdwg.mxu0
        %1136 = vmatpush.bf16.msra.mxu0 0
        %1137 = vmatpush.bf16.msra.mxu0 0
        %1138 = vmatpush.bf16.msra.mxu0 0
        %1139 = vmatpush.bf16.msra.mxu0 0
        %1140 = vmatpush.bf16.msra.mxu0 0
        %1141 = vmatpush.bf16.msra.mxu0 0
        %1142 = vmatpush.bf16.msra.mxu0 %v1083
        %1143 = vmatpush.bf16.msra.mxu0 %v1082
        %1144 = vmatmul.bf16.gmra.mxu0 %v1096
        %v1145 = vpop.f32.mrf.mxu0
        %v1146 = vadd.f32 %v1117, %v1145
        %v1147 = vpop.f32.mrf.mxu0
        %v1148 = vadd.f32 %v1119, %v1147
        %1149 = vmatmul.bf16.gmra.mxu0 %v1099
        %v1150 = vpop.f32.mrf.mxu0
        %v1151 = vadd.f32 %v1122, %v1150
        %v1152 = vpop.f32.mrf.mxu0
        %v1153 = vadd.f32 %v1124, %v1152
        %1154 = vmatmul.bf16.gmra.mxu0 %v1102
        %v1155 = vpop.f32.mrf.mxu0
        %v1156 = vadd.f32 %v1127, %v1155
        %v1157 = vpop.f32.mrf.mxu0
        %v1158 = vadd.f32 %v1129, %v1157
        %1159 = vmatmul.bf16.gmra.mxu0 %v1105
        %v1160 = vpop.f32.mrf.mxu0
        %v1161 = vadd.f32 %v1132, %v1160
        %v1162 = vpop.f32.mrf.mxu0
        %v1163 = vadd.f32 %v1134, %v1162
        %1164 = vdwg.mxu0
        %v1165 = vtanh.pop %v1146
        %v1166 = vtanh.pop %v1148
        %v1167 = vtanh.pop %v1151
        %v1168 = vtanh.pop %v1153
        %v1169 = vxor.u32 %v1156, 2147483648
        %v1170 = vxor.u32 %v1158, 2147483648
        %v1171 = vxor.u32 %v1161, 2147483648
        %v1172 = vxor.u32 %v1163, 2147483648
        %v1173 = vmul.f32 %v1169, 1.442695
        %v1174 = vpow.pop %v1173
        %v1175 = vmul.f32 %v1170, 1.442695
        %v1176 = vpow.pop %v1175
        %v1177 = vmul.f32 %v1171, 1.442695
        %v1178 = vpow.pop %v1177
        %v1179 = vmul.f32 %v1172, 1.442695
        %v1180 = vpow.pop %v1179
        %v1181 = vadd.f32 %v1174, 1.0
        %v1182 = vadd.f32 %v1176, 1.0
        %v1183 = vadd.f32 %v1178, 1.0
        %v1184 = vadd.f32 %v1180, 1.0
        %v1185 = vrcp.pop %v1181
        %v1186 = vmul.f32 %v1181, %v1185
        %v1187 = vsub.f32 1.0, %v1186
        %v1188 = vmul.f32 %v1185, %v1187
        %v1189 = vadd.f32 %v1185, %v1188
        %vm1190 = vweird.f32 %v1181
        %vm1191 = vweird.f32 %v1185
        %vm1192 = vmor %vm1190, %vm1191
        %v1193 = vsel %vm1192, %v1185, %v1189
        %v1194 = vand.u32 2147483647, %v1181
        %vm1195 = vcmp.eq.f32.partialorder %v1194, 8.507059e+37
        %v1196 = vand.u32 %v1181, 2147483648
        %v1197 = vor.u32 1.1754944e-38, %v1196
        %v1198 = vsel %vm1195, %v1197, %v1193
        %v1199 = vmul.f32 1.0, %v1198
        %v1200 = vrcp.pop %v1182
        %v1201 = vmul.f32 %v1182, %v1200
        %v1202 = vsub.f32 1.0, %v1201
        %v1203 = vmul.f32 %v1200, %v1202
        %v1204 = vadd.f32 %v1200, %v1203
        %vm1205 = vweird.f32 %v1182
        %vm1206 = vweird.f32 %v1200
        %vm1207 = vmor %vm1205, %vm1206
        %v1208 = vsel %vm1207, %v1200, %v1204
        %v1209 = vand.u32 2147483647, %v1182
        %vm1210 = vcmp.eq.f32.partialorder %v1209, 8.507059e+37
        %v1211 = vand.u32 %v1182, 2147483648
        %v1212 = vor.u32 1.1754944e-38, %v1211
        %v1213 = vsel %vm1210, %v1212, %v1208
        %v1214 = vmul.f32 1.0, %v1213
        %v1215 = vrcp.pop %v1183
        %v1216 = vmul.f32 %v1183, %v1215
        %v1217 = vsub.f32 1.0, %v1216
        %v1218 = vmul.f32 %v1215, %v1217
        %v1219 = vadd.f32 %v1215, %v1218
        %vm1220 = vweird.f32 %v1183
        %vm1221 = vweird.f32 %v1215
        %vm1222 = vmor %vm1220, %vm1221
        %v1223 = vsel %vm1222, %v1215, %v1219
        %v1224 = vand.u32 2147483647, %v1183
        %vm1225 = vcmp.eq.f32.partialorder %v1224, 8.507059e+37
        %v1226 = vand.u32 %v1183, 2147483648
        %v1227 = vor.u32 1.1754944e-38, %v1226
        %v1228 = vsel %vm1225, %v1227, %v1223
        %v1229 = vmul.f32 1.0, %v1228
        %v1230 = vrcp.pop %v1184
        %v1231 = vmul.f32 %v1184, %v1230
        %v1232 = vsub.f32 1.0, %v1231
        %v1233 = vmul.f32 %v1230, %v1232
        %v1234 = vadd.f32 %v1230, %v1233
        %vm1235 = vweird.f32 %v1184
        %vm1236 = vweird.f32 %v1230
        %vm1237 = vmor %vm1235, %vm1236
        %v1238 = vsel %vm1237, %v1230, %v1234
        %v1239 = vand.u32 2147483647, %v1184
        %vm1240 = vcmp.eq.f32.partialorder %v1239, 8.507059e+37
        %v1241 = vand.u32 %v1184, 2147483648
        %v1242 = vor.u32 1.1754944e-38, %v1241
        %v1243 = vsel %vm1240, %v1242, %v1238
        %v1244 = vmul.f32 1.0, %v1243
        %v1245 = vmul.f32 %v1165, %v1199
        %v1246 = vmul.f32 %v1166, %v1214
        %v1247 = vmul.f32 %v1167, %v1229
        %v1248 = vmul.f32 %v1168, %v1244
        %v1249 = vpack.c.bf16 %v1246, %v1245
        %v1250 = vpack.c.bf16 %v1248, %v1247
        %v1251 = vld [vmem:[%s7] sm:$0xf]
        %v1252 = vld [vmem:[%s7 + $0x4] sm:$0xf]
        %v1253 = vld [vmem:[%s7 + $0x8] sm:$0xf]
        %v1254 = vld [vmem:[%s7 + $0xc] sm:$0xf]
        %v1255 = vld [vmem:[%s7 + $0x10] sm:$0xf]
        %v1256 = vld [vmem:[%s7 + $0x14] sm:$0xf]
        %v1257 = vld [vmem:[%s7 + $0x18] sm:$0xf]
        %v1258 = vld [vmem:[%s7 + $0x1c] sm:$0xf]
        %v1259 = vld [vmem:[%s8] sm:$0xff]
        %v1260 = vld [vmem:[%s8 + $0x8] sm:$0xff]
        %v1261 = vld [vmem:[%s8 + $0x10] sm:$0xff]
        %v1262 = vld [vmem:[%s8 + $0x18] sm:$0xff]
        %v1263 = vld [vmem:[%s8 + $0x20] sm:$0xff]
        %v1264 = vld [vmem:[%s8 + $0x28] sm:$0xff]
        %v1265 = vld [vmem:[%s8 + $0x30] sm:$0xff]
        %v1266 = vld [vmem:[%s8 + $0x38] sm:$0xff]
        %1268 = vset.pattern.permute.xlu0 0
        %1269 = vperm.xlu0 %1268, %v1259
        %v1270 = vpop.permute.xlu0 %1269
        %1273 = vset.pattern.permute.xlu0 0
        %1274 = vperm.xlu0 %1273, %v1260
        %v1275 = vpop.permute.xlu0 %1274
        %1278 = vset.pattern.permute.xlu0 0
        %1279 = vperm.xlu0 %1278, %v1261
        %v1280 = vpop.permute.xlu0 %1279
        %1283 = vset.pattern.permute.xlu0 0
        %1284 = vperm.xlu0 %1283, %v1262
        %v1285 = vpop.permute.xlu0 %1284
        %1288 = vset.pattern.permute.xlu0 0
        %1289 = vperm.xlu0 %1288, %v1263
        %v1290 = vpop.permute.xlu0 %1289
        %1293 = vset.pattern.permute.xlu0 0
        %1294 = vperm.xlu0 %1293, %v1264
        %v1295 = vpop.permute.xlu0 %1294
        %1298 = vset.pattern.permute.xlu0 0
        %1299 = vperm.xlu0 %1298, %v1265
        %v1300 = vpop.permute.xlu0 %1299
        %1303 = vset.pattern.permute.xlu0 0
        %1304 = vperm.xlu0 %1303, %v1266
        %v1305 = vpop.permute.xlu0 %1304
        %v1315 = vunpack.c.l.b16 %v1251
        %v1316 = vunpack.c.l.b16 %v1252
        %v1317 = vunpack.c.l.b16 %v1253
        %v1318 = vunpack.c.l.b16 %v1254
        %v1319 = vunpack.c.l.b16 %v1255
        %v1320 = vunpack.c.l.b16 %v1256
        %v1321 = vunpack.c.l.b16 %v1257
        %v1322 = vunpack.c.l.b16 %v1258
        %v1323 = vpack.c.b16 %v1316, %v1315
        %v1324 = vpack.c.b16 %v1318, %v1317
        %v1325 = vpack.c.b16 %v1320, %v1319
        %v1326 = vpack.c.b16 %v1322, %v1321
        %v1328 = vsel %vm1094, %v1323, 0
        %v1331 = vsel %vm1094, %v1324, 0
        %v1334 = vsel %vm1094, %v1325, 0
        %v1337 = vsel %vm1094, %v1326, 0
        %1339 = vmatpush.bf16.msra.mxu0 0
        %1340 = vmatpush.bf16.msra.mxu0 0
        %1341 = vmatpush.bf16.msra.mxu0 0
        %1342 = vmatpush.bf16.msra.mxu0 0
        %1343 = vmatpush.bf16.msra.mxu0 0
        %1344 = vmatpush.bf16.msra.mxu0 0
        %1345 = vmatpush.bf16.msra.mxu0 %v1250
        %1346 = vmatpush.bf16.msra.mxu0 %v1249
        %1347 = vmatmul.bf16.gmra.mxu0 %v1328
        %v1348 = vpop.f32.mrf.mxu0
        %v1349 = vadd.f32 %v1270, %v1348
        %v1350 = vpop.f32.mrf.mxu0
        %v1351 = vadd.f32 %v1275, %v1350
        %1352 = vmatmul.bf16.gmra.mxu0 %v1331
        %v1353 = vpop.f32.mrf.mxu0
        %v1354 = vadd.f32 %v1280, %v1353
        %v1355 = vpop.f32.mrf.mxu0
        %v1356 = vadd.f32 %v1285, %v1355
        %1357 = vmatmul.bf16.gmra.mxu0 %v1334
        %v1358 = vpop.f32.mrf.mxu0
        %v1359 = vadd.f32 %v1290, %v1358
        %v1360 = vpop.f32.mrf.mxu0
        %v1361 = vadd.f32 %v1295, %v1360
        %1362 = vmatmul.bf16.gmra.mxu0 %v1337
        %v1363 = vpop.f32.mrf.mxu0
        %v1364 = vadd.f32 %v1300, %v1363
        %v1365 = vpop.f32.mrf.mxu0
        %v1366 = vadd.f32 %v1305, %v1365
        %1367 = vdwg.mxu0
        %v1368 = vadd.f32 %v707, %v1349
        %v1369 = vadd.f32 %v708, %v1351
        %v1370 = vadd.f32 %v709, %v1354
        %v1371 = vadd.f32 %v710, %v1356
        %v1372 = vmul.f32 %v1368, %v636
        %v1373 = vmul.f32 %v1369, %v636
        %v1374 = vmul.f32 %v1370, %v636
        %v1375 = vmul.f32 %v1371, %v636
        %v1376 = vld [vmem:[#allocation4] sm:$0xff]
        %v1377 = vld [vmem:[#allocation4 + $0x8] sm:$0xff]
        %v1378 = vld [vmem:[#allocation4 + $0x10] sm:$0xff]
        %v1379 = vld [vmem:[#allocation4 + $0x18] sm:$0xff]
        %v1380 = vadd.f32 %v1376, %v1359
        %v1381 = vadd.f32 %v1377, %v1361
        %v1382 = vadd.f32 %v1378, %v1364
        %v1383 = vadd.f32 %v1379, %v1366
        %1384 = vst [vmem:[#allocation4] sm:$0xff] %v1380
        %1385 = vst [vmem:[#allocation4 + $0x8] sm:$0xff] %v1381
        %1386 = vst [vmem:[#allocation4 + $0x10] sm:$0xff] %v1382
        %1387 = vst [vmem:[#allocation4 + $0x18] sm:$0xff] %v1383
        %v1388 = vpack.c.bf16 %v1372, %v1372
        %v1389 = vpack.c.bf16 %v1373, %v1373
        %v1390 = vpack.c.bf16 %v1374, %v1374
        %v1391 = vpack.c.bf16 %v1375, %v1375
        %1396 = vrot.lane.b32.xlu0 %v1388, 8
        %v1397 = vpop.permute.xlu0 %1396
        %1398 = vrot.lane.b32.xlu0 %v1389, 8
        %v1399 = vpop.permute.xlu0 %1398
        %1400 = vrot.lane.b32.xlu0 %v1390, 8
        %v1401 = vpop.permute.xlu0 %1400
        %1402 = vrot.lane.b32.xlu0 %v1391, 8
        %v1403 = vpop.permute.xlu0 %1402
        %v1404 = vrot.slane %v1397, 4
        %v1405 = vrot.slane %v1399, 4
        %v1406 = vrot.slane %v1401, 4
        %v1407 = vrot.slane %v1403, 4
        %v1408 = vsel %vm741, %v1404, %v1397
        %v1409 = vsel %vm741, %v1405, %v1399
        %v1410 = vsel %vm741, %v1406, %v1401
        %v1411 = vsel %vm741, %v1407, %v1403
        %1416 = vst.msk [vmem:[#allocation2] sm:$0xff] %vm752, %v1408
        %1417 = vst.msk [vmem:[#allocation2 + $0x8] sm:$0xff] %vm752, %v1409
        %1418 = vst.msk [vmem:[#allocation2 + $0x10] sm:$0xff] %vm752, %v1410
        %1419 = vst.msk [vmem:[#allocation2 + $0x18] sm:$0xff] %vm752, %v1411
        %v1420 = vld [vmem:[#allocation2] sm:$0xff]
        %v1421 = vld [vmem:[#allocation2 + $0x8] sm:$0xff]
        %v1422 = vld [vmem:[#allocation2 + $0x10] sm:$0xff]
        %v1423 = vld [vmem:[#allocation2 + $0x18] sm:$0xff]
        %1428 = vrot.lane.b32.xlu0 %v1420, 124
        %v1429 = vpop.permute.xlu0 %1428
        %1430 = vrot.lane.b32.xlu0 %v1421, 124
        %v1431 = vpop.permute.xlu0 %1430
        %1432 = vrot.lane.b32.xlu0 %v1422, 124
        %v1433 = vpop.permute.xlu0 %1432
        %1434 = vrot.lane.b32.xlu0 %v1423, 124
        %v1435 = vpop.permute.xlu0 %1434
        %v1436 = vrot.slane %v1429, 4
        %v1437 = vrot.slane %v1431, 4
        %v1438 = vrot.slane %v1433, 4
        %v1439 = vrot.slane %v1435, 4
        %vm1440 = vcmask 1014784
        %v1441 = vsel %vm1440, %v1429, %v1436
        %v1442 = vsel %vm1440, %v1431, %v1437
        %v1443 = vsel %vm1440, %v1433, %v1438
        %v1444 = vsel %vm1440, %v1435, %v1439
        %1449 = vst [vmem:[#allocation3] sm:$0xf] %v1441
        %1450 = vst [vmem:[#allocation3 + $0x4] sm:$0xf] %v1442
        %1451 = vst [vmem:[#allocation3 + $0x8] sm:$0xf] %v1443
        %1452 = vst [vmem:[#allocation3 + $0xc] sm:$0xf] %v1444
        %v1453 = vld [vmem:[#allocation2] sm:$0xff]
        %v1454 = vld [vmem:[#allocation2 + $0x8] sm:$0xff]
        %v1455 = vld [vmem:[#allocation2 + $0x10] sm:$0xff]
        %v1456 = vld [vmem:[#allocation2 + $0x18] sm:$0xff]
        %1461 = vrot.lane.b32.xlu0 %v1453, 122
        %v1462 = vpop.permute.xlu0 %1461
        %1463 = vrot.lane.b32.xlu0 %v1454, 122
        %v1464 = vpop.permute.xlu0 %1463
        %1465 = vrot.lane.b32.xlu0 %v1455, 122
        %v1466 = vpop.permute.xlu0 %1465
        %1467 = vrot.lane.b32.xlu0 %v1456, 122
        %v1468 = vpop.permute.xlu0 %1467
        %v1469 = vrot.slane %v1462, 4
        %v1470 = vrot.slane %v1464, 4
        %v1471 = vrot.slane %v1466, 4
        %v1472 = vrot.slane %v1468, 4
        %v1473 = vsel %vm777, %v1462, %v1469
        %v1474 = vsel %vm777, %v1464, %v1470
        %v1475 = vsel %vm777, %v1466, %v1471
        %v1476 = vsel %vm777, %v1468, %v1472
        %1481 = vst [vmem:[#allocation3 + $0x10] sm:$0xf] %v1473
        %1482 = vst [vmem:[#allocation3 + $0x14] sm:$0xf] %v1474
        %1483 = vst [vmem:[#allocation3 + $0x18] sm:$0xf] %v1475
        %1484 = vst [vmem:[#allocation3 + $0x1c] sm:$0xf] %v1476
        %v1485 = vld [vmem:[#allocation2] sm:$0xff]
        %v1486 = vld [vmem:[#allocation2 + $0x8] sm:$0xff]
        %v1487 = vld [vmem:[#allocation2 + $0x10] sm:$0xff]
        %v1488 = vld [vmem:[#allocation2 + $0x18] sm:$0xff]
        %1493 = vrot.lane.b32.xlu0 %v1485, 120
        %v1494 = vpop.permute.xlu0 %1493
        %1495 = vrot.lane.b32.xlu0 %v1486, 120
        %v1496 = vpop.permute.xlu0 %1495
        %1497 = vrot.lane.b32.xlu0 %v1487, 120
        %v1498 = vpop.permute.xlu0 %1497
        %1499 = vrot.lane.b32.xlu0 %v1488, 120
        %v1500 = vpop.permute.xlu0 %1499
        %v1501 = vrot.slane %v1494, 4
        %v1502 = vrot.slane %v1496, 4
        %v1503 = vrot.slane %v1498, 4
        %v1504 = vrot.slane %v1500, 4
        %v1505 = vsel %vm843, %v1494, %v1501
        %v1506 = vsel %vm843, %v1496, %v1502
        %v1507 = vsel %vm843, %v1498, %v1503
        %v1508 = vsel %vm843, %v1500, %v1504
        %1513 = vst [vmem:[#allocation3 + $0x20] sm:$0xf] %v1505
        %1514 = vst [vmem:[#allocation3 + $0x24] sm:$0xf] %v1506
        %1515 = vst [vmem:[#allocation3 + $0x28] sm:$0xf] %v1507
        %1516 = vst [vmem:[#allocation3 + $0x2c] sm:$0xf] %v1508
        %v1517 = vld [vmem:[#allocation2] sm:$0xff]
        %v1518 = vld [vmem:[#allocation2 + $0x8] sm:$0xff]
        %v1519 = vld [vmem:[#allocation2 + $0x10] sm:$0xff]
        %v1520 = vld [vmem:[#allocation2 + $0x18] sm:$0xff]
        %1525 = vrot.lane.b32.xlu0 %v1517, 118
        %v1526 = vpop.permute.xlu0 %1525
        %1527 = vrot.lane.b32.xlu0 %v1518, 118
        %v1528 = vpop.permute.xlu0 %1527
        %1529 = vrot.lane.b32.xlu0 %v1519, 118
        %v1530 = vpop.permute.xlu0 %1529
        %1531 = vrot.lane.b32.xlu0 %v1520, 118
        %v1532 = vpop.permute.xlu0 %1531
        %v1533 = vrot.slane %v1526, 4
        %v1534 = vrot.slane %v1528, 4
        %v1535 = vrot.slane %v1530, 4
        %v1536 = vrot.slane %v1532, 4
        %v1537 = vsel %vm909, %v1526, %v1533
        %v1538 = vsel %vm909, %v1528, %v1534
        %v1539 = vsel %vm909, %v1530, %v1535
        %v1540 = vsel %vm909, %v1532, %v1536
        %1545 = vst [vmem:[#allocation3 + $0x30] sm:$0xf] %v1537
        %1546 = vst [vmem:[#allocation3 + $0x34] sm:$0xf] %v1538
        %1547 = vst [vmem:[#allocation3 + $0x38] sm:$0xf] %v1539
        %1548 = vst [vmem:[#allocation3 + $0x3c] sm:$0xf] %v1540
        %v1549 = vld [vmem:[#allocation2] sm:$0xff]
        %v1550 = vld [vmem:[#allocation2 + $0x8] sm:$0xff]
        %v1551 = vld [vmem:[#allocation2 + $0x10] sm:$0xff]
        %v1552 = vld [vmem:[#allocation2 + $0x18] sm:$0xff]
        %1557 = vrot.lane.b32.xlu0 %v1549, 116
        %v1558 = vpop.permute.xlu0 %1557
        %1559 = vrot.lane.b32.xlu0 %v1550, 116
        %v1560 = vpop.permute.xlu0 %1559
        %1561 = vrot.lane.b32.xlu0 %v1551, 116
        %v1562 = vpop.permute.xlu0 %1561
        %1563 = vrot.lane.b32.xlu0 %v1552, 116
        %v1564 = vpop.permute.xlu0 %1563
        %v1565 = vrot.slane %v1558, 4
        %v1566 = vrot.slane %v1560, 4
        %v1567 = vrot.slane %v1562, 4
        %v1568 = vrot.slane %v1564, 4
        %vm1569 = vcmask 949248
        %v1570 = vsel %vm1569, %v1558, %v1565
        %v1571 = vsel %vm1569, %v1560, %v1566
        %v1572 = vsel %vm1569, %v1562, %v1567
        %v1573 = vsel %vm1569, %v1564, %v1568
        %1578 = vst [vmem:[#allocation3 + $0x40] sm:$0xf] %v1570
        %1579 = vst [vmem:[#allocation3 + $0x44] sm:$0xf] %v1571
        %1580 = vst [vmem:[#allocation3 + $0x48] sm:$0xf] %v1572
        %1581 = vst [vmem:[#allocation3 + $0x4c] sm:$0xf] %v1573
        %s1582 = scalar_lea.vmem %s5, 64
        %v1583 = vld [vmem:[%s1582] sm:$0xff]
        %v1584 = vld [vmem:[%s1582 + $0x8] sm:$0xff]
        %v1585 = vld [vmem:[%s1582 + $0x10] sm:$0xff]
        %v1586 = vld [vmem:[%s1582 + $0x18] sm:$0xff]
        %v1587 = vld [vmem:[%s1582 + $0x20] sm:$0xff]
        %v1588 = vld [vmem:[%s1582 + $0x28] sm:$0xff]
        %v1589 = vld [vmem:[%s1582 + $0x30] sm:$0xff]
        %v1590 = vld [vmem:[%s1582 + $0x38] sm:$0xff]
        %v1591 = vld [vmem:[#allocation3] sm:$0xf]
        %v1592 = vld [vmem:[#allocation3 + $0x4] sm:$0xf]
        %v1593 = vld [vmem:[#allocation3 + $0x8] sm:$0xf]
        %v1594 = vld [vmem:[#allocation3 + $0xc] sm:$0xf]
        %v1595 = vld [vmem:[#allocation3 + $0x10] sm:$0xf]
        %v1596 = vld [vmem:[#allocation3 + $0x14] sm:$0xf]
        %v1597 = vld [vmem:[#allocation3 + $0x18] sm:$0xf]
        %v1598 = vld [vmem:[#allocation3 + $0x1c] sm:$0xf]
        %v1599 = vld [vmem:[#allocation3 + $0x20] sm:$0xf]
        %v1600 = vld [vmem:[#allocation3 + $0x24] sm:$0xf]
        %v1601 = vld [vmem:[#allocation3 + $0x28] sm:$0xf]
        %v1602 = vld [vmem:[#allocation3 + $0x2c] sm:$0xf]
        %v1603 = vld [vmem:[#allocation3 + $0x30] sm:$0xf]
        %v1604 = vld [vmem:[#allocation3 + $0x34] sm:$0xf]
        %v1605 = vld [vmem:[#allocation3 + $0x38] sm:$0xf]
        %v1606 = vld [vmem:[#allocation3 + $0x3c] sm:$0xf]
        %v1607 = vld [vmem:[#allocation3 + $0x40] sm:$0xf]
        %v1608 = vld [vmem:[#allocation3 + $0x44] sm:$0xf]
        %v1609 = vld [vmem:[#allocation3 + $0x48] sm:$0xf]
        %v1610 = vld [vmem:[#allocation3 + $0x4c] sm:$0xf]
        %s1611 = scalar_lea.vmem %s6, 64
        %v1612 = vld [vmem:[%s1611] sm:$0xff]
        %v1613 = vld [vmem:[%s1611 + $0x8] sm:$0xff]
        %v1614 = vld [vmem:[%s1611 + $0x10] sm:$0xff]
        %v1615 = vld [vmem:[%s1611 + $0x18] sm:$0xff]
        %v1616 = vld [vmem:[%s1611 + $0x20] sm:$0xff]
        %v1617 = vld [vmem:[%s1611 + $0x28] sm:$0xff]
        %v1618 = vld [vmem:[%s1611 + $0x30] sm:$0xff]
        %v1619 = vld [vmem:[%s1611 + $0x38] sm:$0xff]
        %1621 = vset.pattern.permute.xlu0 0
        %1622 = vperm.xlu0 %1621, %v1612
        %v1623 = vpop.permute.xlu0 %1622
        %1626 = vset.pattern.permute.xlu0 0
        %1627 = vperm.xlu0 %1626, %v1613
        %v1628 = vpop.permute.xlu0 %1627
        %1631 = vset.pattern.permute.xlu0 0
        %1632 = vperm.xlu0 %1631, %v1614
        %v1633 = vpop.permute.xlu0 %1632
        %1636 = vset.pattern.permute.xlu0 0
        %1637 = vperm.xlu0 %1636, %v1615
        %v1638 = vpop.permute.xlu0 %1637
        %1641 = vset.pattern.permute.xlu0 0
        %1642 = vperm.xlu0 %1641, %v1616
        %v1643 = vpop.permute.xlu0 %1642
        %1646 = vset.pattern.permute.xlu0 0
        %1647 = vperm.xlu0 %1646, %v1617
        %v1648 = vpop.permute.xlu0 %1647
        %1651 = vset.pattern.permute.xlu0 0
        %1652 = vperm.xlu0 %1651, %v1618
        %v1653 = vpop.permute.xlu0 %1652
        %1656 = vset.pattern.permute.xlu0 0
        %1657 = vperm.xlu0 %1656, %v1619
        %v1658 = vpop.permute.xlu0 %1657
        %v1668 = vunpack.c.l.b16 %v1583
        %v1669 = vunpack.c.h.b16 %v1583
        %v1670 = vunpack.c.l.b16 %v1584
        %v1671 = vunpack.c.h.b16 %v1584
        %v1672 = vunpack.c.l.b16 %v1585
        %v1673 = vunpack.c.h.b16 %v1585
        %v1674 = vunpack.c.l.b16 %v1586
        %v1675 = vunpack.c.h.b16 %v1586
        %v1676 = vunpack.c.l.b16 %v1587
        %v1677 = vunpack.c.h.b16 %v1587
        %v1678 = vunpack.c.l.b16 %v1588
        %v1679 = vunpack.c.h.b16 %v1588
        %v1680 = vunpack.c.l.b16 %v1589
        %v1681 = vunpack.c.h.b16 %v1589
        %v1682 = vunpack.c.l.b16 %v1590
        %v1683 = vunpack.c.h.b16 %v1590
        %v1684 = vpack.c.b16 %v1670, %v1668
        %v1685 = vpack.c.b16 %v1671, %v1669
        %v1686 = vpack.c.b16 %v1674, %v1672
        %v1687 = vpack.c.b16 %v1675, %v1673
        %v1688 = vpack.c.b16 %v1678, %v1676
        %v1689 = vpack.c.b16 %v1679, %v1677
        %v1690 = vpack.c.b16 %v1682, %v1680
        %v1691 = vpack.c.b16 %v1683, %v1681
        %v1716 = vunpack.c.l.b16 %v1591
        %v1717 = vunpack.c.l.b16 %v1592
        %v1718 = vunpack.c.l.b16 %v1593
        %v1719 = vunpack.c.l.b16 %v1594
        %v1720 = vunpack.c.l.b16 %v1595
        %v1721 = vunpack.c.l.b16 %v1596
        %v1722 = vunpack.c.l.b16 %v1597
        %v1723 = vunpack.c.l.b16 %v1598
        %v1724 = vunpack.c.l.b16 %v1599
        %v1725 = vunpack.c.l.b16 %v1600
        %v1726 = vunpack.c.l.b16 %v1601
        %v1727 = vunpack.c.l.b16 %v1602
        %v1728 = vunpack.c.l.b16 %v1603
        %v1729 = vunpack.c.l.b16 %v1604
        %v1730 = vunpack.c.l.b16 %v1605
        %v1731 = vunpack.c.l.b16 %v1606
        %v1732 = vunpack.c.l.b16 %v1607
        %v1733 = vunpack.c.l.b16 %v1608
        %v1734 = vunpack.c.l.b16 %v1609
        %v1735 = vunpack.c.l.b16 %v1610
        %v1736 = vpack.c.b16 %v1717, %v1716
        %v1737 = vpack.c.b16 %v1719, %v1718
        %v1738 = vpack.c.b16 %v1721, %v1720
        %v1739 = vpack.c.b16 %v1723, %v1722
        %v1740 = vpack.c.b16 %v1725, %v1724
        %v1741 = vpack.c.b16 %v1727, %v1726
        %v1742 = vpack.c.b16 %v1729, %v1728
        %v1743 = vpack.c.b16 %v1731, %v1730
        %v1744 = vpack.c.b16 %v1733, %v1732
        %v1745 = vpack.c.b16 %v1735, %v1734
        %v1757 = vsel %vm1094, %v1685, 0
        %v1760 = vsel %vm1094, %v1687, 0
        %v1763 = vsel %vm1094, %v1689, 0
        %v1766 = vsel %vm1094, %v1691, 0
        %1768 = vmatpush.bf16.msra.mxu0 %v1743
        %1769 = vmatpush.bf16.msra.mxu0 %v1742
        %1770 = vmatpush.bf16.msra.mxu0 %v1741
        %1771 = vmatpush.bf16.msra.mxu0 %v1740
        %1772 = vmatpush.bf16.msra.mxu0 %v1739
        %1773 = vmatpush.bf16.msra.mxu0 %v1738
        %1774 = vmatpush.bf16.msra.mxu0 %v1737
        %1775 = vmatpush.bf16.msra.mxu0 %v1736
        %1776 = vmatmul.bf16.gmra.mxu0 %v1684
        %v1777 = vpop.f32.mrf.mxu0
        %v1778 = vadd.f32 %v1623, %v1777
        %v1779 = vpop.f32.mrf.mxu0
        %v1780 = vadd.f32 %v1628, %v1779
        %1781 = vmatmul.bf16.gmra.mxu0 %v1686
        %v1782 = vpop.f32.mrf.mxu0
        %v1783 = vadd.f32 %v1633, %v1782
        %v1784 = vpop.f32.mrf.mxu0
        %v1785 = vadd.f32 %v1638, %v1784
        %1786 = vmatmul.bf16.gmra.mxu0 %v1688
        %v1787 = vpop.f32.mrf.mxu0
        %v1788 = vadd.f32 %v1643, %v1787
        %v1789 = vpop.f32.mrf.mxu0
        %v1790 = vadd.f32 %v1648, %v1789
        %1791 = vmatmul.bf16.gmra.mxu0 %v1690
        %v1792 = vpop.f32.mrf.mxu0
        %v1793 = vadd.f32 %v1653, %v1792
        %v1794 = vpop.f32.mrf.mxu0
        %v1795 = vadd.f32 %v1658, %v1794
        %1796 = vdwg.mxu0
        %1797 = vmatpush.bf16.msra.mxu0 0
        %1798 = vmatpush.bf16.msra.mxu0 0
        %1799 = vmatpush.bf16.msra.mxu0 0
        %1800 = vmatpush.bf16.msra.mxu0 0
        %1801 = vmatpush.bf16.msra.mxu0 0
        %1802 = vmatpush.bf16.msra.mxu0 0
        %1803 = vmatpush.bf16.msra.mxu0 %v1745
        %1804 = vmatpush.bf16.msra.mxu0 %v1744
        %1805 = vmatmul.bf16.gmra.mxu0 %v1757
        %v1806 = vpop.f32.mrf.mxu0
        %v1807 = vadd.f32 %v1778, %v1806
        %v1808 = vpop.f32.mrf.mxu0
        %v1809 = vadd.f32 %v1780, %v1808
        %1810 = vmatmul.bf16.gmra.mxu0 %v1760
        %v1811 = vpop.f32.mrf.mxu0
        %v1812 = vadd.f32 %v1783, %v1811
        %v1813 = vpop.f32.mrf.mxu0
        %v1814 = vadd.f32 %v1785, %v1813
        %1815 = vmatmul.bf16.gmra.mxu0 %v1763
        %v1816 = vpop.f32.mrf.mxu0
        %v1817 = vadd.f32 %v1788, %v1816
        %v1818 = vpop.f32.mrf.mxu0
        %v1819 = vadd.f32 %v1790, %v1818
        %1820 = vmatmul.bf16.gmra.mxu0 %v1766
        %v1821 = vpop.f32.mrf.mxu0
        %v1822 = vadd.f32 %v1793, %v1821
        %v1823 = vpop.f32.mrf.mxu0
        %v1824 = vadd.f32 %v1795, %v1823
        %1825 = vdwg.mxu0
        %v1826 = vtanh.pop %v1807
        %v1827 = vtanh.pop %v1809
        %v1828 = vtanh.pop %v1812
        %v1829 = vtanh.pop %v1814
        %v1830 = vxor.u32 %v1817, 2147483648
        %v1831 = vxor.u32 %v1819, 2147483648
        %v1832 = vxor.u32 %v1822, 2147483648
        %v1833 = vxor.u32 %v1824, 2147483648
        %v1834 = vmul.f32 %v1830, 1.442695
        %v1835 = vpow.pop %v1834
        %v1836 = vmul.f32 %v1831, 1.442695
        %v1837 = vpow.pop %v1836
        %v1838 = vmul.f32 %v1832, 1.442695
        %v1839 = vpow.pop %v1838
        %v1840 = vmul.f32 %v1833, 1.442695
        %v1841 = vpow.pop %v1840
        %v1842 = vadd.f32 %v1835, 1.0
        %v1843 = vadd.f32 %v1837, 1.0
        %v1844 = vadd.f32 %v1839, 1.0
        %v1845 = vadd.f32 %v1841, 1.0
        %v1846 = vrcp.pop %v1842
        %v1847 = vmul.f32 %v1842, %v1846
        %v1848 = vsub.f32 1.0, %v1847
        %v1849 = vmul.f32 %v1846, %v1848
        %v1850 = vadd.f32 %v1846, %v1849
        %vm1851 = vweird.f32 %v1842
        %vm1852 = vweird.f32 %v1846
        %vm1853 = vmor %vm1851, %vm1852
        %v1854 = vsel %vm1853, %v1846, %v1850
        %v1855 = vand.u32 2147483647, %v1842
        %vm1856 = vcmp.eq.f32.partialorder %v1855, 8.507059e+37
        %v1857 = vand.u32 %v1842, 2147483648
        %v1858 = vor.u32 1.1754944e-38, %v1857
        %v1859 = vsel %vm1856, %v1858, %v1854
        %v1860 = vmul.f32 1.0, %v1859
        %v1861 = vrcp.pop %v1843
        %v1862 = vmul.f32 %v1843, %v1861
        %v1863 = vsub.f32 1.0, %v1862
        %v1864 = vmul.f32 %v1861, %v1863
        %v1865 = vadd.f32 %v1861, %v1864
        %vm1866 = vweird.f32 %v1843
        %vm1867 = vweird.f32 %v1861
        %vm1868 = vmor %vm1866, %vm1867
        %v1869 = vsel %vm1868, %v1861, %v1865
        %v1870 = vand.u32 2147483647, %v1843
        %vm1871 = vcmp.eq.f32.partialorder %v1870, 8.507059e+37
        %v1872 = vand.u32 %v1843, 2147483648
        %v1873 = vor.u32 1.1754944e-38, %v1872
        %v1874 = vsel %vm1871, %v1873, %v1869
        %v1875 = vmul.f32 1.0, %v1874
        %v1876 = vrcp.pop %v1844
        %v1877 = vmul.f32 %v1844, %v1876
        %v1878 = vsub.f32 1.0, %v1877
        %v1879 = vmul.f32 %v1876, %v1878
        %v1880 = vadd.f32 %v1876, %v1879
        %vm1881 = vweird.f32 %v1844
        %vm1882 = vweird.f32 %v1876
        %vm1883 = vmor %vm1881, %vm1882
        %v1884 = vsel %vm1883, %v1876, %v1880
        %v1885 = vand.u32 2147483647, %v1844
        %vm1886 = vcmp.eq.f32.partialorder %v1885, 8.507059e+37
        %v1887 = vand.u32 %v1844, 2147483648
        %v1888 = vor.u32 1.1754944e-38, %v1887
        %v1889 = vsel %vm1886, %v1888, %v1884
        %v1890 = vmul.f32 1.0, %v1889
        %v1891 = vrcp.pop %v1845
        %v1892 = vmul.f32 %v1845, %v1891
        %v1893 = vsub.f32 1.0, %v1892
        %v1894 = vmul.f32 %v1891, %v1893
        %v1895 = vadd.f32 %v1891, %v1894
        %vm1896 = vweird.f32 %v1845
        %vm1897 = vweird.f32 %v1891
        %vm1898 = vmor %vm1896, %vm1897
        %v1899 = vsel %vm1898, %v1891, %v1895
        %v1900 = vand.u32 2147483647, %v1845
        %vm1901 = vcmp.eq.f32.partialorder %v1900, 8.507059e+37
        %v1902 = vand.u32 %v1845, 2147483648
        %v1903 = vor.u32 1.1754944e-38, %v1902
        %v1904 = vsel %vm1901, %v1903, %v1899
        %v1905 = vmul.f32 1.0, %v1904
        %v1906 = vmul.f32 %v1826, %v1860
        %v1907 = vmul.f32 %v1827, %v1875
        %v1908 = vmul.f32 %v1828, %v1890
        %v1909 = vmul.f32 %v1829, %v1905
        %v1910 = vpack.c.bf16 %v1907, %v1906
        %v1911 = vpack.c.bf16 %v1909, %v1908
        %s1912 = scalar_lea.vmem %s7, 32
        %v1913 = vld [vmem:[%s1912] sm:$0xf]
        %v1914 = vld [vmem:[%s1912 + $0x4] sm:$0xf]
        %v1915 = vld [vmem:[%s1912 + $0x8] sm:$0xf]
        %v1916 = vld [vmem:[%s1912 + $0xc] sm:$0xf]
        %v1917 = vld [vmem:[%s1912 + $0x10] sm:$0xf]
        %v1918 = vld [vmem:[%s1912 + $0x14] sm:$0xf]
        %v1919 = vld [vmem:[%s1912 + $0x18] sm:$0xf]
        %v1920 = vld [vmem:[%s1912 + $0x1c] sm:$0xf]
        %s1921 = scalar_lea.vmem %s8, 64
        %v1922 = vld [vmem:[%s1921] sm:$0xff]
        %v1923 = vld [vmem:[%s1921 + $0x8] sm:$0xff]
        %v1924 = vld [vmem:[%s1921 + $0x10] sm:$0xff]
        %v1925 = vld [vmem:[%s1921 + $0x18] sm:$0xff]
        %v1926 = vld [vmem:[%s1921 + $0x20] sm:$0xff]
        %v1927 = vld [vmem:[%s1921 + $0x28] sm:$0xff]
        %v1928 = vld [vmem:[%s1921 + $0x30] sm:$0xff]
        %v1929 = vld [vmem:[%s1921 + $0x38] sm:$0xff]
        %1931 = vset.pattern.permute.xlu0 0
        %1932 = vperm.xlu0 %1931, %v1922
        %v1933 = vpop.permute.xlu0 %1932
        %1936 = vset.pattern.permute.xlu0 0
        %1937 = vperm.xlu0 %1936, %v1923
        %v1938 = vpop.permute.xlu0 %1937
        %1941 = vset.pattern.permute.xlu0 0
        %1942 = vperm.xlu0 %1941, %v1924
        %v1943 = vpop.permute.xlu0 %1942
        %1946 = vset.pattern.permute.xlu0 0
        %1947 = vperm.xlu0 %1946, %v1925
        %v1948 = vpop.permute.xlu0 %1947
        %1951 = vset.pattern.permute.xlu0 0
        %1952 = vperm.xlu0 %1951, %v1926
        %v1953 = vpop.permute.xlu0 %1952
        %1956 = vset.pattern.permute.xlu0 0
        %1957 = vperm.xlu0 %1956, %v1927
        %v1958 = vpop.permute.xlu0 %1957
        %1961 = vset.pattern.permute.xlu0 0
        %1962 = vperm.xlu0 %1961, %v1928
        %v1963 = vpop.permute.xlu0 %1962
        %1966 = vset.pattern.permute.xlu0 0
        %1967 = vperm.xlu0 %1966, %v1929
        %v1968 = vpop.permute.xlu0 %1967
        %v1978 = vunpack.c.l.b16 %v1913
        %v1979 = vunpack.c.l.b16 %v1914
        %v1980 = vunpack.c.l.b16 %v1915
        %v1981 = vunpack.c.l.b16 %v1916
        %v1982 = vunpack.c.l.b16 %v1917
        %v1983 = vunpack.c.l.b16 %v1918
        %v1984 = vunpack.c.l.b16 %v1919
        %v1985 = vunpack.c.l.b16 %v1920
        %v1986 = vpack.c.b16 %v1979, %v1978
        %v1987 = vpack.c.b16 %v1981, %v1980
        %v1988 = vpack.c.b16 %v1983, %v1982
        %v1989 = vpack.c.b16 %v1985, %v1984
        %v1991 = vsel %vm1094, %v1986, 0
        %v1994 = vsel %vm1094, %v1987, 0
        %v1997 = vsel %vm1094, %v1988, 0
        %v2000 = vsel %vm1094, %v1989, 0
        %2002 = vmatpush.bf16.msra.mxu0 0
        %2003 = vmatpush.bf16.msra.mxu0 0
        %2004 = vmatpush.bf16.msra.mxu0 0
        %2005 = vmatpush.bf16.msra.mxu0 0
        %2006 = vmatpush.bf16.msra.mxu0 0
        %2007 = vmatpush.bf16.msra.mxu0 0
        %2008 = vmatpush.bf16.msra.mxu0 %v1911
        %2009 = vmatpush.bf16.msra.mxu0 %v1910
        %2010 = vmatmul.bf16.gmra.mxu0 %v1991
        %v2011 = vpop.f32.mrf.mxu0
        %v2012 = vadd.f32 %v1933, %v2011
        %v2013 = vpop.f32.mrf.mxu0
        %v2014 = vadd.f32 %v1938, %v2013
        %2015 = vmatmul.bf16.gmra.mxu0 %v1994
        %v2016 = vpop.f32.mrf.mxu0
        %v2017 = vadd.f32 %v1943, %v2016
        %v2018 = vpop.f32.mrf.mxu0
        %v2019 = vadd.f32 %v1948, %v2018
        %2020 = vmatmul.bf16.gmra.mxu0 %v1997
        %v2021 = vpop.f32.mrf.mxu0
        %v2022 = vadd.f32 %v1953, %v2021
        %v2023 = vpop.f32.mrf.mxu0
        %v2024 = vadd.f32 %v1958, %v2023
        %2025 = vmatmul.bf16.gmra.mxu0 %v2000
        %v2026 = vpop.f32.mrf.mxu0
        %v2027 = vadd.f32 %v1963, %v2026
        %v2028 = vpop.f32.mrf.mxu0
        %v2029 = vadd.f32 %v1968, %v2028
        %2030 = vdwg.mxu0
        %v2031 = vadd.f32 %v1372, %v2012
        %v2032 = vadd.f32 %v1373, %v2014
        %v2033 = vadd.f32 %v1374, %v2017
        %v2034 = vadd.f32 %v1375, %v2019
        %v2035 = vmul.f32 %v2031, %v636
        %v2036 = vmul.f32 %v2032, %v636
        %v2037 = vmul.f32 %v2033, %v636
        %v2038 = vmul.f32 %v2034, %v636
        %v2039 = vld [vmem:[#allocation4] sm:$0xff]
        %v2040 = vld [vmem:[#allocation4 + $0x8] sm:$0xff]
        %v2041 = vld [vmem:[#allocation4 + $0x10] sm:$0xff]
        %v2042 = vld [vmem:[#allocation4 + $0x18] sm:$0xff]
        %v2043 = vadd.f32 %v2039, %v2022
        %v2044 = vadd.f32 %v2040, %v2024
        %v2045 = vadd.f32 %v2041, %v2027
        %v2046 = vadd.f32 %v2042, %v2029
        %2047 = vst [vmem:[#allocation4] sm:$0xff] %v2043
        %2048 = vst [vmem:[#allocation4 + $0x8] sm:$0xff] %v2044
        %2049 = vst [vmem:[#allocation4 + $0x10] sm:$0xff] %v2045
        %2050 = vst [vmem:[#allocation4 + $0x18] sm:$0xff] %v2046
        %v2051 = vpack.c.bf16 %v2035, %v2035
        %v2052 = vpack.c.bf16 %v2036, %v2036
        %v2053 = vpack.c.bf16 %v2037, %v2037
        %v2054 = vpack.c.bf16 %v2038, %v2038
        %2059 = vrot.lane.b32.xlu0 %v2051, 8
        %v2060 = vpop.permute.xlu0 %2059
        %2061 = vrot.lane.b32.xlu0 %v2052, 8
        %v2062 = vpop.permute.xlu0 %2061
        %2063 = vrot.lane.b32.xlu0 %v2053, 8
        %v2064 = vpop.permute.xlu0 %2063
        %2065 = vrot.lane.b32.xlu0 %v2054, 8
        %v2066 = vpop.permute.xlu0 %2065
        %v2067 = vrot.slane %v2060, 4
        %v2068 = vrot.slane %v2062, 4
        %v2069 = vrot.slane %v2064, 4
        %v2070 = vrot.slane %v2066, 4
        %v2071 = vsel %vm741, %v2067, %v2060
        %v2072 = vsel %vm741, %v2068, %v2062
        %v2073 = vsel %vm741, %v2069, %v2064
        %v2074 = vsel %vm741, %v2070, %v2066
        %2079 = vst.msk [vmem:[#allocation2] sm:$0xff] %vm752, %v2071
        %2080 = vst.msk [vmem:[#allocation2 + $0x8] sm:$0xff] %vm752, %v2072
        %2081 = vst.msk [vmem:[#allocation2 + $0x10] sm:$0xff] %vm752, %v2073
        %2082 = vst.msk [vmem:[#allocation2 + $0x18] sm:$0xff] %vm752, %v2074
        %v2083 = vld [vmem:[#allocation2] sm:$0xf]
        %v2084 = vld [vmem:[#allocation2 + $0x8] sm:$0xf]
        %v2085 = vld [vmem:[#allocation2 + $0x10] sm:$0xf]
        %v2086 = vld [vmem:[#allocation2 + $0x18] sm:$0xf]
        %2087 = vst [vmem:[#allocation3] sm:$0xf] %v2083
        %2088 = vst [vmem:[#allocation3 + $0x4] sm:$0xf] %v2084
        %2089 = vst [vmem:[#allocation3 + $0x8] sm:$0xf] %v2085
        %2090 = vst [vmem:[#allocation3 + $0xc] sm:$0xf] %v2086
        %v2091 = vld [vmem:[#allocation2] sm:$0xff]
        %v2092 = vld [vmem:[#allocation2 + $0x8] sm:$0xff]
        %v2093 = vld [vmem:[#allocation2 + $0x10] sm:$0xff]
        %v2094 = vld [vmem:[#allocation2 + $0x18] sm:$0xff]
        %2099 = vrot.lane.b32.xlu0 %v2091, 124
        %v2100 = vpop.permute.xlu0 %2099
        %2101 = vrot.lane.b32.xlu0 %v2092, 124
        %v2102 = vpop.permute.xlu0 %2101
        %2103 = vrot.lane.b32.xlu0 %v2093, 124
        %v2104 = vpop.permute.xlu0 %2103
        %2105 = vrot.lane.b32.xlu0 %v2094, 124
        %v2106 = vpop.permute.xlu0 %2105
        %v2107 = vrot.slane %v2100, 4
        %v2108 = vrot.slane %v2102, 4
        %v2109 = vrot.slane %v2104, 4
        %v2110 = vrot.slane %v2106, 4
        %v2111 = vsel %vm1440, %v2100, %v2107
        %v2112 = vsel %vm1440, %v2102, %v2108
        %v2113 = vsel %vm1440, %v2104, %v2109
        %v2114 = vsel %vm1440, %v2106, %v2110
        %2119 = vst [vmem:[#allocation3 + $0x10] sm:$0xf] %v2111
        %2120 = vst [vmem:[#allocation3 + $0x14] sm:$0xf] %v2112
        %2121 = vst [vmem:[#allocation3 + $0x18] sm:$0xf] %v2113
        %2122 = vst [vmem:[#allocation3 + $0x1c] sm:$0xf] %v2114
        %v2123 = vld [vmem:[#allocation2] sm:$0xff]
        %v2124 = vld [vmem:[#allocation2 + $0x8] sm:$0xff]
        %v2125 = vld [vmem:[#allocation2 + $0x10] sm:$0xff]
        %v2126 = vld [vmem:[#allocation2 + $0x18] sm:$0xff]
        %2131 = vrot.lane.b32.xlu0 %v2123, 120
        %v2132 = vpop.permute.xlu0 %2131
        %2133 = vrot.lane.b32.xlu0 %v2124, 120
        %v2134 = vpop.permute.xlu0 %2133
        %2135 = vrot.lane.b32.xlu0 %v2125, 120
        %v2136 = vpop.permute.xlu0 %2135
        %2137 = vrot.lane.b32.xlu0 %v2126, 120
        %v2138 = vpop.permute.xlu0 %2137
        %v2139 = vrot.slane %v2132, 4
        %v2140 = vrot.slane %v2134, 4
        %v2141 = vrot.slane %v2136, 4
        %v2142 = vrot.slane %v2138, 4
        %v2143 = vsel %vm843, %v2132, %v2139
        %v2144 = vsel %vm843, %v2134, %v2140
        %v2145 = vsel %vm843, %v2136, %v2141
        %v2146 = vsel %vm843, %v2138, %v2142
        %2151 = vst [vmem:[#allocation3 + $0x20] sm:$0xf] %v2143
        %2152 = vst [vmem:[#allocation3 + $0x24] sm:$0xf] %v2144
        %2153 = vst [vmem:[#allocation3 + $0x28] sm:$0xf] %v2145
        %2154 = vst [vmem:[#allocation3 + $0x2c] sm:$0xf] %v2146
        %v2155 = vld [vmem:[#allocation2] sm:$0xff]
        %v2156 = vld [vmem:[#allocation2 + $0x8] sm:$0xff]
        %v2157 = vld [vmem:[#allocation2 + $0x10] sm:$0xff]
        %v2158 = vld [vmem:[#allocation2 + $0x18] sm:$0xff]
        %2163 = vrot.lane.b32.xlu0 %v2155, 116
        %v2164 = vpop.permute.xlu0 %2163
        %2165 = vrot.lane.b32.xlu0 %v2156, 116
        %v2166 = vpop.permute.xlu0 %2165
        %2167 = vrot.lane.b32.xlu0 %v2157, 116
        %v2168 = vpop.permute.xlu0 %2167
        %2169 = vrot.lane.b32.xlu0 %v2158, 116
        %v2170 = vpop.permute.xlu0 %2169
        %v2171 = vrot.slane %v2164, 4
        %v2172 = vrot.slane %v2166, 4
        %v2173 = vrot.slane %v2168, 4
        %v2174 = vrot.slane %v2170, 4
        %v2175 = vsel %vm1569, %v2164, %v2171
        %v2176 = vsel %vm1569, %v2166, %v2172
        %v2177 = vsel %vm1569, %v2168, %v2173
        %v2178 = vsel %vm1569, %v2170, %v2174
        %2183 = vst [vmem:[#allocation3 + $0x30] sm:$0xf] %v2175
        %2184 = vst [vmem:[#allocation3 + $0x34] sm:$0xf] %v2176
        %2185 = vst [vmem:[#allocation3 + $0x38] sm:$0xf] %v2177
        %2186 = vst [vmem:[#allocation3 + $0x3c] sm:$0xf] %v2178
        %v2187 = vld [vmem:[#allocation2] sm:$0xff]
        %v2188 = vld [vmem:[#allocation2 + $0x8] sm:$0xff]
        %v2189 = vld [vmem:[#allocation2 + $0x10] sm:$0xff]
        %v2190 = vld [vmem:[#allocation2 + $0x18] sm:$0xff]
        %2195 = vrot.lane.b32.xlu0 %v2187, 112
        %v2196 = vpop.permute.xlu0 %2195
        %2197 = vrot.lane.b32.xlu0 %v2188, 112
        %v2198 = vpop.permute.xlu0 %2197
        %2199 = vrot.lane.b32.xlu0 %v2189, 112
        %v2200 = vpop.permute.xlu0 %2199
        %2201 = vrot.lane.b32.xlu0 %v2190, 112
        %v2202 = vpop.permute.xlu0 %2201
        %v2203 = vrot.slane %v2196, 4
        %v2204 = vrot.slane %v2198, 4
        %v2205 = vrot.slane %v2200, 4
        %v2206 = vrot.slane %v2202, 4
        %vm2207 = vcmask 916480
        %v2208 = vsel %vm2207, %v2196, %v2203
        %v2209 = vsel %vm2207, %v2198, %v2204
        %v2210 = vsel %vm2207, %v2200, %v2205
        %v2211 = vsel %vm2207, %v2202, %v2206
        %2216 = vst [vmem:[#allocation3 + $0x40] sm:$0xf] %v2208
        %2217 = vst [vmem:[#allocation3 + $0x44] sm:$0xf] %v2209
        %2218 = vst [vmem:[#allocation3 + $0x48] sm:$0xf] %v2210
        %2219 = vst [vmem:[#allocation3 + $0x4c] sm:$0xf] %v2211
        %s2220 = scalar_lea.vmem %s5, 128
        %v2221 = vld [vmem:[%s2220] sm:$0xff]
        %v2222 = vld [vmem:[%s2220 + $0x8] sm:$0xff]
        %v2223 = vld [vmem:[%s2220 + $0x10] sm:$0xff]
        %v2224 = vld [vmem:[%s2220 + $0x18] sm:$0xff]
        %v2225 = vld [vmem:[%s2220 + $0x20] sm:$0xff]
        %v2226 = vld [vmem:[%s2220 + $0x28] sm:$0xff]
        %v2227 = vld [vmem:[%s2220 + $0x30] sm:$0xff]
        %v2228 = vld [vmem:[%s2220 + $0x38] sm:$0xff]
        %v2229 = vld [vmem:[#allocation3] sm:$0xf]
        %v2230 = vld [vmem:[#allocation3 + $0x4] sm:$0xf]
        %v2231 = vld [vmem:[#allocation3 + $0x8] sm:$0xf]
        %v2232 = vld [vmem:[#allocation3 + $0xc] sm:$0xf]
        %v2233 = vld [vmem:[#allocation3 + $0x10] sm:$0xf]
        %v2234 = vld [vmem:[#allocation3 + $0x14] sm:$0xf]
        %v2235 = vld [vmem:[#allocation3 + $0x18] sm:$0xf]
        %v2236 = vld [vmem:[#allocation3 + $0x1c] sm:$0xf]
        %v2237 = vld [vmem:[#allocation3 + $0x20] sm:$0xf]
        %v2238 = vld [vmem:[#allocation3 + $0x24] sm:$0xf]
        %v2239 = vld [vmem:[#allocation3 + $0x28] sm:$0xf]
        %v2240 = vld [vmem:[#allocation3 + $0x2c] sm:$0xf]
        %v2241 = vld [vmem:[#allocation3 + $0x30] sm:$0xf]
        %v2242 = vld [vmem:[#allocation3 + $0x34] sm:$0xf]
        %v2243 = vld [vmem:[#allocation3 + $0x38] sm:$0xf]
        %v2244 = vld [vmem:[#allocation3 + $0x3c] sm:$0xf]
        %v2245 = vld [vmem:[#allocation3 + $0x40] sm:$0xf]
        %v2246 = vld [vmem:[#allocation3 + $0x44] sm:$0xf]
        %v2247 = vld [vmem:[#allocation3 + $0x48] sm:$0xf]
        %v2248 = vld [vmem:[#allocation3 + $0x4c] sm:$0xf]
        %s2249 = scalar_lea.vmem %s6, 128
        %v2250 = vld [vmem:[%s2249] sm:$0xff]
        %v2251 = vld [vmem:[%s2249 + $0x8] sm:$0xff]
        %v2252 = vld [vmem:[%s2249 + $0x10] sm:$0xff]
        %v2253 = vld [vmem:[%s2249 + $0x18] sm:$0xff]
        %v2254 = vld [vmem:[%s2249 + $0x20] sm:$0xff]
        %v2255 = vld [vmem:[%s2249 + $0x28] sm:$0xff]
        %v2256 = vld [vmem:[%s2249 + $0x30] sm:$0xff]
        %v2257 = vld [vmem:[%s2249 + $0x38] sm:$0xff]
        %2259 = vset.pattern.permute.xlu0 0
        %2260 = vperm.xlu0 %2259, %v2250
        %v2261 = vpop.permute.xlu0 %2260
        %2264 = vset.pattern.permute.xlu0 0
        %2265 = vperm.xlu0 %2264, %v2251
        %v2266 = vpop.permute.xlu0 %2265
        %2269 = vset.pattern.permute.xlu0 0
        %2270 = vperm.xlu0 %2269, %v2252
        %v2271 = vpop.permute.xlu0 %2270
        %2274 = vset.pattern.permute.xlu0 0
        %2275 = vperm.xlu0 %2274, %v2253
        %v2276 = vpop.permute.xlu0 %2275
        %2279 = vset.pattern.permute.xlu0 0
        %2280 = vperm.xlu0 %2279, %v2254
        %v2281 = vpop.permute.xlu0 %2280
        %2284 = vset.pattern.permute.xlu0 0
        %2285 = vperm.xlu0 %2284, %v2255
        %v2286 = vpop.permute.xlu0 %2285
        %2289 = vset.pattern.permute.xlu0 0
        %2290 = vperm.xlu0 %2289, %v2256
        %v2291 = vpop.permute.xlu0 %2290
        %2294 = vset.pattern.permute.xlu0 0
        %2295 = vperm.xlu0 %2294, %v2257
        %v2296 = vpop.permute.xlu0 %2295
        %v2306 = vunpack.c.l.b16 %v2221
        %v2307 = vunpack.c.h.b16 %v2221
        %v2308 = vunpack.c.l.b16 %v2222
        %v2309 = vunpack.c.h.b16 %v2222
        %v2310 = vunpack.c.l.b16 %v2223
        %v2311 = vunpack.c.h.b16 %v2223
        %v2312 = vunpack.c.l.b16 %v2224
        %v2313 = vunpack.c.h.b16 %v2224
        %v2314 = vunpack.c.l.b16 %v2225
        %v2315 = vunpack.c.h.b16 %v2225
        %v2316 = vunpack.c.l.b16 %v2226
        %v2317 = vunpack.c.h.b16 %v2226
        %v2318 = vunpack.c.l.b16 %v2227
        %v2319 = vunpack.c.h.b16 %v2227
        %v2320 = vunpack.c.l.b16 %v2228
        %v2321 = vunpack.c.h.b16 %v2228
        %v2322 = vpack.c.b16 %v2308, %v2306
        %v2323 = vpack.c.b16 %v2309, %v2307
        %v2324 = vpack.c.b16 %v2312, %v2310
        %v2325 = vpack.c.b16 %v2313, %v2311
        %v2326 = vpack.c.b16 %v2316, %v2314
        %v2327 = vpack.c.b16 %v2317, %v2315
        %v2328 = vpack.c.b16 %v2320, %v2318
        %v2329 = vpack.c.b16 %v2321, %v2319
        %v2354 = vunpack.c.l.b16 %v2229
        %v2355 = vunpack.c.l.b16 %v2230
        %v2356 = vunpack.c.l.b16 %v2231
        %v2357 = vunpack.c.l.b16 %v2232
        %v2358 = vunpack.c.l.b16 %v2233
        %v2359 = vunpack.c.l.b16 %v2234
        %v2360 = vunpack.c.l.b16 %v2235
        %v2361 = vunpack.c.l.b16 %v2236
        %v2362 = vunpack.c.l.b16 %v2237
        %v2363 = vunpack.c.l.b16 %v2238
        %v2364 = vunpack.c.l.b16 %v2239
        %v2365 = vunpack.c.l.b16 %v2240
        %v2366 = vunpack.c.l.b16 %v2241
        %v2367 = vunpack.c.l.b16 %v2242
        %v2368 = vunpack.c.l.b16 %v2243
        %v2369 = vunpack.c.l.b16 %v2244
        %v2370 = vunpack.c.l.b16 %v2245
        %v2371 = vunpack.c.l.b16 %v2246
        %v2372 = vunpack.c.l.b16 %v2247
        %v2373 = vunpack.c.l.b16 %v2248
        %v2374 = vpack.c.b16 %v2355, %v2354
        %v2375 = vpack.c.b16 %v2357, %v2356
        %v2376 = vpack.c.b16 %v2359, %v2358
        %v2377 = vpack.c.b16 %v2361, %v2360
        %v2378 = vpack.c.b16 %v2363, %v2362
        %v2379 = vpack.c.b16 %v2365, %v2364
        %v2380 = vpack.c.b16 %v2367, %v2366
        %v2381 = vpack.c.b16 %v2369, %v2368
        %v2382 = vpack.c.b16 %v2371, %v2370
        %v2383 = vpack.c.b16 %v2373, %v2372
        %v2395 = vsel %vm1094, %v2323, 0
        %v2398 = vsel %vm1094, %v2325, 0
        %v2401 = vsel %vm1094, %v2327, 0
        %v2404 = vsel %vm1094, %v2329, 0
        %2406 = vmatpush.bf16.msra.mxu0 %v2381
        %2407 = vmatpush.bf16.msra.mxu0 %v2380
        %2408 = vmatpush.bf16.msra.mxu0 %v2379
        %2409 = vmatpush.bf16.msra.mxu0 %v2378
        %2410 = vmatpush.bf16.msra.mxu0 %v2377
        %2411 = vmatpush.bf16.msra.mxu0 %v2376
        %2412 = vmatpush.bf16.msra.mxu0 %v2375
        %2413 = vmatpush.bf16.msra.mxu0 %v2374
        %2414 = vmatmul.bf16.gmra.mxu0 %v2322
        %v2415 = vpop.f32.mrf.mxu0
        %v2416 = vadd.f32 %v2261, %v2415
        %v2417 = vpop.f32.mrf.mxu0
        %v2418 = vadd.f32 %v2266, %v2417
        %2419 = vmatmul.bf16.gmra.mxu0 %v2324
        %v2420 = vpop.f32.mrf.mxu0
        %v2421 = vadd.f32 %v2271, %v2420
        %v2422 = vpop.f32.mrf.mxu0
        %v2423 = vadd.f32 %v2276, %v2422
        %2424 = vmatmul.bf16.gmra.mxu0 %v2326
        %v2425 = vpop.f32.mrf.mxu0
        %v2426 = vadd.f32 %v2281, %v2425
        %v2427 = vpop.f32.mrf.mxu0
        %v2428 = vadd.f32 %v2286, %v2427
        %2429 = vmatmul.bf16.gmra.mxu0 %v2328
        %v2430 = vpop.f32.mrf.mxu0
        %v2431 = vadd.f32 %v2291, %v2430
        %v2432 = vpop.f32.mrf.mxu0
        %v2433 = vadd.f32 %v2296, %v2432
        %2434 = vdwg.mxu0
        %2435 = vmatpush.bf16.msra.mxu0 0
        %2436 = vmatpush.bf16.msra.mxu0 0
        %2437 = vmatpush.bf16.msra.mxu0 0
        %2438 = vmatpush.bf16.msra.mxu0 0
        %2439 = vmatpush.bf16.msra.mxu0 0
        %2440 = vmatpush.bf16.msra.mxu0 0
        %2441 = vmatpush.bf16.msra.mxu0 %v2383
        %2442 = vmatpush.bf16.msra.mxu0 %v2382
        %2443 = vmatmul.bf16.gmra.mxu0 %v2395
        %v2444 = vpop.f32.mrf.mxu0
        %v2445 = vadd.f32 %v2416, %v2444
        %v2446 = vpop.f32.mrf.mxu0
        %v2447 = vadd.f32 %v2418, %v2446
        %2448 = vmatmul.bf16.gmra.mxu0 %v2398
        %v2449 = vpop.f32.mrf.mxu0
        %v2450 = vadd.f32 %v2421, %v2449
        %v2451 = vpop.f32.mrf.mxu0
        %v2452 = vadd.f32 %v2423, %v2451
        %2453 = vmatmul.bf16.gmra.mxu0 %v2401
        %v2454 = vpop.f32.mrf.mxu0
        %v2455 = vadd.f32 %v2426, %v2454
        %v2456 = vpop.f32.mrf.mxu0
        %v2457 = vadd.f32 %v2428, %v2456
        %2458 = vmatmul.bf16.gmra.mxu0 %v2404
        %v2459 = vpop.f32.mrf.mxu0
        %v2460 = vadd.f32 %v2431, %v2459
        %v2461 = vpop.f32.mrf.mxu0
        %v2462 = vadd.f32 %v2433, %v2461
        %2463 = vdwg.mxu0
        %v2464 = vtanh.pop %v2445
        %v2465 = vtanh.pop %v2447
        %v2466 = vtanh.pop %v2450
        %v2467 = vtanh.pop %v2452
        %v2468 = vxor.u32 %v2455, 2147483648
        %v2469 = vxor.u32 %v2457, 2147483648
        %v2470 = vxor.u32 %v2460, 2147483648
        %v2471 = vxor.u32 %v2462, 2147483648
        %v2472 = vmul.f32 %v2468, 1.442695
        %v2473 = vpow.pop %v2472
        %v2474 = vmul.f32 %v2469, 1.442695
        %v2475 = vpow.pop %v2474
        %v2476 = vmul.f32 %v2470, 1.442695
        %v2477 = vpow.pop %v2476
        %v2478 = vmul.f32 %v2471, 1.442695
        %v2479 = vpow.pop %v2478
        %v2480 = vadd.f32 %v2473, 1.0
        %v2481 = vadd.f32 %v2475, 1.0
        %v2482 = vadd.f32 %v2477, 1.0
        %v2483 = vadd.f32 %v2479, 1.0
        %v2484 = vrcp.pop %v2480
        %v2485 = vmul.f32 %v2480, %v2484
        %v2486 = vsub.f32 1.0, %v2485
        %v2487 = vmul.f32 %v2484, %v2486
        %v2488 = vadd.f32 %v2484, %v2487
        %vm2489 = vweird.f32 %v2480
        %vm2490 = vweird.f32 %v2484
        %vm2491 = vmor %vm2489, %vm2490
        %v2492 = vsel %vm2491, %v2484, %v2488
        %v2493 = vand.u32 2147483647, %v2480
        %vm2494 = vcmp.eq.f32.partialorder %v2493, 8.507059e+37
        %v2495 = vand.u32 %v2480, 2147483648
        %v2496 = vor.u32 1.1754944e-38, %v2495
        %v2497 = vsel %vm2494, %v2496, %v2492
        %v2498 = vmul.f32 1.0, %v2497
        %v2499 = vrcp.pop %v2481
        %v2500 = vmul.f32 %v2481, %v2499
        %v2501 = vsub.f32 1.0, %v2500
        %v2502 = vmul.f32 %v2499, %v2501
        %v2503 = vadd.f32 %v2499, %v2502
        %vm2504 = vweird.f32 %v2481
        %vm2505 = vweird.f32 %v2499
        %vm2506 = vmor %vm2504, %vm2505
        %v2507 = vsel %vm2506, %v2499, %v2503
        %v2508 = vand.u32 2147483647, %v2481
        %vm2509 = vcmp.eq.f32.partialorder %v2508, 8.507059e+37
        %v2510 = vand.u32 %v2481, 2147483648
        %v2511 = vor.u32 1.1754944e-38, %v2510
        %v2512 = vsel %vm2509, %v2511, %v2507
        %v2513 = vmul.f32 1.0, %v2512
        %v2514 = vrcp.pop %v2482
        %v2515 = vmul.f32 %v2482, %v2514
        %v2516 = vsub.f32 1.0, %v2515
        %v2517 = vmul.f32 %v2514, %v2516
        %v2518 = vadd.f32 %v2514, %v2517
        %vm2519 = vweird.f32 %v2482
        %vm2520 = vweird.f32 %v2514
        %vm2521 = vmor %vm2519, %vm2520
        %v2522 = vsel %vm2521, %v2514, %v2518
        %v2523 = vand.u32 2147483647, %v2482
        %vm2524 = vcmp.eq.f32.partialorder %v2523, 8.507059e+37
        %v2525 = vand.u32 %v2482, 2147483648
        %v2526 = vor.u32 1.1754944e-38, %v2525
        %v2527 = vsel %vm2524, %v2526, %v2522
        %v2528 = vmul.f32 1.0, %v2527
        %v2529 = vrcp.pop %v2483
        %v2530 = vmul.f32 %v2483, %v2529
        %v2531 = vsub.f32 1.0, %v2530
        %v2532 = vmul.f32 %v2529, %v2531
        %v2533 = vadd.f32 %v2529, %v2532
        %vm2534 = vweird.f32 %v2483
        %vm2535 = vweird.f32 %v2529
        %vm2536 = vmor %vm2534, %vm2535
        %v2537 = vsel %vm2536, %v2529, %v2533
        %v2538 = vand.u32 2147483647, %v2483
        %vm2539 = vcmp.eq.f32.partialorder %v2538, 8.507059e+37
        %v2540 = vand.u32 %v2483, 2147483648
        %v2541 = vor.u32 1.1754944e-38, %v2540
        %v2542 = vsel %vm2539, %v2541, %v2537
        %v2543 = vmul.f32 1.0, %v2542
        %v2544 = vmul.f32 %v2464, %v2498
        %v2545 = vmul.f32 %v2465, %v2513
        %v2546 = vmul.f32 %v2466, %v2528
        %v2547 = vmul.f32 %v2467, %v2543
        %v2548 = vpack.c.bf16 %v2545, %v2544
        %v2549 = vpack.c.bf16 %v2547, %v2546
        %v2550 = vld [vmem:[%s9] sm:$0xf]
        %v2551 = vld [vmem:[%s9 + $0x4] sm:$0xf]
        %v2552 = vld [vmem:[%s9 + $0x8] sm:$0xf]
        %v2553 = vld [vmem:[%s9 + $0xc] sm:$0xf]
        %v2554 = vld [vmem:[%s10] sm:$0xff]
        %v2555 = vld [vmem:[%s10 + $0x8] sm:$0xff]
        %v2556 = vld [vmem:[%s10 + $0x10] sm:$0xff]
        %v2557 = vld [vmem:[%s10 + $0x18] sm:$0xff]
        %2559 = vset.pattern.permute.xlu0 0
        %2560 = vperm.xlu0 %2559, %v2554
        %v2561 = vpop.permute.xlu0 %2560
        %2564 = vset.pattern.permute.xlu0 0
        %2565 = vperm.xlu0 %2564, %v2555
        %v2566 = vpop.permute.xlu0 %2565
        %2569 = vset.pattern.permute.xlu0 0
        %2570 = vperm.xlu0 %2569, %v2556
        %v2571 = vpop.permute.xlu0 %2570
        %2574 = vset.pattern.permute.xlu0 0
        %2575 = vperm.xlu0 %2574, %v2557
        %v2576 = vpop.permute.xlu0 %2575
        %v2582 = vunpack.c.l.b16 %v2550
        %v2583 = vunpack.c.l.b16 %v2551
        %v2584 = vunpack.c.l.b16 %v2552
        %v2585 = vunpack.c.l.b16 %v2553
        %v2586 = vpack.c.b16 %v2583, %v2582
        %v2587 = vpack.c.b16 %v2585, %v2584
        %v2589 = vsel %vm1094, %v2586, 0
        %v2592 = vsel %vm1094, %v2587, 0
        %2594 = vmatpush.bf16.msra.mxu0 0
        %2595 = vmatpush.bf16.msra.mxu0 0
        %2596 = vmatpush.bf16.msra.mxu0 0
        %2597 = vmatpush.bf16.msra.mxu0 0
        %2598 = vmatpush.bf16.msra.mxu0 0
        %2599 = vmatpush.bf16.msra.mxu0 0
        %2600 = vmatpush.bf16.msra.mxu0 %v2549
        %2601 = vmatpush.bf16.msra.mxu0 %v2548
        %2602 = vmatmul.bf16.gmra.mxu0 %v2589
        %v2603 = vpop.f32.mrf.mxu0
        %v2604 = vadd.f32 %v2561, %v2603
        %v2605 = vpop.f32.mrf.mxu0
        %v2606 = vadd.f32 %v2566, %v2605
        %2607 = vmatmul.bf16.gmra.mxu0 %v2592
        %v2608 = vpop.f32.mrf.mxu0
        %v2609 = vadd.f32 %v2571, %v2608
        %v2610 = vpop.f32.mrf.mxu0
        %v2611 = vadd.f32 %v2576, %v2610
        %2612 = vdwg.mxu0
        %v2613 = vld [vmem:[#allocation4] sm:$0xff]
        %v2614 = vld [vmem:[#allocation4 + $0x8] sm:$0xff]
        %v2615 = vld [vmem:[#allocation4 + $0x10] sm:$0xff]
        %v2616 = vld [vmem:[#allocation4 + $0x18] sm:$0xff]
        %v2617 = vadd.f32 %v2613, %v2604
        %v2618 = vadd.f32 %v2614, %v2606
        %v2619 = vadd.f32 %v2615, %v2609
        %v2620 = vadd.f32 %v2616, %v2611
        %2621 = vst [vmem:[#allocation4] sm:$0xff] %v2617
        %2622 = vst [vmem:[#allocation4 + $0x8] sm:$0xff] %v2618
        %2623 = vst [vmem:[#allocation4 + $0x10] sm:$0xff] %v2619
        %2624 = vst [vmem:[#allocation4 + $0x18] sm:$0xff] %v2620
        %v2625 = vld [vmem:[#allocation4] sm:$0xff]
        %v2626 = vld [vmem:[#allocation4 + $0x8] sm:$0xff]
        %v2627 = vld [vmem:[#allocation4 + $0x10] sm:$0xff]
        %v2628 = vld [vmem:[#allocation4 + $0x18] sm:$0xff]
        %v2629 = vmul.f32 %v2625, %v636
        %v2630 = vmul.f32 %v2626, %v636
        %v2631 = vmul.f32 %v2627, %v636
        %v2632 = vmul.f32 %v2628, %v636
        %v2633 = vpack.c.bf16 %v2630, %v2629
        %v2634 = vpack.c.bf16 %v2632, %v2631
        %v2635 = vld [vmem:[%s11] sm:$0x3]
        %v2636 = vld [vmem:[%s12] sm:$0xf]
        %2638 = vset.pattern.permute.xlu0 0
        %2639 = vperm.xlu0 %2638, %v2636
        %v2640 = vpop.permute.xlu0 %2639
        %v2643 = vsel %vm1094, %v2635, 0
        %2645 = vmatpush.bf16.msra.mxu0 0
        %2646 = vmatpush.bf16.msra.mxu0 0
        %2647 = vmatpush.bf16.msra.mxu0 0
        %2648 = vmatpush.bf16.msra.mxu0 0
        %2649 = vmatpush.bf16.msra.mxu0 0
        %2650 = vmatpush.bf16.msra.mxu0 0
        %2651 = vmatpush.bf16.msra.mxu0 %v2634
        %2652 = vmatpush.bf16.msra.mxu0 %v2633
        %2653 = vmatmul.bf16.gmra.mxu0 %v2643
        %v2654 = vpop.f32.mrf.mxu0
        %v2655 = vadd.f32 %v2640, %v2654
        %v2656 = vpop.f32.mrf.mxu0
        %2657 = vdwg.mxu0
        %v2658 = vmul.f32 %v2655, %v636
        %v2659 = vld [vmem:[%s13] sm:$0x3]
        %v2660 = vld [vmem:[%s14] sm:$0xf]
        %2662 = vset.pattern.permute.xlu0 0
        %2663 = vperm.xlu0 %2662, %v2660
        %v2664 = vpop.permute.xlu0 %2663
        %v2667 = vsel %vm1094, %v2659, 0
        %2669 = vmatpush.bf16.msra.mxu0 0
        %2670 = vmatpush.bf16.msra.mxu0 0
        %2671 = vmatpush.bf16.msra.mxu0 0
        %2672 = vmatpush.bf16.msra.mxu0 0
        %2673 = vmatpush.bf16.msra.mxu0 0
        %2674 = vmatpush.bf16.msra.mxu0 0
        %2675 = vmatpush.bf16.msra.mxu0 %v2634
        %2676 = vmatpush.bf16.msra.mxu0 %v2633
        %2677 = vmatmul.bf16.gmra.mxu0 %v2667
        %v2678 = vpop.f32.mrf.mxu0
        %v2679 = vadd.f32 %v2664, %v2678
        %v2680 = vpop.f32.mrf.mxu0
        %2681 = vdwg.mxu0
        %v2682 = vmul.f32 %v2679, %v636
        %v2683 = vld [vmem:[%s628] sm:$0xf]
        %v2684 = vmul.f32 %v2682, 1.442695
        %v2685 = vpow.pop %v2684
        %v2686 = vmul.f32 %v2683, %v2685
        %v2687 = vadd.f32 %v2658, %v2686
        %v2688 = vmul.f32 %v2687, %v636
        %2689 = vst [vmem:[%s600] sm:$0xf] %v2688
        %2690 = vst [vmem:[%s607] sm:$0xf] %v2658
        %2691 = vst [vmem:[%s614] sm:$0xf] %v2682
        %2692 = vst [vmem:[%s620] sm:$0x1] %v636
        %s2693 = sand.u32 %s373, 1
        %s2694 = scalar_lea.sflag [#allocation6], %s2693
        %s2695 = sand.u32 %s373, 1
        %s2696 = smul.addr %s2695, 4
        %s2697 = scalar_lea.vmem [#allocation8], %s2696
        %s2698 = sand.u32 %s40, 1
        %s2699 = scalar_lea.sflag [#allocation10], %s2698
        %s2700 = sand.u32 %s399, 1
        %s2701 = smul.addr %s2700, 4
        %s2702 = scalar_lea.vmem [#allocation9], %s2701
        %s2703 = sand.u32 %s40, 1
        %s2704 = scalar_lea.sflag [#allocation10], %s2703
        %s2705 = sand.u32 %s425, 1
        %s2706 = smul.addr %s2705, 4
        %s2707 = scalar_lea.vmem [#allocation11], %s2706
        %s2708 = sand.u32 %s451, 1
        %s2709 = scalar_lea.sflag [#allocation13], %s2708
        %s2710 = sand.u32 %s451, 1
        %s2711 = scalar_lea.vmem [#allocation12], %s2710
        // Predicated region
        $region85: #{tpu_custom_call.1} parent=79 // pred_check
          %p2712 = pneg %p383
        $region86: #{tpu_custom_call.1} parent=79 // pred_check_branch
          %2714 = sbr.rel (%p2712) target = $region88
        $region87: #{tpu_custom_call.1} parent=79 // pred_region
          %2716 = vsyncadd %s2694, 0
          %s2717 = smul.addr %s40, 4
          %s2718 = scalar_lea.hbm %s15, %s2717
          %s2720 = sshll.u32 %s2697, 4
          %s2721 = int_to_ptr.vmem [resolvable:$true] %s2720
          %s2722 = sshll.u32 %s2718, 4
          %s2723 = int_to_ptr.hbm [resolvable:$true] %s2722
          %2725 = dma.vmem_to_hbm [thread:$0]  %s2721, 64, %s2723, %s2694
        $region88: #{tpu_custom_call.1} parent=79 // pred_fallthru
          _
        // Predicated region
        $region89: #{tpu_custom_call.1} parent=79 // pred_check
          %p2726 = pneg %p409
        $region90: #{tpu_custom_call.1} parent=79 // pred_check_branch
          %2728 = sbr.rel (%p2726) target = $region92
        $region91: #{tpu_custom_call.1} parent=79 // pred_region
          %2730 = vsyncadd %s2699, 0
          %s2731 = smul.addr %s40, 4
          %s2732 = scalar_lea.hbm %s16, %s2731
          %s2734 = sshll.u32 %s2702, 4
          %s2735 = int_to_ptr.vmem [resolvable:$true] %s2734
          %s2736 = sshll.u32 %s2732, 4
          %s2737 = int_to_ptr.hbm [resolvable:$true] %s2736
          %2739 = dma.vmem_to_hbm [thread:$0]  %s2735, 64, %s2737, %s2699
        $region92: #{tpu_custom_call.1} parent=79 // pred_fallthru
          _
        // Predicated region
        $region93: #{tpu_custom_call.1} parent=79 // pred_check
          %p2740 = pneg %p435
        $region94: #{tpu_custom_call.1} parent=79 // pred_check_branch
          %2742 = sbr.rel (%p2740) target = $region96
        $region95: #{tpu_custom_call.1} parent=79 // pred_region
          %2744 = vsyncadd %s2704, 0
          %s2745 = smul.addr %s40, 4
          %s2746 = scalar_lea.hbm %s17, %s2745
          %s2748 = sshll.u32 %s2707, 4
          %s2749 = int_to_ptr.vmem [resolvable:$true] %s2748
          %s2750 = sshll.u32 %s2746, 4
          %s2751 = int_to_ptr.hbm [resolvable:$true] %s2750
          %2753 = dma.vmem_to_hbm [thread:$0]  %s2749, 64, %s2751, %s2704
        $region96: #{tpu_custom_call.1} parent=79 // pred_fallthru
          _
        // Predicated region
        $region97: #{tpu_custom_call.1} parent=79 // pred_check
          %p2754 = pneg %p461
        $region98: #{tpu_custom_call.1} parent=79 // pred_check_branch
          %2756 = sbr.rel (%p2754) target = $region100
        $region99: #{tpu_custom_call.1} parent=79 // pred_region
          %2758 = vsyncadd %s2709, 0
          %s2759 = scalar_lea.hbm %s18, %s40
          %s2761 = sshll.u32 %s2711, 4
          %s2762 = int_to_ptr.vmem [resolvable:$true] %s2761
          %s2763 = sshll.u32 %s2759, 4
          %s2764 = int_to_ptr.hbm [resolvable:$true] %s2763
          %2766 = dma.vmem_to_hbm [thread:$0]  %s2762, 16, %s2764, %s2709
        $region100: #{tpu_custom_call.1} parent=79 // pred_fallthru
          _
      $region80: #{tpu_custom_call.1} parent=5 // pred_fallthru
        _
      %p2767 = scmp.le.s32.totalorder 2, %s35
      // Predicated region
      $region101: #{tpu_custom_call.1} parent=5 // pred_check
        %p2768 = pneg %p2767
      $region102: #{tpu_custom_call.1} parent=5 // pred_check_branch
        %2770 = sbr.rel (%p2768) target = $region104
      $region103: #{tpu_custom_call.1} parent=5 // pred_region
        %s2771 = ssub.s32 %s35, 2
        // Predicated region
        $region105: #{tpu_custom_call.1} parent=103 // pred_check
          %p2772 = pneg %p389
        $region106: #{tpu_custom_call.1} parent=103 // pred_check_branch
          %2774 = sbr.rel (%p2772) target = $region108
        $region107: #{tpu_custom_call.1} parent=103 // pred_region
          %s2775 = sand.u32 %s374, 1
          %s2776 = scalar_lea.sflag [#allocation6], %s2775
          %s2777 = sand.u32 %s374, 1
          %s2778 = smul.addr %s2777, 4
          %s2779 = scalar_lea.vmem [#allocation8], %s2778
          %2781 = dma.done %s2776, 64
        $region108: #{tpu_custom_call.1} parent=103 // pred_fallthru
          _
        // Predicated region
        $region109: #{tpu_custom_call.1} parent=103 // pred_check
          %p2782 = pneg %p415
        $region110: #{tpu_custom_call.1} parent=103 // pred_check_branch
          %2784 = sbr.rel (%p2782) target = $region112
        $region111: #{tpu_custom_call.1} parent=103 // pred_region
          %s2785 = sand.u32 %s41, 1
          %s2786 = scalar_lea.sflag [#allocation10], %s2785
          %s2787 = sand.u32 %s400, 1
          %s2788 = smul.addr %s2787, 4
          %s2789 = scalar_lea.vmem [#allocation9], %s2788
          %2791 = dma.done %s2786, 64
        $region112: #{tpu_custom_call.1} parent=103 // pred_fallthru
          _
        // Predicated region
        $region113: #{tpu_custom_call.1} parent=103 // pred_check
          %p2792 = pneg %p441
        $region114: #{tpu_custom_call.1} parent=103 // pred_check_branch
          %2794 = sbr.rel (%p2792) target = $region116
        $region115: #{tpu_custom_call.1} parent=103 // pred_region
          %s2795 = sand.u32 %s41, 1
          %s2796 = scalar_lea.sflag [#allocation10], %s2795
          %s2797 = sand.u32 %s426, 1
          %s2798 = smul.addr %s2797, 4
          %s2799 = scalar_lea.vmem [#allocation11], %s2798
          %2801 = dma.done %s2796, 64
        $region116: #{tpu_custom_call.1} parent=103 // pred_fallthru
          _
        // Predicated region
        $region117: #{tpu_custom_call.1} parent=103 // pred_check
          %p2802 = pneg %p467
        $region118: #{tpu_custom_call.1} parent=103 // pred_check_branch
          %2804 = sbr.rel (%p2802) target = $region120
        $region119: #{tpu_custom_call.1} parent=103 // pred_region
          %s2805 = sand.u32 %s452, 1
          %s2806 = scalar_lea.sflag [#allocation13], %s2805
          %s2807 = sand.u32 %s452, 1
          %s2808 = scalar_lea.vmem [#allocation12], %s2807
          %2810 = dma.done %s2806, 16
        $region120: #{tpu_custom_call.1} parent=103 // pred_fallthru
          _
      $region104: #{tpu_custom_call.1} parent=5 // pred_fallthru
        _
    $region6: #{tpu_custom_call.1} parent=1 // loop_footer
      %s39 = sadd.s32 1, %s35
    $region7: #{tpu_custom_call.1} parent=1 // loop_footer_branch
      %34 = sbr.rel target = $region3
    $region8: #{tpu_custom_call.1} parent=1 // loop_exit
      _
    %2811 = vsyncpa [#allocation6], 1
    %s2812 = scalar_lea.sflag [#allocation6], 1
    %2813 = vsyncpa %s2812, 1
    %2814 = vsyncpa [#allocation10], 1
    %s2815 = scalar_lea.sflag [#allocation10], 1
    %2816 = vsyncpa %s2815, 1
    %2817 = vsyncpa [#allocation13], 1
    %s2818 = scalar_lea.sflag [#allocation13], 1
    %2819 = vsyncpa %s2818, 1
    %2820 = vsyncpa [#allocation7], 1
    %s2821 = scalar_lea.sflag [#allocation7], 1
    %2822 = vsyncpa %s2821, 1

</llo_original>
